<compile_context>
chip_gen: v5e
topology: v5e:2x2
jax: 0.10.0
libtpu: 0.0.40
codegen_flags: <defaults>
</compile_context>

<pallas_src>
import functools

import numpy as np

import jax
import jax.numpy as jnp
from jax import lax
from jax.experimental import pallas as pl
from jax.experimental.pallas import tpu as pltpu


# ------------------------------ Pallas kernel --------------------------------
def fused_up_kernel(x1_ref, x2_ref, uw_ref, m_ref,
                    w1_ref, s1_ref, b1_ref, w2_ref, s2_ref, b2_ref,
                    o_ref, xp1_ref, xp2_ref,
                    *, H, W, H1, h_lo, h_hi, h_frac, pad):
    # x1_ref : (1, C1*H1, W1)   low-res feature, NCHW-flat (channel-major)
    # x2_ref : (1, C2, H*W)     skip feature, NCHW-flat (channel-major)
    # uw_ref : (W1, W)          align_corners upsample matrix for the W axis
    # m_ref  : (9, 1, H*W)      3x3 tap border masks (0/1)
    # w*_ref : (9, Cout, Cin)   per-tap conv weights, (Cout, Cin) each
    # s*,b*  : (Cout, 1)        folded BN scale / bias
    # o_ref  : (1, Cout, H*W)   output, NCHW-flat, lane-dense
    # xp1/xp2: (C, 2*pad+H*W)   halo-padded channel-major activation scratch
    C2 = x2_ref.shape[1]
    C1 = x1_ref.shape[1] // H1
    Cin = C1 + C2
    HW = H * W
    taps = [(dy, dx) for dy in (-1, 0, 1) for dx in (-1, 0, 1)]

    # --- skip connection: NCHW-flat is already channel-major; plain copy -----
    xp1_ref[0:C2, pad:pad + HW] = x2_ref[0].astype(jnp.float32)

    # --- bilinear (align_corners) upsample of x1, separable ------------------
    # W axis on the MXU: (C1*H1, W1) @ (W1, W).
    t = jnp.dot(x1_ref[0].astype(jnp.float32), uw_ref[...],
                preferred_element_type=jnp.float32)             # (C1*H1, W)
    t3 = t.reshape(C1, H1, W)                                   # leading split only
    # H axis: static per-row lerp on the VPU, written straight into the
    # channel-major conv input (this is also the channel concat).
    for h in range(H):
        lo, hi, f = h_lo[h], h_hi[h], h_frac[h]
        row = t3[:, lo, :]
        if f != 0.0:
            row = (1.0 - f) * row + f * t3[:, hi, :]
        xp1_ref[C2:Cin, pad + h * W:pad + (h + 1) * W] = row

    # Border masks (shared by both conv layers).  They cover *every* position
    # whose flat tap index falls in the (never-initialized) halo region, so the
    # halo contents can never leak into the result (select is NaN-safe).
    bmask = [m_ref[k] > 0.5 for k in range(9)]

    def conv3x3_bn_relu(xp_ref, w_ref, s_ref, b_ref):
        # 9 accumulated (Cout, C) @ (C, H*W) matmuls; each tap is a static
        # lane-offset slice of the halo-padded lane-dense scratch.
        acc = None
        for k, (dy, dx) in enumerate(taps):
            a = pad + dy * W + dx
            xs = xp_ref[:, a:a + HW]
            if (dy, dx) != (0, 0):
                xs = jnp.where(bmask[k], xs, 0.0)
            d = jnp.dot(w_ref[k], xs, preferred_element_type=jnp.float32)
            acc = d if acc is None else acc + d
        # folded BN + ReLU (f32 epilogue on the VPU)
        return jnp.maximum(acc * s_ref[...] + b_ref[...], 0.0)  # (Cout, H*W)

    y1 = conv3x3_bn_relu(xp1_ref, w1_ref, s1_ref, b1_ref)
    xp2_ref[:, pad:pad + HW] = y1
    y2 = conv3x3_bn_relu(xp2_ref, w2_ref, s2_ref, b2_ref)

    # lane-dense store (last dim = H*W, multiple of 128), already NCHW-flat.
    o_ref[0] = y2.astype(o_ref.dtype)


# -------------------------------- wrapper -------------------------------------
def _axis_lerp_params(src, dst):
    """align_corners source indices / fractions for one axis (static)."""
    if dst == 1 or src == 1:
        pos = np.zeros((dst,), np.float32)
    else:
        pos = np.arange(dst, dtype=np.float32) * np.float32(src - 1) / np.float32(dst - 1)
    lo = np.clip(np.floor(pos).astype(np.int64), 0, src - 1)
    hi = np.clip(lo + 1, 0, src - 1)
    frac = (pos - lo.astype(np.float32)).astype(np.float32)
    return [int(v) for v in lo], [int(v) for v in hi], [float(v) for v in frac]


def _axis_matrix(src, dst):
    """(dst, src) matrix for align_corners bilinear upsample along one axis."""
    lo, hi, frac = _axis_lerp_params(src, dst)
    m = np.zeros((dst, src), np.float32)
    for i in range(dst):
        m[i, lo[i]] += 1.0 - frac[i]
        m[i, hi[i]] += frac[i]
    return m


def _border_masks(H, W):
    """(9, 1, H*W) validity masks for the 9 taps of a SAME-padded 3x3 conv."""
    hh = np.arange(H).reshape(H, 1)
    ww = np.arange(W).reshape(1, W)
    ms = []
    for dy in (-1, 0, 1):
        for dx in (-1, 0, 1):
            m = ((hh + dy >= 0) & (hh + dy < H) &
                 (ww + dx >= 0) & (ww + dx < W)).astype(np.float32)
            ms.append(m.reshape(1, H * W))
    return np.stack(ms, axis=0)


def fold_bn(gamma, beta, running_mean, running_var, eps=1e-5):
    scale = gamma / jnp.sqrt(running_var + eps)
    bias = beta - running_mean * scale
    return scale, bias


def up_forward(x1_nchw, x2_nchw, params, scale_factor=2):
    """Fused Up forward. NCHW in / NCHW out (PyTorch interface)."""
    N, C1, H1, W1 = x1_nchw.shape
    _, C2, H, W = x2_nchw.shape
    assert H == H1 * scale_factor and W == W1 * scale_factor
    Cin, HW = C1 + C2, H * W
    Cout = params["w1"].shape[-1]
    PAD = 128  # lane-aligned halo for the flat 3x3 taps (only needs >= W+1)

    # NCHW is already channel-major: these reshapes are free (metadata only).
    x1 = x1_nchw.reshape(N, C1 * H1, W1)
    x2 = x2_nchw.reshape(N, C2, HW)

    uwT = jnp.asarray(_axis_matrix(W1, W).T)                 # (W1, W)
    h_lo, h_hi, h_frac = _axis_lerp_params(H1, H)            # static H-axis lerp
    masks = jnp.asarray(_border_masks(H, W))                 # (9, 1, HW)

    # HWIO conv weights -> per-tap (9, Cout, Cin) for the (Cout,Cin)@(Cin,HW) form.
    w1t = jnp.transpose(params["w1"], (0, 1, 3, 2)).reshape(9, Cout, Cin)
    w2t = jnp.transpose(params["w2"], (0, 1, 3, 2)).reshape(9, Cout, Cout)
    s1 = params["s1"].reshape(Cout, 1)
    b1 = params["b1"].reshape(Cout, 1)
    s2 = params["s2"].reshape(Cout, 1)
    b2 = params["b2"].reshape(Cout, 1)

    kernel = functools.partial(
        fused_up_kernel, H=H, W=W, H1=H1,
        h_lo=h_lo, h_hi=h_hi, h_frac=h_frac, pad=PAD)

    out = pl.pallas_call(
        kernel,
        out_shape=jax.ShapeDtypeStruct((N, Cout, HW), x2_nchw.dtype),
        grid=(N,),
        in_specs=[
            pl.BlockSpec((1, C1 * H1, W1), lambda n: (n, 0, 0)),
            pl.BlockSpec((1, C2, HW), lambda n: (n, 0, 0)),
            pl.BlockSpec((W1, W), lambda n: (0, 0)),
            pl.BlockSpec((9, 1, HW), lambda n: (0, 0, 0)),
            pl.BlockSpec((9, Cout, Cin), lambda n: (0, 0, 0)),
            pl.BlockSpec((Cout, 1), lambda n: (0, 0)),
            pl.BlockSpec((Cout, 1), lambda n: (0, 0)),
            pl.BlockSpec((9, Cout, Cout), lambda n: (0, 0, 0)),
            pl.BlockSpec((Cout, 1), lambda n: (0, 0)),
            pl.BlockSpec((Cout, 1), lambda n: (0, 0)),
        ],
        out_specs=pl.BlockSpec((1, Cout, HW), lambda n: (n, 0, 0)),
        scratch_shapes=[
            pltpu.VMEM((Cin, HW + 2 * PAD), jnp.float32),
            pltpu.VMEM((Cout, HW + 2 * PAD), jnp.float32),
        ],
        compiler_params=pltpu.CompilerParams(
            dimension_semantics=("parallel",)),
    )(x1, x2, uwT, masks, w1t, s1, b1, w2t, s2, b2)

    return out.reshape(N, Cout, H, W)  # free row-major reshape back to NCHW


# ---------------------------- pure-JAX reference -------------------------------
def upsample_bilinear_align_corners(x_nchw, scale_factor=2):
    N, C, H, W = x_nchw.shape
    Ho, Wo = H * scale_factor, W * scale_factor

    def coords(src, dst):
        if dst == 1 or src == 1:
            pos = jnp.zeros((dst,), jnp.float32)
        else:
            pos = jnp.arange(dst, dtype=jnp.float32) * (src - 1) / (dst - 1)
        lo = jnp.clip(jnp.floor(pos).astype(jnp.int32), 0, src - 1)
        hi = jnp.clip(lo + 1, 0, src - 1)
        frac = pos - lo.astype(jnp.float32)
        return lo, hi, frac

    y0, y1, wy = coords(H, Ho)
    x0, x1, wx = coords(W, Wo)
    a = jnp.take(x_nchw, y0, axis=2)
    b = jnp.take(x_nchw, y1, axis=2)
    xh = a * (1.0 - wy)[None, None, :, None] + b * wy[None, None, :, None]
    a = jnp.take(xh, x0, axis=3)
    b = jnp.take(xh, x1, axis=3)
    return a * (1.0 - wx)[None, None, None, :] + b * wx[None, None, None, :]


def conv3x3_bn_relu_ref(x_nhwc, w_hwio, scale, bias):
    y = lax.conv_general_dilated(
        x_nhwc, w_hwio, window_strides=(1, 1), padding="SAME",
        dimension_numbers=("NHWC", "HWIO", "NHWC"))
    return jnp.maximum(y * scale + bias, 0.0)


def up_forward_ref(x1_nchw, x2_nchw, params):
    x1u = upsample_bilinear_align_corners(x1_nchw, 2)
    x = jnp.concatenate([x2_nchw, x1u], axis=1)
    x = jnp.transpose(x, (0, 2, 3, 1))
    x = conv3x3_bn_relu_ref(x, params["w1"], params["s1"], params["b1"])
    x = conv3x3_bn_relu_ref(x, params["w2"], params["s2"], params["b2"])
    return jnp.transpose(x, (0, 3, 1, 2))


# ------------------------------------ main -------------------------------------
if __name__ == "__main__":
    key = jax.random.PRNGKey(0)
    k1, k2, kw1, kw2, kg1, kg2 = jax.random.split(key, 6)

    # x1 (low-res feature) and x2 (high-res skip), NCHW.
    N, C1, H1, W1 = 2, 8, 8, 8
    C2, H2, W2 = 8, 16, 16
    in_channels = C1 + C2        # 16 (concat channels)
    out_channels = 16

    x1 = jax.random.normal(k1, (N, C1, H1, W1), jnp.float32)
    x2 = jax.random.normal(k2, (N, C2, H2, W2), jnp.float32)

    # Deterministic synthetic parameters (HWIO conv weights, BN stats).
    w1 = 0.05 * jax.random.normal(kw1, (3, 3, in_channels, out_channels), jnp.float32)
    w2 = 0.05 * jax.random.normal(kw2, (3, 3, out_channels, out_channels), jnp.float32)
    g1 = 1.0 + 0.1 * jax.random.normal(kg1, (out_channels,), jnp.float32)
    b1 = 0.05 * jnp.arange(out_channels, dtype=jnp.float32)
    m1 = 0.01 * jnp.arange(out_channels, dtype=jnp.float32)
    v1 = 1.0 + 0.02 * jnp.arange(out_channels, dtype=jnp.float32)
    g2 = 1.0 + 0.1 * jax.random.normal(kg2, (out_channels,), jnp.float32)
    b2 = -0.03 * jnp.arange(out_channels, dtype=jnp.float32)
    m2 = 0.02 * jnp.arange(out_channels, dtype=jnp.float32)
    v2 = 1.0 + 0.01 * jnp.arange(out_channels, dtype=jnp.float32)

    s1, bb1 = fold_bn(g1, b1, m1, v1)
    s2, bb2 = fold_bn(g2, b2, m2, v2)
    params = {"w1": w1, "s1": s1, "b1": bb1, "w2": w2, "s2": s2, "b2": bb2}

    out = jax.block_until_ready(jax.jit(up_forward)(x1, x2, params))
    ref = jax.block_until_ready(up_forward_ref(x1, x2, params))

    assert out.shape == (N, out_channels, H2, W2), out.shape
    err = float(jnp.max(jnp.abs(out - ref)))
    assert err < 2e-4, err

    print("KERNEL_OK")
</pallas_src>

<mosaic_0001>
module attributes {stable_mosaic.version = 11 : i64} {
  func.func @fused_up_kernel(%arg0: i32, %arg1: memref<1x64x8xf32, #tpu.memory_space<vmem>>, %arg2: memref<1x8x256xf32, #tpu.memory_space<vmem>>, %arg3: memref<8x16xf32, #tpu.memory_space<vmem>>, %arg4: memref<9x1x256xf32, #tpu.memory_space<vmem>>, %arg5: memref<9x16x16xf32, #tpu.memory_space<vmem>>, %arg6: memref<16x1xf32, #tpu.memory_space<vmem>>, %arg7: memref<16x1xf32, #tpu.memory_space<vmem>>, %arg8: memref<9x16x16xf32, #tpu.memory_space<vmem>>, %arg9: memref<16x1xf32, #tpu.memory_space<vmem>>, %arg10: memref<16x1xf32, #tpu.memory_space<vmem>>, %arg11: memref<1x16x256xf32, #tpu.memory_space<vmem>>, %arg12: memref<16x512xf32, #tpu.memory_space<vmem>>, %arg13: memref<16x512xf32, #tpu.memory_space<vmem>>) attributes {dimension_semantics = [#tpu.dimension_semantics<parallel>], iteration_bounds = array<i64: 2>, scalar_prefetch = 0 : i64, scratch_operands = 2 : i64, tpu.core_type = #tpu.core_type<tc>, window_params = [{transform_indices = @transform_0, window_bounds = array<i64: 1, 64, 8>}, {transform_indices = @transform_1, window_bounds = array<i64: 1, 8, 256>}, {pipeline_mode = #tpu.pipeline_mode<synchronous>, transform_indices = @transform_2, window_bounds = array<i64: 8, 16>}, {pipeline_mode = #tpu.pipeline_mode<synchronous>, transform_indices = @transform_3, window_bounds = array<i64: 9, 1, 256>}, {pipeline_mode = #tpu.pipeline_mode<synchronous>, transform_indices = @transform_4, window_bounds = array<i64: 9, 16, 16>}, {pipeline_mode = #tpu.pipeline_mode<synchronous>, transform_indices = @transform_5, window_bounds = array<i64: 16, 1>}, {pipeline_mode = #tpu.pipeline_mode<synchronous>, transform_indices = @transform_6, window_bounds = array<i64: 16, 1>}, {pipeline_mode = #tpu.pipeline_mode<synchronous>, transform_indices = @transform_7, window_bounds = array<i64: 9, 16, 16>}, {pipeline_mode = #tpu.pipeline_mode<synchronous>, transform_indices = @transform_8, window_bounds = array<i64: 16, 1>}, {pipeline_mode = #tpu.pipeline_mode<synchronous>, transform_indices = @transform_9, window_bounds = array<i64: 16, 1>}, {transform_indices = @transform_10, window_bounds = array<i64: 1, 16, 256>}]} {
    %c0 = arith.constant 0 : index
    %c0_0 = arith.constant 0 : index
    %c0_1 = arith.constant 0 : index
    %0 = vector.load %arg2[%c0, %c0_0, %c0_1] : memref<1x8x256xf32, #tpu.memory_space<vmem>>, vector<1x8x256xf32>
    %1 = vector.shape_cast %0 : vector<1x8x256xf32> to vector<8x256xf32>
    %c0_2 = arith.constant 0 : index
    %c128 = arith.constant 128 : index
    %2 = vector.load %arg12[%c0_2, %c128] : memref<16x512xf32, #tpu.memory_space<vmem>>, vector<8x256xf32>
    tpu.vector_store %arg12[%c0_2, %c128], %1 {strides = array<i32>} : memref<16x512xf32, #tpu.memory_space<vmem>>, vector<8x256xf32>,
    %c0_3 = arith.constant 0 : index
    %c0_4 = arith.constant 0 : index
    %c0_5 = arith.constant 0 : index
    %3 = vector.load %arg1[%c0_3, %c0_4, %c0_5] : memref<1x64x8xf32, #tpu.memory_space<vmem>>, vector<1x64x8xf32>
    %4 = vector.shape_cast %3 : vector<1x64x8xf32> to vector<64x8xf32>
    %c0_6 = arith.constant 0 : index
    %c0_7 = arith.constant 0 : index
    %5 = vector.load %arg3[%c0_6, %c0_7] : memref<8x16xf32, #tpu.memory_space<vmem>>, vector<8x16xf32>
    %cst = arith.constant dense<0.000000e+00> : vector<64x16xf32>
    %6 = tpu.matmul %4, %5, %cst {dimension_numbers = #tpu.dot_dimension_numbers<[1], [0], [0], [1], [0, 0, 1, 1], [], []>} : vector<64x8xf32>, vector<8x16xf32>, vector<64x16xf32> -> vector<64x16xf32>
    %7 = vector.shape_cast %6 : vector<64x16xf32> to vector<8x8x16xf32>
    %8 = vector.extract_strided_slice %7 {offsets = [0, 0, 0], sizes = [8, 1, 16], strides = [1, 1, 1]} : vector<8x8x16xf32> to vector<8x1x16xf32>
    %9 = vector.shape_cast %8 : vector<8x1x16xf32> to vector<8x16xf32>
    %c8 = arith.constant 8 : index
    %c128_8 = arith.constant 128 : index
    %10 = vector.load %arg12[%c8, %c128_8] : memref<16x512xf32, #tpu.memory_space<vmem>>, vector<8x16xf32>
    tpu.vector_store %arg12[%c8, %c128_8], %9 {strides = array<i32>} : memref<16x512xf32, #tpu.memory_space<vmem>>, vector<8x16xf32>,
    %11 = vector.extract_strided_slice %7 {offsets = [0, 0, 0], sizes = [8, 1, 16], strides = [1, 1, 1]} : vector<8x8x16xf32> to vector<8x1x16xf32>
    %12 = vector.shape_cast %11 : vector<8x1x16xf32> to vector<8x16xf32>
    %cst_9 = arith.constant 0.533333302 : f32
    %13 = vector.broadcast %cst_9 : f32 to vector<8x16xf32>
    %14 = arith.mulf %13, %12 : vector<8x16xf32>
    %15 = vector.extract_strided_slice %7 {offsets = [0, 1, 0], sizes = [8, 1, 16], strides = [1, 1, 1]} : vector<8x8x16xf32> to vector<8x1x16xf32>
    %16 = vector.shape_cast %15 : vector<8x1x16xf32> to vector<8x16xf32>
    %cst_10 = arith.constant 0.466666669 : f32
    %17 = vector.broadcast %cst_10 : f32 to vector<8x16xf32>
    %18 = arith.mulf %17, %16 : vector<8x16xf32>
    %19 = arith.addf %14, %18 : vector<8x16xf32>
    %c8_11 = arith.constant 8 : index
    %c144 = arith.constant 144 : index
    %20 = vector.load %arg12[%c8_11, %c144] : memref<16x512xf32, #tpu.memory_space<vmem>>, vector<8x16xf32>
    tpu.vector_store %arg12[%c8_11, %c144], %19 {strides = array<i32>} : memref<16x512xf32, #tpu.memory_space<vmem>>, vector<8x16xf32>,
    %21 = vector.extract_strided_slice %7 {offsets = [0, 0, 0], sizes = [8, 1, 16], strides = [1, 1, 1]} : vector<8x8x16xf32> to vector<8x1x16xf32>
    %22 = vector.shape_cast %21 : vector<8x1x16xf32> to vector<8x16xf32>
    %cst_12 = arith.constant 0.0666666627 : f32
    %23 = vector.broadcast %cst_12 : f32 to vector<8x16xf32>
    %24 = arith.mulf %23, %22 : vector<8x16xf32>
    %25 = vector.extract_strided_slice %7 {offsets = [0, 1, 0], sizes = [8, 1, 16], strides = [1, 1, 1]} : vector<8x8x16xf32> to vector<8x1x16xf32>
    %26 = vector.shape_cast %25 : vector<8x1x16xf32> to vector<8x16xf32>
    %cst_13 = arith.constant 0.933333337 : f32
    %27 = vector.broadcast %cst_13 : f32 to vector<8x16xf32>
    %28 = arith.mulf %27, %26 : vector<8x16xf32>
    %29 = arith.addf %24, %28 : vector<8x16xf32>
    %c8_14 = arith.constant 8 : index
    %c160 = arith.constant 160 : index
    %30 = vector.load %arg12[%c8_14, %c160] : memref<16x512xf32, #tpu.memory_space<vmem>>, vector<8x16xf32>
    tpu.vector_store %arg12[%c8_14, %c160], %29 {strides = array<i32>} : memref<16x512xf32, #tpu.memory_space<vmem>>, vector<8x16xf32>,
    %31 = vector.extract_strided_slice %7 {offsets = [0, 1, 0], sizes = [8, 1, 16], strides = [1, 1, 1]} : vector<8x8x16xf32> to vector<8x1x16xf32>
    %32 = vector.shape_cast %31 : vector<8x1x16xf32> to vector<8x16xf32>
    %cst_15 = arith.constant 6.000000e-01 : f32
    %33 = vector.broadcast %cst_15 : f32 to vector<8x16xf32>
    %34 = arith.mulf %33, %32 : vector<8x16xf32>
    %35 = vector.extract_strided_slice %7 {offsets = [0, 2, 0], sizes = [8, 1, 16], strides = [1, 1, 1]} : vector<8x8x16xf32> to vector<8x1x16xf32>
    %36 = vector.shape_cast %35 : vector<8x1x16xf32> to vector<8x16xf32>
    %cst_16 = arith.constant 0.399999976 : f32
    %37 = vector.broadcast %cst_16 : f32 to vector<8x16xf32>
    %38 = arith.mulf %37, %36 : vector<8x16xf32>
    %39 = arith.addf %34, %38 : vector<8x16xf32>
    %c8_17 = arith.constant 8 : index
    %c176 = arith.constant 176 : index
    %40 = vector.load %arg12[%c8_17, %c176] : memref<16x512xf32, #tpu.memory_space<vmem>>, vector<8x16xf32>
    tpu.vector_store %arg12[%c8_17, %c176], %39 {strides = array<i32>} : memref<16x512xf32, #tpu.memory_space<vmem>>, vector<8x16xf32>,
    %41 = vector.extract_strided_slice %7 {offsets = [0, 1, 0], sizes = [8, 1, 16], strides = [1, 1, 1]} : vector<8x8x16xf32> to vector<8x1x16xf32>
    %42 = vector.shape_cast %41 : vector<8x1x16xf32> to vector<8x16xf32>
    %cst_18 = arith.constant 0.133333325 : f32
    %43 = vector.broadcast %cst_18 : f32 to vector<8x16xf32>
    %44 = arith.mulf %43, %42 : vector<8x16xf32>
    %45 = vector.extract_strided_slice %7 {offsets = [0, 2, 0], sizes = [8, 1, 16], strides = [1, 1, 1]} : vector<8x8x16xf32> to vector<8x1x16xf32>
    %46 = vector.shape_cast %45 : vector<8x1x16xf32> to vector<8x16xf32>
    %cst_19 = arith.constant 0.866666674 : f32
    %47 = vector.broadcast %cst_19 : f32 to vector<8x16xf32>
    %48 = arith.mulf %47, %46 : vector<8x16xf32>
    %49 = arith.addf %44, %48 : vector<8x16xf32>
    %c8_20 = arith.constant 8 : index
    %c192 = arith.constant 192 : index
    %50 = vector.load %arg12[%c8_20, %c192] : memref<16x512xf32, #tpu.memory_space<vmem>>, vector<8x16xf32>
    tpu.vector_store %arg12[%c8_20, %c192], %49 {strides = array<i32>} : memref<16x512xf32, #tpu.memory_space<vmem>>, vector<8x16xf32>,
    %51 = vector.extract_strided_slice %7 {offsets = [0, 2, 0], sizes = [8, 1, 16], strides = [1, 1, 1]} : vector<8x8x16xf32> to vector<8x1x16xf32>
    %52 = vector.shape_cast %51 : vector<8x1x16xf32> to vector<8x16xf32>
    %cst_21 = arith.constant 0.666666746 : f32
    %53 = vector.broadcast %cst_21 : f32 to vector<8x16xf32>
    %54 = arith.mulf %53, %52 : vector<8x16xf32>
    %55 = vector.extract_strided_slice %7 {offsets = [0, 3, 0], sizes = [8, 1, 16], strides = [1, 1, 1]} : vector<8x8x16xf32> to vector<8x1x16xf32>
    %56 = vector.shape_cast %55 : vector<8x1x16xf32> to vector<8x16xf32>
    %cst_22 = arith.constant 0.333333254 : f32
    %57 = vector.broadcast %cst_22 : f32 to vector<8x16xf32>
    %58 = arith.mulf %57, %56 : vector<8x16xf32>
    %59 = arith.addf %54, %58 : vector<8x16xf32>
    %c8_23 = arith.constant 8 : index
    %c208 = arith.constant 208 : index
    %60 = vector.load %arg12[%c8_23, %c208] : memref<16x512xf32, #tpu.memory_space<vmem>>, vector<8x16xf32>
    tpu.vector_store %arg12[%c8_23, %c208], %59 {strides = array<i32>} : memref<16x512xf32, #tpu.memory_space<vmem>>, vector<8x16xf32>,
    %61 = vector.extract_strided_slice %7 {offsets = [0, 2, 0], sizes = [8, 1, 16], strides = [1, 1, 1]} : vector<8x8x16xf32> to vector<8x1x16xf32>
    %62 = vector.shape_cast %61 : vector<8x1x16xf32> to vector<8x16xf32>
    %cst_24 = arith.constant 0.200000048 : f32
    %63 = vector.broadcast %cst_24 : f32 to vector<8x16xf32>
    %64 = arith.mulf %63, %62 : vector<8x16xf32>
    %65 = vector.extract_strided_slice %7 {offsets = [0, 3, 0], sizes = [8, 1, 16], strides = [1, 1, 1]} : vector<8x8x16xf32> to vector<8x1x16xf32>
    %66 = vector.shape_cast %65 : vector<8x1x16xf32> to vector<8x16xf32>
    %cst_25 = arith.constant 0.799999952 : f32
    %67 = vector.broadcast %cst_25 : f32 to vector<8x16xf32>
    %68 = arith.mulf %67, %66 : vector<8x16xf32>
    %69 = arith.addf %64, %68 : vector<8x16xf32>
    %c8_26 = arith.constant 8 : index
    %c224 = arith.constant 224 : index
    %70 = vector.load %arg12[%c8_26, %c224] : memref<16x512xf32, #tpu.memory_space<vmem>>, vector<8x16xf32>
    tpu.vector_store %arg12[%c8_26, %c224], %69 {strides = array<i32>} : memref<16x512xf32, #tpu.memory_space<vmem>>, vector<8x16xf32>,
    %71 = vector.extract_strided_slice %7 {offsets = [0, 3, 0], sizes = [8, 1, 16], strides = [1, 1, 1]} : vector<8x8x16xf32> to vector<8x1x16xf32>
    %72 = vector.shape_cast %71 : vector<8x1x16xf32> to vector<8x16xf32>
    %cst_27 = arith.constant 0.733333349 : f32
    %73 = vector.broadcast %cst_27 : f32 to vector<8x16xf32>
    %74 = arith.mulf %73, %72 : vector<8x16xf32>
    %75 = vector.extract_strided_slice %7 {offsets = [0, 4, 0], sizes = [8, 1, 16], strides = [1, 1, 1]} : vector<8x8x16xf32> to vector<8x1x16xf32>
    %76 = vector.shape_cast %75 : vector<8x1x16xf32> to vector<8x16xf32>
    %cst_28 = arith.constant 0.266666651 : f32
    %77 = vector.broadcast %cst_28 : f32 to vector<8x16xf32>
    %78 = arith.mulf %77, %76 : vector<8x16xf32>
    %79 = arith.addf %74, %78 : vector<8x16xf32>
    %c8_29 = arith.constant 8 : index
    %c240 = arith.constant 240 : index
    %80 = vector.load %arg12[%c8_29, %c240] : memref<16x512xf32, #tpu.memory_space<vmem>>, vector<8x16xf32>
    tpu.vector_store %arg12[%c8_29, %c240], %79 {strides = array<i32>} : memref<16x512xf32, #tpu.memory_space<vmem>>, vector<8x16xf32>,
    %81 = vector.extract_strided_slice %7 {offsets = [0, 3, 0], sizes = [8, 1, 16], strides = [1, 1, 1]} : vector<8x8x16xf32> to vector<8x1x16xf32>
    %82 = vector.shape_cast %81 : vector<8x1x16xf32> to vector<8x16xf32>
    %cst_30 = arith.constant 0.266666651 : f32
    %83 = vector.broadcast %cst_30 : f32 to vector<8x16xf32>
    %84 = arith.mulf %83, %82 : vector<8x16xf32>
    %85 = vector.extract_strided_slice %7 {offsets = [0, 4, 0], sizes = [8, 1, 16], strides = [1, 1, 1]} : vector<8x8x16xf32> to vector<8x1x16xf32>
    %86 = vector.shape_cast %85 : vector<8x1x16xf32> to vector<8x16xf32>
    %cst_31 = arith.constant 0.733333349 : f32
    %87 = vector.broadcast %cst_31 : f32 to vector<8x16xf32>
    %88 = arith.mulf %87, %86 : vector<8x16xf32>
    %89 = arith.addf %84, %88 : vector<8x16xf32>
    %c8_32 = arith.constant 8 : index
    %c256 = arith.constant 256 : index
    %90 = vector.load %arg12[%c8_32, %c256] : memref<16x512xf32, #tpu.memory_space<vmem>>, vector<8x16xf32>
    tpu.vector_store %arg12[%c8_32, %c256], %89 {strides = array<i32>} : memref<16x512xf32, #tpu.memory_space<vmem>>, vector<8x16xf32>,
    %91 = vector.extract_strided_slice %7 {offsets = [0, 4, 0], sizes = [8, 1, 16], strides = [1, 1, 1]} : vector<8x8x16xf32> to vector<8x1x16xf32>
    %92 = vector.shape_cast %91 : vector<8x1x16xf32> to vector<8x16xf32>
    %cst_33 = arith.constant 0.80000019 : f32
    %93 = vector.broadcast %cst_33 : f32 to vector<8x16xf32>
    %94 = arith.mulf %93, %92 : vector<8x16xf32>
    %95 = vector.extract_strided_slice %7 {offsets = [0, 5, 0], sizes = [8, 1, 16], strides = [1, 1, 1]} : vector<8x8x16xf32> to vector<8x1x16xf32>
    %96 = vector.shape_cast %95 : vector<8x1x16xf32> to vector<8x16xf32>
    %cst_34 = arith.constant 0.199999809 : f32
    %97 = vector.broadcast %cst_34 : f32 to vector<8x16xf32>
    %98 = arith.mulf %97, %96 : vector<8x16xf32>
    %99 = arith.addf %94, %98 : vector<8x16xf32>
    %c8_35 = arith.constant 8 : index
    %c272 = arith.constant 272 : index
    %100 = vector.load %arg12[%c8_35, %c272] : memref<16x512xf32, #tpu.memory_space<vmem>>, vector<8x16xf32>
    tpu.vector_store %arg12[%c8_35, %c272], %99 {strides = array<i32>} : memref<16x512xf32, #tpu.memory_space<vmem>>, vector<8x16xf32>,
    %101 = vector.extract_strided_slice %7 {offsets = [0, 4, 0], sizes = [8, 1, 16], strides = [1, 1, 1]} : vector<8x8x16xf32> to vector<8x1x16xf32>
    %102 = vector.shape_cast %101 : vector<8x1x16xf32> to vector<8x16xf32>
    %cst_36 = arith.constant 0.333333492 : f32
    %103 = vector.broadcast %cst_36 : f32 to vector<8x16xf32>
    %104 = arith.mulf %103, %102 : vector<8x16xf32>
    %105 = vector.extract_strided_slice %7 {offsets = [0, 5, 0], sizes = [8, 1, 16], strides = [1, 1, 1]} : vector<8x8x16xf32> to vector<8x1x16xf32>
    %106 = vector.shape_cast %105 : vector<8x1x16xf32> to vector<8x16xf32>
    %cst_37 = arith.constant 0.666666507 : f32
    %107 = vector.broadcast %cst_37 : f32 to vector<8x16xf32>
    %108 = arith.mulf %107, %106 : vector<8x16xf32>
    %109 = arith.addf %104, %108 : vector<8x16xf32>
    %c8_38 = arith.constant 8 : index
    %c288 = arith.constant 288 : index
    %110 = vector.load %arg12[%c8_38, %c288] : memref<16x512xf32, #tpu.memory_space<vmem>>, vector<8x16xf32>
    tpu.vector_store %arg12[%c8_38, %c288], %109 {strides = array<i32>} : memref<16x512xf32, #tpu.memory_space<vmem>>, vector<8x16xf32>,
    %111 = vector.extract_strided_slice %7 {offsets = [0, 5, 0], sizes = [8, 1, 16], strides = [1, 1, 1]} : vector<8x8x16xf32> to vector<8x1x16xf32>
    %112 = vector.shape_cast %111 : vector<8x1x16xf32> to vector<8x16xf32>
    %cst_39 = arith.constant 0.866666794 : f32
    %113 = vector.broadcast %cst_39 : f32 to vector<8x16xf32>
    %114 = arith.mulf %113, %112 : vector<8x16xf32>
    %115 = vector.extract_strided_slice %7 {offsets = [0, 6, 0], sizes = [8, 1, 16], strides = [1, 1, 1]} : vector<8x8x16xf32> to vector<8x1x16xf32>
    %116 = vector.shape_cast %115 : vector<8x1x16xf32> to vector<8x16xf32>
    %cst_40 = arith.constant 0.133333206 : f32
    %117 = vector.broadcast %cst_40 : f32 to vector<8x16xf32>
    %118 = arith.mulf %117, %116 : vector<8x16xf32>
    %119 = arith.addf %114, %118 : vector<8x16xf32>
    %c8_41 = arith.constant 8 : index
    %c304 = arith.constant 304 : index
    %120 = vector.load %arg12[%c8_41, %c304] : memref<16x512xf32, #tpu.memory_space<vmem>>, vector<8x16xf32>
    tpu.vector_store %arg12[%c8_41, %c304], %119 {strides = array<i32>} : memref<16x512xf32, #tpu.memory_space<vmem>>, vector<8x16xf32>,
    %121 = vector.extract_strided_slice %7 {offsets = [0, 5, 0], sizes = [8, 1, 16], strides = [1, 1, 1]} : vector<8x8x16xf32> to vector<8x1x16xf32>
    %122 = vector.shape_cast %121 : vector<8x1x16xf32> to vector<8x16xf32>
    %cst_42 = arith.constant 0.400000095 : f32
    %123 = vector.broadcast %cst_42 : f32 to vector<8x16xf32>
    %124 = arith.mulf %123, %122 : vector<8x16xf32>
    %125 = vector.extract_strided_slice %7 {offsets = [0, 6, 0], sizes = [8, 1, 16], strides = [1, 1, 1]} : vector<8x8x16xf32> to vector<8x1x16xf32>
    %126 = vector.shape_cast %125 : vector<8x1x16xf32> to vector<8x16xf32>
    %cst_43 = arith.constant 0.599999904 : f32
    %127 = vector.broadcast %cst_43 : f32 to vector<8x16xf32>
    %128 = arith.mulf %127, %126 : vector<8x16xf32>
    %129 = arith.addf %124, %128 : vector<8x16xf32>
    %c8_44 = arith.constant 8 : index
    %c320 = arith.constant 320 : index
    %130 = vector.load %arg12[%c8_44, %c320] : memref<16x512xf32, #tpu.memory_space<vmem>>, vector<8x16xf32>
    tpu.vector_store %arg12[%c8_44, %c320], %129 {strides = array<i32>} : memref<16x512xf32, #tpu.memory_space<vmem>>, vector<8x16xf32>,
    %131 = vector.extract_strided_slice %7 {offsets = [0, 6, 0], sizes = [8, 1, 16], strides = [1, 1, 1]} : vector<8x8x16xf32> to vector<8x1x16xf32>
    %132 = vector.shape_cast %131 : vector<8x1x16xf32> to vector<8x16xf32>
    %cst_45 = arith.constant 0.933333396 : f32
    %133 = vector.broadcast %cst_45 : f32 to vector<8x16xf32>
    %134 = arith.mulf %133, %132 : vector<8x16xf32>
    %135 = vector.extract_strided_slice %7 {offsets = [0, 7, 0], sizes = [8, 1, 16], strides = [1, 1, 1]} : vector<8x8x16xf32> to vector<8x1x16xf32>
    %136 = vector.shape_cast %135 : vector<8x1x16xf32> to vector<8x16xf32>
    %cst_46 = arith.constant 6.666660e-02 : f32
    %137 = vector.broadcast %cst_46 : f32 to vector<8x16xf32>
    %138 = arith.mulf %137, %136 : vector<8x16xf32>
    %139 = arith.addf %134, %138 : vector<8x16xf32>
    %c8_47 = arith.constant 8 : index
    %c336 = arith.constant 336 : index
    %140 = vector.load %arg12[%c8_47, %c336] : memref<16x512xf32, #tpu.memory_space<vmem>>, vector<8x16xf32>
    tpu.vector_store %arg12[%c8_47, %c336], %139 {strides = array<i32>} : memref<16x512xf32, #tpu.memory_space<vmem>>, vector<8x16xf32>,
    %141 = vector.extract_strided_slice %7 {offsets = [0, 6, 0], sizes = [8, 1, 16], strides = [1, 1, 1]} : vector<8x8x16xf32> to vector<8x1x16xf32>
    %142 = vector.shape_cast %141 : vector<8x1x16xf32> to vector<8x16xf32>
    %cst_48 = arith.constant 0.466666698 : f32
    %143 = vector.broadcast %cst_48 : f32 to vector<8x16xf32>
    %144 = arith.mulf %143, %142 : vector<8x16xf32>
    %145 = vector.extract_strided_slice %7 {offsets = [0, 7, 0], sizes = [8, 1, 16], strides = [1, 1, 1]} : vector<8x8x16xf32> to vector<8x1x16xf32>
    %146 = vector.shape_cast %145 : vector<8x1x16xf32> to vector<8x16xf32>
    %cst_49 = arith.constant 0.533333302 : f32
    %147 = vector.broadcast %cst_49 : f32 to vector<8x16xf32>
    %148 = arith.mulf %147, %146 : vector<8x16xf32>
    %149 = arith.addf %144, %148 : vector<8x16xf32>
    %c8_50 = arith.constant 8 : index
    %c352 = arith.constant 352 : index
    %150 = vector.load %arg12[%c8_50, %c352] : memref<16x512xf32, #tpu.memory_space<vmem>>, vector<8x16xf32>
    tpu.vector_store %arg12[%c8_50, %c352], %149 {strides = array<i32>} : memref<16x512xf32, #tpu.memory_space<vmem>>, vector<8x16xf32>,
    %151 = vector.extract_strided_slice %7 {offsets = [0, 7, 0], sizes = [8, 1, 16], strides = [1, 1, 1]} : vector<8x8x16xf32> to vector<8x1x16xf32>
    %152 = vector.shape_cast %151 : vector<8x1x16xf32> to vector<8x16xf32>
    %c8_51 = arith.constant 8 : index
    %c368 = arith.constant 368 : index
    %153 = vector.load %arg12[%c8_51, %c368] : memref<16x512xf32, #tpu.memory_space<vmem>>, vector<8x16xf32>
    tpu.vector_store %arg12[%c8_51, %c368], %152 {strides = array<i32>} : memref<16x512xf32, #tpu.memory_space<vmem>>, vector<8x16xf32>,
    %c0_52 = arith.constant 0 : index
    %c0_53 = arith.constant 0 : index
    %c0_54 = arith.constant 0 : index
    %154 = vector.load %arg4[%c0_52, %c0_53, %c0_54] : memref<9x1x256xf32, #tpu.memory_space<vmem>>, vector<1x1x256xf32>
    %155 = vector.shape_cast %154 : vector<1x1x256xf32> to vector<1x256xf32>
    %cst_55 = arith.constant 5.000000e-01 : f32
    %156 = vector.broadcast %cst_55 : f32 to vector<1x256xf32>
    %157 = arith.cmpf ogt, %155, %156 : vector<1x256xf32>
    %c1 = arith.constant 1 : index
    %c0_56 = arith.constant 0 : index
    %c0_57 = arith.constant 0 : index
    %158 = vector.load %arg4[%c1, %c0_56, %c0_57] : memref<9x1x256xf32, #tpu.memory_space<vmem>>, vector<1x1x256xf32>
    %159 = vector.shape_cast %158 : vector<1x1x256xf32> to vector<1x256xf32>
    %cst_58 = arith.constant 5.000000e-01 : f32
    %160 = vector.broadcast %cst_58 : f32 to vector<1x256xf32>
    %161 = arith.cmpf ogt, %159, %160 : vector<1x256xf32>
    %c2 = arith.constant 2 : index
    %c0_59 = arith.constant 0 : index
    %c0_60 = arith.constant 0 : index
    %162 = vector.load %arg4[%c2, %c0_59, %c0_60] : memref<9x1x256xf32, #tpu.memory_space<vmem>>, vector<1x1x256xf32>
    %163 = vector.shape_cast %162 : vector<1x1x256xf32> to vector<1x256xf32>
    %cst_61 = arith.constant 5.000000e-01 : f32
    %164 = vector.broadcast %cst_61 : f32 to vector<1x256xf32>
    %165 = arith.cmpf ogt, %163, %164 : vector<1x256xf32>
    %c3 = arith.constant 3 : index
    %c0_62 = arith.constant 0 : index
    %c0_63 = arith.constant 0 : index
    %166 = vector.load %arg4[%c3, %c0_62, %c0_63] : memref<9x1x256xf32, #tpu.memory_space<vmem>>, vector<1x1x256xf32>
    %167 = vector.shape_cast %166 : vector<1x1x256xf32> to vector<1x256xf32>
    %cst_64 = arith.constant 5.000000e-01 : f32
    %168 = vector.broadcast %cst_64 : f32 to vector<1x256xf32>
    %169 = arith.cmpf ogt, %167, %168 : vector<1x256xf32>
    %c5 = arith.constant 5 : index
    %c0_65 = arith.constant 0 : index
    %c0_66 = arith.constant 0 : index
    %170 = vector.load %arg4[%c5, %c0_65, %c0_66] : memref<9x1x256xf32, #tpu.memory_space<vmem>>, vector<1x1x256xf32>
    %171 = vector.shape_cast %170 : vector<1x1x256xf32> to vector<1x256xf32>
    %cst_67 = arith.constant 5.000000e-01 : f32
    %172 = vector.broadcast %cst_67 : f32 to vector<1x256xf32>
    %173 = arith.cmpf ogt, %171, %172 : vector<1x256xf32>
    %c6 = arith.constant 6 : index
    %c0_68 = arith.constant 0 : index
    %c0_69 = arith.constant 0 : index
    %174 = vector.load %arg4[%c6, %c0_68, %c0_69] : memref<9x1x256xf32, #tpu.memory_space<vmem>>, vector<1x1x256xf32>
    %175 = vector.shape_cast %174 : vector<1x1x256xf32> to vector<1x256xf32>
    %cst_70 = arith.constant 5.000000e-01 : f32
    %176 = vector.broadcast %cst_70 : f32 to vector<1x256xf32>
    %177 = arith.cmpf ogt, %175, %176 : vector<1x256xf32>
    %c7 = arith.constant 7 : index
    %c0_71 = arith.constant 0 : index
    %c0_72 = arith.constant 0 : index
    %178 = vector.load %arg4[%c7, %c0_71, %c0_72] : memref<9x1x256xf32, #tpu.memory_space<vmem>>, vector<1x1x256xf32>
    %179 = vector.shape_cast %178 : vector<1x1x256xf32> to vector<1x256xf32>
    %cst_73 = arith.constant 5.000000e-01 : f32
    %180 = vector.broadcast %cst_73 : f32 to vector<1x256xf32>
    %181 = arith.cmpf ogt, %179, %180 : vector<1x256xf32>
    %c8_74 = arith.constant 8 : index
    %c0_75 = arith.constant 0 : index
    %c0_76 = arith.constant 0 : index
    %182 = vector.load %arg4[%c8_74, %c0_75, %c0_76] : memref<9x1x256xf32, #tpu.memory_space<vmem>>, vector<1x1x256xf32>
    %183 = vector.shape_cast %182 : vector<1x1x256xf32> to vector<1x256xf32>
    %cst_77 = arith.constant 5.000000e-01 : f32
    %184 = vector.broadcast %cst_77 : f32 to vector<1x256xf32>
    %185 = arith.cmpf ogt, %183, %184 : vector<1x256xf32>
    %c0_78 = arith.constant 0 : index
    %c111 = arith.constant 111 : index
    %186 = vector.load %arg12[%c0_78, %c111] : memref<16x512xf32, #tpu.memory_space<vmem>>, vector<16x256xf32>
    %cst_79 = arith.constant 0.000000e+00 : f32
    %187 = vector.shape_cast %157 : vector<1x256xi1> to vector<1x256xi1>
    %188 = vector.broadcast %187 : vector<1x256xi1> to vector<16x256xi1>
    %189 = vector.broadcast %cst_79 : f32 to vector<16x256xf32>
    %190 = arith.select %188, %186, %189 : vector<16x256xi1>, vector<16x256xf32>
    %c0_80 = arith.constant 0 : index
    %c0_81 = arith.constant 0 : index
    %c0_82 = arith.constant 0 : index
    %191 = vector.load %arg5[%c0_80, %c0_81, %c0_82] : memref<9x16x16xf32, #tpu.memory_space<vmem>>, vector<1x16x16xf32>
    %192 = vector.shape_cast %191 : vector<1x16x16xf32> to vector<16x16xf32>
    %cst_83 = arith.constant dense<0.000000e+00> : vector<16x256xf32>
    %193 = tpu.matmul %192, %190, %cst_83 {dimension_numbers = #tpu.dot_dimension_numbers<[1], [0], [0], [1], [0, 0, 1, 1], [], []>} : vector<16x16xf32>, vector<16x256xf32>, vector<16x256xf32> -> vector<16x256xf32>
    %c0_84 = arith.constant 0 : index
    %c112 = arith.constant 112 : index
    %194 = vector.load %arg12[%c0_84, %c112] : memref<16x512xf32, #tpu.memory_space<vmem>>, vector<16x256xf32>
    %cst_85 = arith.constant 0.000000e+00 : f32
    %195 = vector.shape_cast %161 : vector<1x256xi1> to vector<1x256xi1>
    %196 = vector.broadcast %195 : vector<1x256xi1> to vector<16x256xi1>
    %197 = vector.broadcast %cst_85 : f32 to vector<16x256xf32>
    %198 = arith.select %196, %194, %197 : vector<16x256xi1>, vector<16x256xf32>
    %c1_86 = arith.constant 1 : index
    %c0_87 = arith.constant 0 : index
    %c0_88 = arith.constant 0 : index
    %199 = vector.load %arg5[%c1_86, %c0_87, %c0_88] : memref<9x16x16xf32, #tpu.memory_space<vmem>>, vector<1x16x16xf32>
    %200 = vector.shape_cast %199 : vector<1x16x16xf32> to vector<16x16xf32>
    %cst_89 = arith.constant dense<0.000000e+00> : vector<16x256xf32>
    %201 = tpu.matmul %200, %198, %cst_89 {dimension_numbers = #tpu.dot_dimension_numbers<[1], [0], [0], [1], [0, 0, 1, 1], [], []>} : vector<16x16xf32>, vector<16x256xf32>, vector<16x256xf32> -> vector<16x256xf32>
    %202 = arith.addf %193, %201 : vector<16x256xf32>
    %c0_90 = arith.constant 0 : index
    %c113 = arith.constant 113 : index
    %203 = vector.load %arg12[%c0_90, %c113] : memref<16x512xf32, #tpu.memory_space<vmem>>, vector<16x256xf32>
    %cst_91 = arith.constant 0.000000e+00 : f32
    %204 = vector.shape_cast %165 : vector<1x256xi1> to vector<1x256xi1>
    %205 = vector.broadcast %204 : vector<1x256xi1> to vector<16x256xi1>
    %206 = vector.broadcast %cst_91 : f32 to vector<16x256xf32>
    %207 = arith.select %205, %203, %206 : vector<16x256xi1>, vector<16x256xf32>
    %c2_92 = arith.constant 2 : index
    %c0_93 = arith.constant 0 : index
    %c0_94 = arith.constant 0 : index
    %208 = vector.load %arg5[%c2_92, %c0_93, %c0_94] : memref<9x16x16xf32, #tpu.memory_space<vmem>>, vector<1x16x16xf32>
    %209 = vector.shape_cast %208 : vector<1x16x16xf32> to vector<16x16xf32>
    %cst_95 = arith.constant dense<0.000000e+00> : vector<16x256xf32>
    %210 = tpu.matmul %209, %207, %cst_95 {dimension_numbers = #tpu.dot_dimension_numbers<[1], [0], [0], [1], [0, 0, 1, 1], [], []>} : vector<16x16xf32>, vector<16x256xf32>, vector<16x256xf32> -> vector<16x256xf32>
    %211 = arith.addf %202, %210 : vector<16x256xf32>
    %c0_96 = arith.constant 0 : index
    %c127 = arith.constant 127 : index
    %212 = vector.load %arg12[%c0_96, %c127] : memref<16x512xf32, #tpu.memory_space<vmem>>, vector<16x256xf32>
    %cst_97 = arith.constant 0.000000e+00 : f32
    %213 = vector.shape_cast %169 : vector<1x256xi1> to vector<1x256xi1>
    %214 = vector.broadcast %213 : vector<1x256xi1> to vector<16x256xi1>
    %215 = vector.broadcast %cst_97 : f32 to vector<16x256xf32>
    %216 = arith.select %214, %212, %215 : vector<16x256xi1>, vector<16x256xf32>
    %c3_98 = arith.constant 3 : index
    %c0_99 = arith.constant 0 : index
    %c0_100 = arith.constant 0 : index
    %217 = vector.load %arg5[%c3_98, %c0_99, %c0_100] : memref<9x16x16xf32, #tpu.memory_space<vmem>>, vector<1x16x16xf32>
    %218 = vector.shape_cast %217 : vector<1x16x16xf32> to vector<16x16xf32>
    %cst_101 = arith.constant dense<0.000000e+00> : vector<16x256xf32>
    %219 = tpu.matmul %218, %216, %cst_101 {dimension_numbers = #tpu.dot_dimension_numbers<[1], [0], [0], [1], [0, 0, 1, 1], [], []>} : vector<16x16xf32>, vector<16x256xf32>, vector<16x256xf32> -> vector<16x256xf32>
    %220 = arith.addf %211, %219 : vector<16x256xf32>
    %c0_102 = arith.constant 0 : index
    %c128_103 = arith.constant 128 : index
    %221 = vector.load %arg12[%c0_102, %c128_103] : memref<16x512xf32, #tpu.memory_space<vmem>>, vector<16x256xf32>
    %c4 = arith.constant 4 : index
    %c0_104 = arith.constant 0 : index
    %c0_105 = arith.constant 0 : index
    %222 = vector.load %arg5[%c4, %c0_104, %c0_105] : memref<9x16x16xf32, #tpu.memory_space<vmem>>, vector<1x16x16xf32>
    %223 = vector.shape_cast %222 : vector<1x16x16xf32> to vector<16x16xf32>
    %cst_106 = arith.constant dense<0.000000e+00> : vector<16x256xf32>
    %224 = tpu.matmul %223, %221, %cst_106 {dimension_numbers = #tpu.dot_dimension_numbers<[1], [0], [0], [1], [0, 0, 1, 1], [], []>} : vector<16x16xf32>, vector<16x256xf32>, vector<16x256xf32> -> vector<16x256xf32>
    %225 = arith.addf %220, %224 : vector<16x256xf32>
    %c0_107 = arith.constant 0 : index
    %c129 = arith.constant 129 : index
    %226 = vector.load %arg12[%c0_107, %c129] : memref<16x512xf32, #tpu.memory_space<vmem>>, vector<16x256xf32>
    %cst_108 = arith.constant 0.000000e+00 : f32
    %227 = vector.shape_cast %173 : vector<1x256xi1> to vector<1x256xi1>
    %228 = vector.broadcast %227 : vector<1x256xi1> to vector<16x256xi1>
    %229 = vector.broadcast %cst_108 : f32 to vector<16x256xf32>
    %230 = arith.select %228, %226, %229 : vector<16x256xi1>, vector<16x256xf32>
    %c5_109 = arith.constant 5 : index
    %c0_110 = arith.constant 0 : index
    %c0_111 = arith.constant 0 : index
    %231 = vector.load %arg5[%c5_109, %c0_110, %c0_111] : memref<9x16x16xf32, #tpu.memory_space<vmem>>, vector<1x16x16xf32>
    %232 = vector.shape_cast %231 : vector<1x16x16xf32> to vector<16x16xf32>
    %cst_112 = arith.constant dense<0.000000e+00> : vector<16x256xf32>
    %233 = tpu.matmul %232, %230, %cst_112 {dimension_numbers = #tpu.dot_dimension_numbers<[1], [0], [0], [1], [0, 0, 1, 1], [], []>} : vector<16x16xf32>, vector<16x256xf32>, vector<16x256xf32> -> vector<16x256xf32>
    %234 = arith.addf %225, %233 : vector<16x256xf32>
    %c0_113 = arith.constant 0 : index
    %c143 = arith.constant 143 : index
    %235 = vector.load %arg12[%c0_113, %c143] : memref<16x512xf32, #tpu.memory_space<vmem>>, vector<16x256xf32>
    %cst_114 = arith.constant 0.000000e+00 : f32
    %236 = vector.shape_cast %177 : vector<1x256xi1> to vector<1x256xi1>
    %237 = vector.broadcast %236 : vector<1x256xi1> to vector<16x256xi1>
    %238 = vector.broadcast %cst_114 : f32 to vector<16x256xf32>
    %239 = arith.select %237, %235, %238 : vector<16x256xi1>, vector<16x256xf32>
    %c6_115 = arith.constant 6 : index
    %c0_116 = arith.constant 0 : index
    %c0_117 = arith.constant 0 : index
    %240 = vector.load %arg5[%c6_115, %c0_116, %c0_117] : memref<9x16x16xf32, #tpu.memory_space<vmem>>, vector<1x16x16xf32>
    %241 = vector.shape_cast %240 : vector<1x16x16xf32> to vector<16x16xf32>
    %cst_118 = arith.constant dense<0.000000e+00> : vector<16x256xf32>
    %242 = tpu.matmul %241, %239, %cst_118 {dimension_numbers = #tpu.dot_dimension_numbers<[1], [0], [0], [1], [0, 0, 1, 1], [], []>} : vector<16x16xf32>, vector<16x256xf32>, vector<16x256xf32> -> vector<16x256xf32>
    %243 = arith.addf %234, %242 : vector<16x256xf32>
    %c0_119 = arith.constant 0 : index
    %c144_120 = arith.constant 144 : index
    %244 = vector.load %arg12[%c0_119, %c144_120] : memref<16x512xf32, #tpu.memory_space<vmem>>, vector<16x256xf32>
    %cst_121 = arith.constant 0.000000e+00 : f32
    %245 = vector.shape_cast %181 : vector<1x256xi1> to vector<1x256xi1>
    %246 = vector.broadcast %245 : vector<1x256xi1> to vector<16x256xi1>
    %247 = vector.broadcast %cst_121 : f32 to vector<16x256xf32>
    %248 = arith.select %246, %244, %247 : vector<16x256xi1>, vector<16x256xf32>
    %c7_122 = arith.constant 7 : index
    %c0_123 = arith.constant 0 : index
    %c0_124 = arith.constant 0 : index
    %249 = vector.load %arg5[%c7_122, %c0_123, %c0_124] : memref<9x16x16xf32, #tpu.memory_space<vmem>>, vector<1x16x16xf32>
    %250 = vector.shape_cast %249 : vector<1x16x16xf32> to vector<16x16xf32>
    %cst_125 = arith.constant dense<0.000000e+00> : vector<16x256xf32>
    %251 = tpu.matmul %250, %248, %cst_125 {dimension_numbers = #tpu.dot_dimension_numbers<[1], [0], [0], [1], [0, 0, 1, 1], [], []>} : vector<16x16xf32>, vector<16x256xf32>, vector<16x256xf32> -> vector<16x256xf32>
    %252 = arith.addf %243, %251 : vector<16x256xf32>
    %c0_126 = arith.constant 0 : index
    %c145 = arith.constant 145 : index
    %253 = vector.load %arg12[%c0_126, %c145] : memref<16x512xf32, #tpu.memory_space<vmem>>, vector<16x256xf32>
    %cst_127 = arith.constant 0.000000e+00 : f32
    %254 = vector.shape_cast %185 : vector<1x256xi1> to vector<1x256xi1>
    %255 = vector.broadcast %254 : vector<1x256xi1> to vector<16x256xi1>
    %256 = vector.broadcast %cst_127 : f32 to vector<16x256xf32>
    %257 = arith.select %255, %253, %256 : vector<16x256xi1>, vector<16x256xf32>
    %c8_128 = arith.constant 8 : index
    %c0_129 = arith.constant 0 : index
    %c0_130 = arith.constant 0 : index
    %258 = vector.load %arg5[%c8_128, %c0_129, %c0_130] : memref<9x16x16xf32, #tpu.memory_space<vmem>>, vector<1x16x16xf32>
    %259 = vector.shape_cast %258 : vector<1x16x16xf32> to vector<16x16xf32>
    %cst_131 = arith.constant dense<0.000000e+00> : vector<16x256xf32>
    %260 = tpu.matmul %259, %257, %cst_131 {dimension_numbers = #tpu.dot_dimension_numbers<[1], [0], [0], [1], [0, 0, 1, 1], [], []>} : vector<16x16xf32>, vector<16x256xf32>, vector<16x256xf32> -> vector<16x256xf32>
    %261 = arith.addf %252, %260 : vector<16x256xf32>
    %c0_132 = arith.constant 0 : index
    %c0_133 = arith.constant 0 : index
    %262 = vector.load %arg6[%c0_132, %c0_133] : memref<16x1xf32, #tpu.memory_space<vmem>>, vector<16x1xf32>
    %263 = vector.broadcast %262 : vector<16x1xf32> to vector<16x256xf32>
    %264 = arith.mulf %261, %263 : vector<16x256xf32>
    %c0_134 = arith.constant 0 : index
    %c0_135 = arith.constant 0 : index
    %265 = vector.load %arg7[%c0_134, %c0_135] : memref<16x1xf32, #tpu.memory_space<vmem>>, vector<16x1xf32>
    %266 = vector.broadcast %265 : vector<16x1xf32> to vector<16x256xf32>
    %267 = arith.addf %264, %266 : vector<16x256xf32>
    %cst_136 = arith.constant 0.000000e+00 : f32
    %268 = vector.broadcast %cst_136 : f32 to vector<16x256xf32>
    %269 = arith.maximumf %267, %268 : vector<16x256xf32>
    %c0_137 = arith.constant 0 : index
    %c128_138 = arith.constant 128 : index
    %270 = vector.load %arg13[%c0_137, %c128_138] : memref<16x512xf32, #tpu.memory_space<vmem>>, vector<16x256xf32>
    tpu.vector_store %arg13[%c0_137, %c128_138], %269 {strides = array<i32>} : memref<16x512xf32, #tpu.memory_space<vmem>>, vector<16x256xf32>,
    %c0_139 = arith.constant 0 : index
    %c111_140 = arith.constant 111 : index
    %271 = vector.load %arg13[%c0_139, %c111_140] : memref<16x512xf32, #tpu.memory_space<vmem>>, vector<16x256xf32>
    %cst_141 = arith.constant 0.000000e+00 : f32
    %272 = vector.shape_cast %157 : vector<1x256xi1> to vector<1x256xi1>
    %273 = vector.broadcast %272 : vector<1x256xi1> to vector<16x256xi1>
    %274 = vector.broadcast %cst_141 : f32 to vector<16x256xf32>
    %275 = arith.select %273, %271, %274 : vector<16x256xi1>, vector<16x256xf32>
    %c0_142 = arith.constant 0 : index
    %c0_143 = arith.constant 0 : index
    %c0_144 = arith.constant 0 : index
    %276 = vector.load %arg8[%c0_142, %c0_143, %c0_144] : memref<9x16x16xf32, #tpu.memory_space<vmem>>, vector<1x16x16xf32>
    %277 = vector.shape_cast %276 : vector<1x16x16xf32> to vector<16x16xf32>
    %cst_145 = arith.constant dense<0.000000e+00> : vector<16x256xf32>
    %278 = tpu.matmul %277, %275, %cst_145 {dimension_numbers = #tpu.dot_dimension_numbers<[1], [0], [0], [1], [0, 0, 1, 1], [], []>} : vector<16x16xf32>, vector<16x256xf32>, vector<16x256xf32> -> vector<16x256xf32>
    %c0_146 = arith.constant 0 : index
    %c112_147 = arith.constant 112 : index
    %279 = vector.load %arg13[%c0_146, %c112_147] : memref<16x512xf32, #tpu.memory_space<vmem>>, vector<16x256xf32>
    %cst_148 = arith.constant 0.000000e+00 : f32
    %280 = vector.shape_cast %161 : vector<1x256xi1> to vector<1x256xi1>
    %281 = vector.broadcast %280 : vector<1x256xi1> to vector<16x256xi1>
    %282 = vector.broadcast %cst_148 : f32 to vector<16x256xf32>
    %283 = arith.select %281, %279, %282 : vector<16x256xi1>, vector<16x256xf32>
    %c1_149 = arith.constant 1 : index
    %c0_150 = arith.constant 0 : index
    %c0_151 = arith.constant 0 : index
    %284 = vector.load %arg8[%c1_149, %c0_150, %c0_151] : memref<9x16x16xf32, #tpu.memory_space<vmem>>, vector<1x16x16xf32>
    %285 = vector.shape_cast %284 : vector<1x16x16xf32> to vector<16x16xf32>
    %cst_152 = arith.constant dense<0.000000e+00> : vector<16x256xf32>
    %286 = tpu.matmul %285, %283, %cst_152 {dimension_numbers = #tpu.dot_dimension_numbers<[1], [0], [0], [1], [0, 0, 1, 1], [], []>} : vector<16x16xf32>, vector<16x256xf32>, vector<16x256xf32> -> vector<16x256xf32>
    %287 = arith.addf %278, %286 : vector<16x256xf32>
    %c0_153 = arith.constant 0 : index
    %c113_154 = arith.constant 113 : index
    %288 = vector.load %arg13[%c0_153, %c113_154] : memref<16x512xf32, #tpu.memory_space<vmem>>, vector<16x256xf32>
    %cst_155 = arith.constant 0.000000e+00 : f32
    %289 = vector.shape_cast %165 : vector<1x256xi1> to vector<1x256xi1>
    %290 = vector.broadcast %289 : vector<1x256xi1> to vector<16x256xi1>
    %291 = vector.broadcast %cst_155 : f32 to vector<16x256xf32>
    %292 = arith.select %290, %288, %291 : vector<16x256xi1>, vector<16x256xf32>
    %c2_156 = arith.constant 2 : index
    %c0_157 = arith.constant 0 : index
    %c0_158 = arith.constant 0 : index
    %293 = vector.load %arg8[%c2_156, %c0_157, %c0_158] : memref<9x16x16xf32, #tpu.memory_space<vmem>>, vector<1x16x16xf32>
    %294 = vector.shape_cast %293 : vector<1x16x16xf32> to vector<16x16xf32>
    %cst_159 = arith.constant dense<0.000000e+00> : vector<16x256xf32>
    %295 = tpu.matmul %294, %292, %cst_159 {dimension_numbers = #tpu.dot_dimension_numbers<[1], [0], [0], [1], [0, 0, 1, 1], [], []>} : vector<16x16xf32>, vector<16x256xf32>, vector<16x256xf32> -> vector<16x256xf32>
    %296 = arith.addf %287, %295 : vector<16x256xf32>
    %c0_160 = arith.constant 0 : index
    %c127_161 = arith.constant 127 : index
    %297 = vector.load %arg13[%c0_160, %c127_161] : memref<16x512xf32, #tpu.memory_space<vmem>>, vector<16x256xf32>
    %cst_162 = arith.constant 0.000000e+00 : f32
    %298 = vector.shape_cast %169 : vector<1x256xi1> to vector<1x256xi1>
    %299 = vector.broadcast %298 : vector<1x256xi1> to vector<16x256xi1>
    %300 = vector.broadcast %cst_162 : f32 to vector<16x256xf32>
    %301 = arith.select %299, %297, %300 : vector<16x256xi1>, vector<16x256xf32>
    %c3_163 = arith.constant 3 : index
    %c0_164 = arith.constant 0 : index
    %c0_165 = arith.constant 0 : index
    %302 = vector.load %arg8[%c3_163, %c0_164, %c0_165] : memref<9x16x16xf32, #tpu.memory_space<vmem>>, vector<1x16x16xf32>
    %303 = vector.shape_cast %302 : vector<1x16x16xf32> to vector<16x16xf32>
    %cst_166 = arith.constant dense<0.000000e+00> : vector<16x256xf32>
    %304 = tpu.matmul %303, %301, %cst_166 {dimension_numbers = #tpu.dot_dimension_numbers<[1], [0], [0], [1], [0, 0, 1, 1], [], []>} : vector<16x16xf32>, vector<16x256xf32>, vector<16x256xf32> -> vector<16x256xf32>
    %305 = arith.addf %296, %304 : vector<16x256xf32>
    %c0_167 = arith.constant 0 : index
    %c128_168 = arith.constant 128 : index
    %306 = vector.load %arg13[%c0_167, %c128_168] : memref<16x512xf32, #tpu.memory_space<vmem>>, vector<16x256xf32>
    %c4_169 = arith.constant 4 : index
    %c0_170 = arith.constant 0 : index
    %c0_171 = arith.constant 0 : index
    %307 = vector.load %arg8[%c4_169, %c0_170, %c0_171] : memref<9x16x16xf32, #tpu.memory_space<vmem>>, vector<1x16x16xf32>
    %308 = vector.shape_cast %307 : vector<1x16x16xf32> to vector<16x16xf32>
    %cst_172 = arith.constant dense<0.000000e+00> : vector<16x256xf32>
    %309 = tpu.matmul %308, %306, %cst_172 {dimension_numbers = #tpu.dot_dimension_numbers<[1], [0], [0], [1], [0, 0, 1, 1], [], []>} : vector<16x16xf32>, vector<16x256xf32>, vector<16x256xf32> -> vector<16x256xf32>
    %310 = arith.addf %305, %309 : vector<16x256xf32>
    %c0_173 = arith.constant 0 : index
    %c129_174 = arith.constant 129 : index
    %311 = vector.load %arg13[%c0_173, %c129_174] : memref<16x512xf32, #tpu.memory_space<vmem>>, vector<16x256xf32>
    %cst_175 = arith.constant 0.000000e+00 : f32
    %312 = vector.shape_cast %173 : vector<1x256xi1> to vector<1x256xi1>
    %313 = vector.broadcast %312 : vector<1x256xi1> to vector<16x256xi1>
    %314 = vector.broadcast %cst_175 : f32 to vector<16x256xf32>
    %315 = arith.select %313, %311, %314 : vector<16x256xi1>, vector<16x256xf32>
    %c5_176 = arith.constant 5 : index
    %c0_177 = arith.constant 0 : index
    %c0_178 = arith.constant 0 : index
    %316 = vector.load %arg8[%c5_176, %c0_177, %c0_178] : memref<9x16x16xf32, #tpu.memory_space<vmem>>, vector<1x16x16xf32>
    %317 = vector.shape_cast %316 : vector<1x16x16xf32> to vector<16x16xf32>
    %cst_179 = arith.constant dense<0.000000e+00> : vector<16x256xf32>
    %318 = tpu.matmul %317, %315, %cst_179 {dimension_numbers = #tpu.dot_dimension_numbers<[1], [0], [0], [1], [0, 0, 1, 1], [], []>} : vector<16x16xf32>, vector<16x256xf32>, vector<16x256xf32> -> vector<16x256xf32>
    %319 = arith.addf %310, %318 : vector<16x256xf32>
    %c0_180 = arith.constant 0 : index
    %c143_181 = arith.constant 143 : index
    %320 = vector.load %arg13[%c0_180, %c143_181] : memref<16x512xf32, #tpu.memory_space<vmem>>, vector<16x256xf32>
    %cst_182 = arith.constant 0.000000e+00 : f32
    %321 = vector.shape_cast %177 : vector<1x256xi1> to vector<1x256xi1>
    %322 = vector.broadcast %321 : vector<1x256xi1> to vector<16x256xi1>
    %323 = vector.broadcast %cst_182 : f32 to vector<16x256xf32>
    %324 = arith.select %322, %320, %323 : vector<16x256xi1>, vector<16x256xf32>
    %c6_183 = arith.constant 6 : index
    %c0_184 = arith.constant 0 : index
    %c0_185 = arith.constant 0 : index
    %325 = vector.load %arg8[%c6_183, %c0_184, %c0_185] : memref<9x16x16xf32, #tpu.memory_space<vmem>>, vector<1x16x16xf32>
    %326 = vector.shape_cast %325 : vector<1x16x16xf32> to vector<16x16xf32>
    %cst_186 = arith.constant dense<0.000000e+00> : vector<16x256xf32>
    %327 = tpu.matmul %326, %324, %cst_186 {dimension_numbers = #tpu.dot_dimension_numbers<[1], [0], [0], [1], [0, 0, 1, 1], [], []>} : vector<16x16xf32>, vector<16x256xf32>, vector<16x256xf32> -> vector<16x256xf32>
    %328 = arith.addf %319, %327 : vector<16x256xf32>
    %c0_187 = arith.constant 0 : index
    %c144_188 = arith.constant 144 : index
    %329 = vector.load %arg13[%c0_187, %c144_188] : memref<16x512xf32, #tpu.memory_space<vmem>>, vector<16x256xf32>
    %cst_189 = arith.constant 0.000000e+00 : f32
    %330 = vector.shape_cast %181 : vector<1x256xi1> to vector<1x256xi1>
    %331 = vector.broadcast %330 : vector<1x256xi1> to vector<16x256xi1>
    %332 = vector.broadcast %cst_189 : f32 to vector<16x256xf32>
    %333 = arith.select %331, %329, %332 : vector<16x256xi1>, vector<16x256xf32>
    %c7_190 = arith.constant 7 : index
    %c0_191 = arith.constant 0 : index
    %c0_192 = arith.constant 0 : index
    %334 = vector.load %arg8[%c7_190, %c0_191, %c0_192] : memref<9x16x16xf32, #tpu.memory_space<vmem>>, vector<1x16x16xf32>
    %335 = vector.shape_cast %334 : vector<1x16x16xf32> to vector<16x16xf32>
    %cst_193 = arith.constant dense<0.000000e+00> : vector<16x256xf32>
    %336 = tpu.matmul %335, %333, %cst_193 {dimension_numbers = #tpu.dot_dimension_numbers<[1], [0], [0], [1], [0, 0, 1, 1], [], []>} : vector<16x16xf32>, vector<16x256xf32>, vector<16x256xf32> -> vector<16x256xf32>
    %337 = arith.addf %328, %336 : vector<16x256xf32>
    %c0_194 = arith.constant 0 : index
    %c145_195 = arith.constant 145 : index
    %338 = vector.load %arg13[%c0_194, %c145_195] : memref<16x512xf32, #tpu.memory_space<vmem>>, vector<16x256xf32>
    %cst_196 = arith.constant 0.000000e+00 : f32
    %339 = vector.shape_cast %185 : vector<1x256xi1> to vector<1x256xi1>
    %340 = vector.broadcast %339 : vector<1x256xi1> to vector<16x256xi1>
    %341 = vector.broadcast %cst_196 : f32 to vector<16x256xf32>
    %342 = arith.select %340, %338, %341 : vector<16x256xi1>, vector<16x256xf32>
    %c8_197 = arith.constant 8 : index
    %c0_198 = arith.constant 0 : index
    %c0_199 = arith.constant 0 : index
    %343 = vector.load %arg8[%c8_197, %c0_198, %c0_199] : memref<9x16x16xf32, #tpu.memory_space<vmem>>, vector<1x16x16xf32>
    %344 = vector.shape_cast %343 : vector<1x16x16xf32> to vector<16x16xf32>
    %cst_200 = arith.constant dense<0.000000e+00> : vector<16x256xf32>
    %345 = tpu.matmul %344, %342, %cst_200 {dimension_numbers = #tpu.dot_dimension_numbers<[1], [0], [0], [1], [0, 0, 1, 1], [], []>} : vector<16x16xf32>, vector<16x256xf32>, vector<16x256xf32> -> vector<16x256xf32>
    %346 = arith.addf %337, %345 : vector<16x256xf32>
    %c0_201 = arith.constant 0 : index
    %c0_202 = arith.constant 0 : index
    %347 = vector.load %arg9[%c0_201, %c0_202] : memref<16x1xf32, #tpu.memory_space<vmem>>, vector<16x1xf32>
    %348 = vector.broadcast %347 : vector<16x1xf32> to vector<16x256xf32>
    %349 = arith.mulf %346, %348 : vector<16x256xf32>
    %c0_203 = arith.constant 0 : index
    %c0_204 = arith.constant 0 : index
    %350 = vector.load %arg10[%c0_203, %c0_204] : memref<16x1xf32, #tpu.memory_space<vmem>>, vector<16x1xf32>
    %351 = vector.broadcast %350 : vector<16x1xf32> to vector<16x256xf32>
    %352 = arith.addf %349, %351 : vector<16x256xf32>
    %cst_205 = arith.constant 0.000000e+00 : f32
    %353 = vector.broadcast %cst_205 : f32 to vector<16x256xf32>
    %354 = arith.maximumf %352, %353 : vector<16x256xf32>
    %c0_206 = arith.constant 0 : index
    %c0_207 = arith.constant 0 : index
    %c0_208 = arith.constant 0 : index
    %355 = vector.load %arg11[%c0_206, %c0_207, %c0_208] : memref<1x16x256xf32, #tpu.memory_space<vmem>>, vector<1x16x256xf32>
    %356 = vector.shape_cast %355 : vector<1x16x256xf32> to vector<16x256xf32>
    %357 = vector.shape_cast %354 : vector<16x256xf32> to vector<1x16x256xf32>
    tpu.vector_store %arg11[%c0_206, %c0_207, %c0_208], %357 {strides = array<i32>} : memref<1x16x256xf32, #tpu.memory_space<vmem>>, vector<1x16x256xf32>,
    return
  }
  func.func @transform_0(%arg0: i32) -> (i32, i32, i32) {
    %c0_i32 = arith.constant 0 : i32
    %c0_i32_0 = arith.constant 0 : i32
    %c0_i32_1 = arith.constant 0 : i32
    return %arg0, %c0_i32, %c0_i32_0 : i32, i32, i32
  }
  func.func @transform_1(%arg0: i32) -> (i32, i32, i32) {
    %c0_i32 = arith.constant 0 : i32
    %c0_i32_0 = arith.constant 0 : i32
    %c0_i32_1 = arith.constant 0 : i32
    return %arg0, %c0_i32, %c0_i32_0 : i32, i32, i32
  }
  func.func @transform_2(%arg0: i32) -> (i32, i32) {
    %c0_i32 = arith.constant 0 : i32
    %c0_i32_0 = arith.constant 0 : i32
    %c0_i32_1 = arith.constant 0 : i32
    return %c0_i32, %c0_i32_0 : i32, i32
  }
  func.func @transform_3(%arg0: i32) -> (i32, i32, i32) {
    %c0_i32 = arith.constant 0 : i32
    %c0_i32_0 = arith.constant 0 : i32
    %c0_i32_1 = arith.constant 0 : i32
    %c0_i32_2 = arith.constant 0 : i32
    return %c0_i32, %c0_i32_0, %c0_i32_1 : i32, i32, i32
  }
  func.func @transform_4(%arg0: i32) -> (i32, i32, i32) {
    %c0_i32 = arith.constant 0 : i32
    %c0_i32_0 = arith.constant 0 : i32
    %c0_i32_1 = arith.constant 0 : i32
    %c0_i32_2 = arith.constant 0 : i32
    return %c0_i32, %c0_i32_0, %c0_i32_1 : i32, i32, i32
  }
  func.func @transform_5(%arg0: i32) -> (i32, i32) {
    %c0_i32 = arith.constant 0 : i32
    %c0_i32_0 = arith.constant 0 : i32
    %c0_i32_1 = arith.constant 0 : i32
    return %c0_i32, %c0_i32_0 : i32, i32
  }
  func.func @transform_6(%arg0: i32) -> (i32, i32) {
    %c0_i32 = arith.constant 0 : i32
    %c0_i32_0 = arith.constant 0 : i32
    %c0_i32_1 = arith.constant 0 : i32
    return %c0_i32, %c0_i32_0 : i32, i32
  }
  func.func @transform_7(%arg0: i32) -> (i32, i32, i32) {
    %c0_i32 = arith.constant 0 : i32
    %c0_i32_0 = arith.constant 0 : i32
    %c0_i32_1 = arith.constant 0 : i32
    %c0_i32_2 = arith.constant 0 : i32
    return %c0_i32, %c0_i32_0, %c0_i32_1 : i32, i32, i32
  }
  func.func @transform_8(%arg0: i32) -> (i32, i32) {
    %c0_i32 = arith.constant 0 : i32
    %c0_i32_0 = arith.constant 0 : i32
    %c0_i32_1 = arith.constant 0 : i32
    return %c0_i32, %c0_i32_0 : i32, i32
  }
  func.func @transform_9(%arg0: i32) -> (i32, i32) {
    %c0_i32 = arith.constant 0 : i32
    %c0_i32_0 = arith.constant 0 : i32
    %c0_i32_1 = arith.constant 0 : i32
    return %c0_i32, %c0_i32_0 : i32, i32
  }
  func.func @transform_10(%arg0: i32) -> (i32, i32, i32) {
    %c0_i32 = arith.constant 0 : i32
    %c0_i32_0 = arith.constant 0 : i32
    %c0_i32_1 = arith.constant 0 : i32
    return %arg0, %c0_i32, %c0_i32_0 : i32, i32, i32
  }
}

</mosaic_0001>

<llo_original>
// kernel: up_forward.1
$region0: #{up_forward.1}
  #allocation0 [shape = 'u32[]', space=smem, size = 0x4, offset = 0x4, fixed_abs, tag = 'smem constant byte address 0x4 - core index']
  #allocation1 [shape = 'u32[72,128]{1,0:T(1,128)}', space=vmem, size = 0x9000, scoped, tag = 'internal scratch']
  #allocation2 [shape = 'f32[16,512]{1,0:T(8,128)}', space=vmem, size = 0x8000, scoped, tag = 'scratch operand']
  #allocation3 [shape = 'f32[16,512]{1,0:T(8,128)}', space=vmem, size = 0x8000, scoped, tag = 'scratch operand']
  %s0 = inlined_call_operand.vmem [shape: f32[2,64,8], index: 0, kind: input, shape index: {}]
  %s1 = inlined_call_operand.vmem [shape: f32[2,8,256], index: 1, kind: input, shape index: {}]
  %s2 = inlined_call_operand.vmem [shape: f32[8,16], index: 2, kind: input, shape index: {}]
  %s3 = inlined_call_operand.vmem [shape: f32[9,1,256], index: 3, kind: input, shape index: {}]
  %s4 = inlined_call_operand.vmem [shape: f32[9,16,16], index: 4, kind: input, shape index: {}]
  %s5 = inlined_call_operand.vmem [shape: f32[16,1], index: 5, kind: input, shape index: {}]
  %s6 = inlined_call_operand.vmem [shape: f32[16,1], index: 6, kind: input, shape index: {}]
  %s7 = inlined_call_operand.vmem [shape: f32[9,16,16], index: 7, kind: input, shape index: {}]
  %s8 = inlined_call_operand.vmem [shape: f32[16,1], index: 8, kind: input, shape index: {}]
  %s9 = inlined_call_operand.vmem [shape: f32[16,1], index: 9, kind: input, shape index: {}]
  %s10 = inlined_call_operand.vmem [shape: f32[2,16,256], index: 10, kind: output, shape index: {}]
  %s11 = sld [smem:[#allocation0]]
  $region73: #{up_forward.1} parent=0
    _
  %s13 = ssub.s32 1, %s11
  %s14 = scalar_select 0, %s13, %s11
  loop: start=0, step=1, limit=4
  $region2: #{up_forward.1} parent=0 // loop_pre_header
    _
  $region3: #{up_forward.1} parent=0 // loop_header
    %s16 = sphi 0, %s20
    %p17 = scmp.ge.s32.totalorder %s16, 4
    %s26 = sphi 0, %s28
    %s29 = sphi 0, %s26
    %s30 = sphi 0, %s29
    %s46 = sphi 0, %s30
    %s52 = sphi 0, %s54
    %s55 = sphi 0, %s52
    %s56 = sphi 0, %s55
    %s72 = sphi 0, %s56
    %s76 = sphi 0, %s76
    %s78 = sphi 0, %s76
    %s79 = sphi 0, %s78
    %s93 = sphi 0, %s79
    %s97 = sphi 0, %s97
    %s99 = sphi 0, %s97
    %s100 = sphi 0, %s99
    %s114 = sphi 0, %s100
    %s118 = sphi 0, %s118
    %s120 = sphi 0, %s118
    %s121 = sphi 0, %s120
    %s135 = sphi 0, %s121
    %s139 = sphi 0, %s139
    %s141 = sphi 0, %s139
    %s142 = sphi 0, %s141
    %s156 = sphi 0, %s142
    %s160 = sphi 0, %s160
    %s162 = sphi 0, %s160
    %s163 = sphi 0, %s162
    %s177 = sphi 0, %s163
    %s181 = sphi 0, %s181
    %s183 = sphi 0, %s181
    %s184 = sphi 0, %s183
    %s198 = sphi 0, %s184
    %s202 = sphi 0, %s202
    %s204 = sphi 0, %s202
    %s205 = sphi 0, %s204
    %s219 = sphi 0, %s205
    %s223 = sphi 0, %s223
    %s225 = sphi 0, %s223
    %s226 = sphi 0, %s225
    %s240 = sphi 0, %s226
    %s246 = sphi 0, %s248
    %s249 = sphi 0, %s246
    %s250 = sphi 0, %s249
    %s266 = sphi 0, %s250
  $region4: #{up_forward.1} parent=0 // loop_header_branch
    %19 = sbr.rel (%p17) target = $region8
  $region5: #{up_forward.1} parent=0 // loop_body
    %s21 = ssub.s32 %s16, 1
    %s22 = ssub.s32 %s16, 2
    %s23 = sadd.s32 %s16, 1
    %s24 = ssub.s32 %s16, %s23
    %p25 = scmp.eq.s32.totalorder %s24, 0
    %s27 = sadd.s32 %s26, 1
    %s28 = scalar_select %p25, %s26, %s27
    %p31 = pneg %p25
    %p32 = scmp.eq.s32.totalorder %s16, 1
    %p33 = por %p31, %p32
    %p34 = scmp.ne.s32.totalorder %s26, %s29
    %p35 = scmp.eq.s32.totalorder %s16, 0
    %p36 = por %p34, %p35
    %p37 = scmp.ne.s32.totalorder %s26, %s29
    %p38 = scmp.eq.s32.totalorder %s21, 1
    %p39 = por %p37, %p38
    %p40 = scmp.ne.s32.totalorder %s29, %s30
    %p41 = scmp.eq.s32.totalorder %s21, 0
    %p42 = por %p40, %p41
    %p43 = scmp.ne.s32.totalorder %s29, %s30
    %p44 = scmp.eq.s32.totalorder %s22, 1
    %p45 = por %p43, %p44
    %p47 = scmp.ne.s32.totalorder %s30, %s46
    %p48 = scmp.eq.s32.totalorder %s22, 0
    %p49 = por %p47, %p48
    %s50 = ssub.s32 %s16, %s23
    %p51 = scmp.eq.s32.totalorder %s50, 0
    %s53 = sadd.s32 %s52, 1
    %s54 = scalar_select %p51, %s52, %s53
    %p57 = pneg %p51
    %p58 = scmp.eq.s32.totalorder %s16, 1
    %p59 = por %p57, %p58
    %p60 = scmp.ne.s32.totalorder %s52, %s55
    %p61 = scmp.eq.s32.totalorder %s16, 0
    %p62 = por %p60, %p61
    %p63 = scmp.ne.s32.totalorder %s52, %s55
    %p64 = scmp.eq.s32.totalorder %s21, 1
    %p65 = por %p63, %p64
    %p66 = scmp.ne.s32.totalorder %s55, %s56
    %p67 = scmp.eq.s32.totalorder %s21, 0
    %p68 = por %p66, %p67
    %p69 = scmp.ne.s32.totalorder %s55, %s56
    %p70 = scmp.eq.s32.totalorder %s22, 1
    %p71 = por %p69, %p70
    %p73 = scmp.ne.s32.totalorder %s56, %s72
    %p74 = scmp.eq.s32.totalorder %s22, 0
    %p75 = por %p73, %p74
    %s77 = sadd.s32 %s76, 1
    %p80 = scmp.eq.s32.totalorder %s16, 1
    %p81 = scmp.ne.s32.totalorder %s76, %s78
    %p82 = scmp.eq.s32.totalorder %s16, 0
    %p83 = por %p81, %p82
    %p84 = scmp.ne.s32.totalorder %s76, %s78
    %p85 = scmp.eq.s32.totalorder %s21, 1
    %p86 = por %p84, %p85
    %p87 = scmp.ne.s32.totalorder %s78, %s79
    %p88 = scmp.eq.s32.totalorder %s21, 0
    %p89 = por %p87, %p88
    %p90 = scmp.ne.s32.totalorder %s78, %s79
    %p91 = scmp.eq.s32.totalorder %s22, 1
    %p92 = por %p90, %p91
    %p94 = scmp.ne.s32.totalorder %s79, %s93
    %p95 = scmp.eq.s32.totalorder %s22, 0
    %p96 = por %p94, %p95
    %s98 = sadd.s32 %s97, 1
    %p101 = scmp.eq.s32.totalorder %s16, 1
    %p102 = scmp.ne.s32.totalorder %s97, %s99
    %p103 = scmp.eq.s32.totalorder %s16, 0
    %p104 = por %p102, %p103
    %p105 = scmp.ne.s32.totalorder %s97, %s99
    %p106 = scmp.eq.s32.totalorder %s21, 1
    %p107 = por %p105, %p106
    %p108 = scmp.ne.s32.totalorder %s99, %s100
    %p109 = scmp.eq.s32.totalorder %s21, 0
    %p110 = por %p108, %p109
    %p111 = scmp.ne.s32.totalorder %s99, %s100
    %p112 = scmp.eq.s32.totalorder %s22, 1
    %p113 = por %p111, %p112
    %p115 = scmp.ne.s32.totalorder %s100, %s114
    %p116 = scmp.eq.s32.totalorder %s22, 0
    %p117 = por %p115, %p116
    %s119 = sadd.s32 %s118, 1
    %p122 = scmp.eq.s32.totalorder %s16, 1
    %p123 = scmp.ne.s32.totalorder %s118, %s120
    %p124 = scmp.eq.s32.totalorder %s16, 0
    %p125 = por %p123, %p124
    %p126 = scmp.ne.s32.totalorder %s118, %s120
    %p127 = scmp.eq.s32.totalorder %s21, 1
    %p128 = por %p126, %p127
    %p129 = scmp.ne.s32.totalorder %s120, %s121
    %p130 = scmp.eq.s32.totalorder %s21, 0
    %p131 = por %p129, %p130
    %p132 = scmp.ne.s32.totalorder %s120, %s121
    %p133 = scmp.eq.s32.totalorder %s22, 1
    %p134 = por %p132, %p133
    %p136 = scmp.ne.s32.totalorder %s121, %s135
    %p137 = scmp.eq.s32.totalorder %s22, 0
    %p138 = por %p136, %p137
    %s140 = sadd.s32 %s139, 1
    %p143 = scmp.eq.s32.totalorder %s16, 1
    %p144 = scmp.ne.s32.totalorder %s139, %s141
    %p145 = scmp.eq.s32.totalorder %s16, 0
    %p146 = por %p144, %p145
    %p147 = scmp.ne.s32.totalorder %s139, %s141
    %p148 = scmp.eq.s32.totalorder %s21, 1
    %p149 = por %p147, %p148
    %p150 = scmp.ne.s32.totalorder %s141, %s142
    %p151 = scmp.eq.s32.totalorder %s21, 0
    %p152 = por %p150, %p151
    %p153 = scmp.ne.s32.totalorder %s141, %s142
    %p154 = scmp.eq.s32.totalorder %s22, 1
    %p155 = por %p153, %p154
    %p157 = scmp.ne.s32.totalorder %s142, %s156
    %p158 = scmp.eq.s32.totalorder %s22, 0
    %p159 = por %p157, %p158
    %s161 = sadd.s32 %s160, 1
    %p164 = scmp.eq.s32.totalorder %s16, 1
    %p165 = scmp.ne.s32.totalorder %s160, %s162
    %p166 = scmp.eq.s32.totalorder %s16, 0
    %p167 = por %p165, %p166
    %p168 = scmp.ne.s32.totalorder %s160, %s162
    %p169 = scmp.eq.s32.totalorder %s21, 1
    %p170 = por %p168, %p169
    %p171 = scmp.ne.s32.totalorder %s162, %s163
    %p172 = scmp.eq.s32.totalorder %s21, 0
    %p173 = por %p171, %p172
    %p174 = scmp.ne.s32.totalorder %s162, %s163
    %p175 = scmp.eq.s32.totalorder %s22, 1
    %p176 = por %p174, %p175
    %p178 = scmp.ne.s32.totalorder %s163, %s177
    %p179 = scmp.eq.s32.totalorder %s22, 0
    %p180 = por %p178, %p179
    %s182 = sadd.s32 %s181, 1
    %p185 = scmp.eq.s32.totalorder %s16, 1
    %p186 = scmp.ne.s32.totalorder %s181, %s183
    %p187 = scmp.eq.s32.totalorder %s16, 0
    %p188 = por %p186, %p187
    %p189 = scmp.ne.s32.totalorder %s181, %s183
    %p190 = scmp.eq.s32.totalorder %s21, 1
    %p191 = por %p189, %p190
    %p192 = scmp.ne.s32.totalorder %s183, %s184
    %p193 = scmp.eq.s32.totalorder %s21, 0
    %p194 = por %p192, %p193
    %p195 = scmp.ne.s32.totalorder %s183, %s184
    %p196 = scmp.eq.s32.totalorder %s22, 1
    %p197 = por %p195, %p196
    %p199 = scmp.ne.s32.totalorder %s184, %s198
    %p200 = scmp.eq.s32.totalorder %s22, 0
    %p201 = por %p199, %p200
    %s203 = sadd.s32 %s202, 1
    %p206 = scmp.eq.s32.totalorder %s16, 1
    %p207 = scmp.ne.s32.totalorder %s202, %s204
    %p208 = scmp.eq.s32.totalorder %s16, 0
    %p209 = por %p207, %p208
    %p210 = scmp.ne.s32.totalorder %s202, %s204
    %p211 = scmp.eq.s32.totalorder %s21, 1
    %p212 = por %p210, %p211
    %p213 = scmp.ne.s32.totalorder %s204, %s205
    %p214 = scmp.eq.s32.totalorder %s21, 0
    %p215 = por %p213, %p214
    %p216 = scmp.ne.s32.totalorder %s204, %s205
    %p217 = scmp.eq.s32.totalorder %s22, 1
    %p218 = por %p216, %p217
    %p220 = scmp.ne.s32.totalorder %s205, %s219
    %p221 = scmp.eq.s32.totalorder %s22, 0
    %p222 = por %p220, %p221
    %s224 = sadd.s32 %s223, 1
    %p227 = scmp.eq.s32.totalorder %s16, 1
    %p228 = scmp.ne.s32.totalorder %s223, %s225
    %p229 = scmp.eq.s32.totalorder %s16, 0
    %p230 = por %p228, %p229
    %p231 = scmp.ne.s32.totalorder %s223, %s225
    %p232 = scmp.eq.s32.totalorder %s21, 1
    %p233 = por %p231, %p232
    %p234 = scmp.ne.s32.totalorder %s225, %s226
    %p235 = scmp.eq.s32.totalorder %s21, 0
    %p236 = por %p234, %p235
    %p237 = scmp.ne.s32.totalorder %s225, %s226
    %p238 = scmp.eq.s32.totalorder %s22, 1
    %p239 = por %p237, %p238
    %p241 = scmp.ne.s32.totalorder %s226, %s240
    %p242 = scmp.eq.s32.totalorder %s22, 0
    %p243 = por %p241, %p242
    %s244 = ssub.s32 %s16, %s23
    %p245 = scmp.eq.s32.totalorder %s244, 0
    %s247 = sadd.s32 %s246, 1
    %s248 = scalar_select %p245, %s246, %s247
    %p251 = pneg %p245
    %p252 = scmp.eq.s32.totalorder %s16, 1
    %p253 = por %p251, %p252
    %p254 = scmp.ne.s32.totalorder %s246, %s249
    %p255 = scmp.eq.s32.totalorder %s16, 0
    %p256 = por %p254, %p255
    %p257 = scmp.ne.s32.totalorder %s246, %s249
    %p258 = scmp.eq.s32.totalorder %s21, 1
    %p259 = por %p257, %p258
    %p260 = scmp.ne.s32.totalorder %s249, %s250
    %p261 = scmp.eq.s32.totalorder %s21, 0
    %p262 = por %p260, %p261
    %p263 = scmp.ne.s32.totalorder %s249, %s250
    %p264 = scmp.eq.s32.totalorder %s22, 1
    %p265 = por %p263, %p264
    %p267 = scmp.ne.s32.totalorder %s250, %s266
    %p268 = scmp.eq.s32.totalorder %s22, 0
    %p269 = por %p267, %p268
    %p270 = scmp.le.s32.totalorder 1, %s16
    %p271 = scmp.lt.s32.totalorder %s16, 3
    %p272 = pnand %p270, %p271
    %p273 = pneg %p272
    // Predicated region
    $region9: #{up_forward.1} parent=5 // pred_check
      _
    $region10: #{up_forward.1} parent=5 // pred_check_branch
      %275 = sbr.rel (%p272) target = $region12
    $region11: #{up_forward.1} parent=5 // pred_region
      %s276 = ssub.s32 %s16, 1
      // Predicated region
      $region13: #{up_forward.1} parent=11 // pred_check
        %p277 = pneg %p89
      $region14: #{up_forward.1} parent=11 // pred_check_branch
        %279 = sbr.rel (%p277) target = $region16
      $region15: #{up_forward.1} parent=11 // pred_region
        _
      $region16: #{up_forward.1} parent=11 // pred_fallthru
        _
      // Predicated region
      $region17: #{up_forward.1} parent=11 // pred_check
        %p280 = pneg %p110
      $region18: #{up_forward.1} parent=11 // pred_check_branch
        %282 = sbr.rel (%p280) target = $region20
      $region19: #{up_forward.1} parent=11 // pred_region
        _
      $region20: #{up_forward.1} parent=11 // pred_fallthru
        _
      // Predicated region
      $region21: #{up_forward.1} parent=11 // pred_check
        %p283 = pneg %p131
      $region22: #{up_forward.1} parent=11 // pred_check_branch
        %285 = sbr.rel (%p283) target = $region24
      $region23: #{up_forward.1} parent=11 // pred_region
        _
      $region24: #{up_forward.1} parent=11 // pred_fallthru
        _
      // Predicated region
      $region25: #{up_forward.1} parent=11 // pred_check
        %p286 = pneg %p152
      $region26: #{up_forward.1} parent=11 // pred_check_branch
        %288 = sbr.rel (%p286) target = $region28
      $region27: #{up_forward.1} parent=11 // pred_region
        _
      $region28: #{up_forward.1} parent=11 // pred_fallthru
        _
      // Predicated region
      $region29: #{up_forward.1} parent=11 // pred_check
        %p289 = pneg %p173
      $region30: #{up_forward.1} parent=11 // pred_check_branch
        %291 = sbr.rel (%p289) target = $region32
      $region31: #{up_forward.1} parent=11 // pred_region
        _
      $region32: #{up_forward.1} parent=11 // pred_fallthru
        _
      // Predicated region
      $region33: #{up_forward.1} parent=11 // pred_check
        %p292 = pneg %p194
      $region34: #{up_forward.1} parent=11 // pred_check_branch
        %294 = sbr.rel (%p292) target = $region36
      $region35: #{up_forward.1} parent=11 // pred_region
        _
      $region36: #{up_forward.1} parent=11 // pred_fallthru
        _
      // Predicated region
      $region37: #{up_forward.1} parent=11 // pred_check
        %p295 = pneg %p215
      $region38: #{up_forward.1} parent=11 // pred_check_branch
        %297 = sbr.rel (%p295) target = $region40
      $region39: #{up_forward.1} parent=11 // pred_region
        _
      $region40: #{up_forward.1} parent=11 // pred_fallthru
        _
      // Predicated region
      $region41: #{up_forward.1} parent=11 // pred_check
        %p298 = pneg %p236
      $region42: #{up_forward.1} parent=11 // pred_check_branch
        %300 = sbr.rel (%p298) target = $region44
      $region43: #{up_forward.1} parent=11 // pred_region
        _
      $region44: #{up_forward.1} parent=11 // pred_fallthru
        _
    $region12: #{up_forward.1} parent=5 // pred_fallthru
      _
    %p301 = scmp.lt.s32.totalorder %s16, 2
    // Predicated region
    $region45: #{up_forward.1} parent=5 // pred_check
      %p302 = pneg %p301
    $region46: #{up_forward.1} parent=5 // pred_check_branch
      %304 = sbr.rel (%p302) target = $region48
    $region47: #{up_forward.1} parent=5 // pred_region
      // Predicated region
      $region49: #{up_forward.1} parent=47 // pred_check
        %p305 = pneg %p36
      $region50: #{up_forward.1} parent=47 // pred_check_branch
        %307 = sbr.rel (%p305) target = $region52
      $region51: #{up_forward.1} parent=47 // pred_region
        %p308 = scmp.lt.s32.totalorder %s16, 1
        %s309 = scalar_select %p308, %s16, 1
        %s310 = smul.addr %s309, 8
        %s311 = smul.addr %s310, 8
        %s312 = scalar_lea.vmem %s0, %s311
      $region52: #{up_forward.1} parent=47 // pred_fallthru
        _
      // Predicated region
      $region53: #{up_forward.1} parent=47 // pred_check
        %p313 = pneg %p62
      $region54: #{up_forward.1} parent=47 // pred_check_branch
        %315 = sbr.rel (%p313) target = $region56
      $region55: #{up_forward.1} parent=47 // pred_region
        %p316 = scmp.lt.s32.totalorder %s16, 1
        %s317 = scalar_select %p316, %s16, 1
        %s318 = smul.addr %s317, 2
        %s319 = smul.addr %s318, 8
        %s320 = scalar_lea.vmem %s1, %s319
      $region56: #{up_forward.1} parent=47 // pred_fallthru
        _
    $region48: #{up_forward.1} parent=5 // pred_fallthru
      _
    %p321 = scmp.le.s32.totalorder 1, %s16
    %p322 = scmp.lt.s32.totalorder %s16, 3
    %p323 = pnand %p321, %p322
    %p324 = pneg %p323
    // Predicated region
    $region57: #{up_forward.1} parent=5 // pred_check
      _
    $region58: #{up_forward.1} parent=5 // pred_check_branch
      %326 = sbr.rel (%p323) target = $region60
    $region59: #{up_forward.1} parent=5 // pred_region
      %s327 = ssub.s32 %s16, 1
      %p328 = scmp.lt.s32.totalorder %s21, 1
      %s329 = scalar_select %p328, %s21, 1
      %s330 = smul.addr %s329, 8
      %s331 = smul.addr %s330, 8
      %s332 = scalar_lea.vmem %s0, %s331
      %p333 = pneg %p42
      %p334 = pneg %p39
      %p335 = scmp.lt.s32.totalorder %s21, 1
      %s336 = scalar_select %p335, %s21, 1
      %s337 = smul.addr %s336, 2
      %s338 = smul.addr %s337, 8
      %s339 = scalar_lea.vmem %s1, %s338
      %p340 = pneg %p68
      %p341 = pneg %p65
      %p342 = pneg %p89
      %p343 = pneg %p86
      %p344 = pneg %p110
      %p345 = pneg %p107
      %p346 = pneg %p131
      %p347 = pneg %p128
      %p348 = pneg %p152
      %p349 = pneg %p149
      %p350 = pneg %p173
      %p351 = pneg %p170
      %p352 = pneg %p194
      %p353 = pneg %p191
      %p354 = pneg %p215
      %p355 = pneg %p212
      %p356 = pneg %p236
      %p357 = pneg %p233
      %p358 = pneg %p262
      %p359 = pneg %p259
      %p360 = scmp.lt.s32.totalorder %s21, 1
      %s361 = scalar_select %p360, %s21, 1
      %s362 = smul.addr %s361, 4
      %s363 = smul.addr %s362, 8
      %s364 = scalar_lea.vmem %s10, %s363
      %p365 = scmp.lt.s32.totalorder %s21, 1
      %s366 = scalar_select %p365, %s21, 1
      %s367 = smul.addr %s366, 8
      %s368 = smul.addr %s367, 8
      %s369 = scalar_lea.vmem %s0, %s368
      %p370 = scmp.lt.s32.totalorder %s21, 1
      %s371 = scalar_select %p370, %s21, 1
      %s372 = smul.addr %s371, 2
      %s373 = smul.addr %s372, 8
      %s374 = scalar_lea.vmem %s1, %s373
      %p375 = scmp.lt.s32.totalorder %s21, 1
      %s376 = scalar_select %p375, %s21, 1
      %s377 = smul.addr %s376, 4
      %s378 = smul.addr %s377, 8
      %s379 = scalar_lea.vmem %s10, %s378
      %v380 = vld [vmem:[%s374] sm:$0xff]
      %v381 = vld [vmem:[%s374 + $0x8] sm:$0xff]
      %382 = vst [vmem:[#allocation2 + $0x8] sm:$0xff] %v380
      %383 = vst [vmem:[#allocation2 + $0x10] sm:$0xff] %v381
      %v384 = vld [vmem:[%s369] sm:$0xff]
      %v385 = vld [vmem:[%s369 + $0x8] sm:$0xff]
      %v386 = vld [vmem:[%s369 + $0x10] sm:$0xff]
      %v387 = vld [vmem:[%s369 + $0x18] sm:$0xff]
      %v388 = vld [vmem:[%s369 + $0x20] sm:$0xff]
      %v389 = vld [vmem:[%s369 + $0x28] sm:$0xff]
      %v390 = vld [vmem:[%s369 + $0x30] sm:$0xff]
      %v391 = vld [vmem:[%s369 + $0x38] sm:$0xff]
      %v392 = vld [vmem:[%s2] sm:$0xff]
      %vm393 = vcmask 64512
      %v395 = vsel %vm393, %v384, 0
      %v398 = vsel %vm393, %v385, 0
      %v401 = vsel %vm393, %v386, 0
      %v404 = vsel %vm393, %v387, 0
      %v407 = vsel %vm393, %v388, 0
      %v410 = vsel %vm393, %v389, 0
      %v413 = vsel %vm393, %v390, 0
      %v416 = vsel %vm393, %v391, 0
      %418 = vmatpush.msra.mxu0 0.0
      %419 = vmatpush.msra.mxu0 0.0
      %420 = vmatpush.msra.mxu0 0.0
      %421 = vmatpush.msra.mxu0 0.0
      %422 = vmatpush.msra.mxu0 0.0
      %423 = vmatpush.msra.mxu0 0.0
      %424 = vmatpush.msra.mxu0 0.0
      %425 = vmatpush.msra.mxu0 0.0
      %426 = vmatpush.msra.mxu0 0.0
      %427 = vmatpush.msra.mxu0 0.0
      %428 = vmatpush.msra.mxu0 0.0
      %429 = vmatpush.msra.mxu0 0.0
      %430 = vmatpush.msra.mxu0 0.0
      %431 = vmatpush.msra.mxu0 0.0
      %432 = vmatpush.msra.mxu0 0.0
      %433 = vmatpush.msra.mxu0 %v392
      %434 = vmatmul.f32.gmra.mxu0 %v395
      %v435 = vpop.f32.mrf.mxu0
      %v436 = vadd.f32 0.0, %v435
      %437 = vmatmul.f32.gmra.mxu0 %v398
      %v438 = vpop.f32.mrf.mxu0
      %v439 = vadd.f32 0.0, %v438
      %440 = vmatmul.f32.gmra.mxu0 %v401
      %v441 = vpop.f32.mrf.mxu0
      %v442 = vadd.f32 0.0, %v441
      %443 = vmatmul.f32.gmra.mxu0 %v404
      %v444 = vpop.f32.mrf.mxu0
      %v445 = vadd.f32 0.0, %v444
      %446 = vmatmul.f32.gmra.mxu0 %v407
      %v447 = vpop.f32.mrf.mxu0
      %v448 = vadd.f32 0.0, %v447
      %449 = vmatmul.f32.gmra.mxu0 %v410
      %v450 = vpop.f32.mrf.mxu0
      %v451 = vadd.f32 0.0, %v450
      %452 = vmatmul.f32.gmra.mxu0 %v413
      %v453 = vpop.f32.mrf.mxu0
      %v454 = vadd.f32 0.0, %v453
      %455 = vmatmul.f32.gmra.mxu0 %v416
      %v456 = vpop.f32.mrf.mxu0
      %v457 = vadd.f32 0.0, %v456
      %458 = vdwg.mxu0
      %v467 = vrot.slane %v439, 7
      %vm468 = vcmask 1041409
      %v469 = vsel %vm468, %v467, %v436
      %v470 = vrot.slane %v442, 6
      %vm471 = vcmask 1042434
      %v472 = vsel %vm471, %v470, %v469
      %v473 = vrot.slane %v445, 5
      %vm474 = vcmask 1043459
      %v475 = vsel %vm474, %v473, %v472
      %v476 = vrot.slane %v448, 4
      %vm477 = vcmask 1044484
      %v478 = vsel %vm477, %v476, %v475
      %v479 = vrot.slane %v451, 3
      %vm480 = vcmask 1045509
      %v481 = vsel %vm480, %v479, %v478
      %v482 = vrot.slane %v454, 2
      %vm483 = vcmask 1046534
      %v484 = vsel %vm483, %v482, %v481
      %v485 = vrot.slane %v457, 1
      %vm486 = vcmask 1047559
      %v487 = vsel %vm486, %v485, %v484
      %vm489 = vcmask 130048
      %490 = vst.msk [vmem:[#allocation2 + $0x28] sm:$0xff] %vm489, %v487
      %v491 = vmul.f32 %v436, 0.5333333
      %v492 = vmul.f32 %v439, 0.5333333
      %v493 = vmul.f32 %v442, 0.5333333
      %v494 = vmul.f32 %v445, 0.5333333
      %v495 = vmul.f32 %v448, 0.5333333
      %v496 = vmul.f32 %v451, 0.5333333
      %v497 = vmul.f32 %v454, 0.5333333
      %v498 = vmul.f32 %v457, 0.5333333
      %v499 = vmul.f32 %v436, 0.46666667
      %v500 = vmul.f32 %v439, 0.46666667
      %v501 = vmul.f32 %v442, 0.46666667
      %v502 = vmul.f32 %v445, 0.46666667
      %v503 = vmul.f32 %v448, 0.46666667
      %v504 = vmul.f32 %v451, 0.46666667
      %v505 = vmul.f32 %v454, 0.46666667
      %v506 = vmul.f32 %v457, 0.46666667
      %v515 = vrot.slane %v499, 1
      %v516 = vrot.slane %v500, 1
      %v517 = vrot.slane %v501, 1
      %v518 = vrot.slane %v502, 1
      %v519 = vrot.slane %v503, 1
      %v520 = vrot.slane %v504, 1
      %v521 = vrot.slane %v505, 1
      %v522 = vrot.slane %v506, 1
      %v531 = vadd.f32 %v491, %v515
      %v532 = vadd.f32 %v492, %v516
      %v533 = vadd.f32 %v493, %v517
      %v534 = vadd.f32 %v494, %v518
      %v535 = vadd.f32 %v495, %v519
      %v536 = vadd.f32 %v496, %v520
      %v537 = vadd.f32 %v497, %v521
      %v538 = vadd.f32 %v498, %v522
      %v547 = vrot.slane %v532, 7
      %v548 = vsel %vm468, %v547, %v531
      %v549 = vrot.slane %v533, 6
      %v550 = vsel %vm471, %v549, %v548
      %v551 = vrot.slane %v534, 5
      %v552 = vsel %vm474, %v551, %v550
      %v553 = vrot.slane %v535, 4
      %v554 = vsel %vm477, %v553, %v552
      %v555 = vrot.slane %v536, 3
      %v556 = vsel %vm480, %v555, %v554
      %v557 = vrot.slane %v537, 2
      %v558 = vsel %vm483, %v557, %v556
      %v559 = vrot.slane %v538, 1
      %v560 = vsel %vm486, %v559, %v558
      %561 = vrot.lane.b32.xlu0 %v560, 16
      %v562 = vpop.permute.xlu0 %561
      %vm564 = vcmask 261248
      %565 = vst.msk [vmem:[#allocation2 + $0x28] sm:$0xff] %vm564, %v562
      %v566 = vmul.f32 %v436, 0.06666666
      %v567 = vmul.f32 %v439, 0.06666666
      %v568 = vmul.f32 %v442, 0.06666666
      %v569 = vmul.f32 %v445, 0.06666666
      %v570 = vmul.f32 %v448, 0.06666666
      %v571 = vmul.f32 %v451, 0.06666666
      %v572 = vmul.f32 %v454, 0.06666666
      %v573 = vmul.f32 %v457, 0.06666666
      %v574 = vmul.f32 %v436, 0.93333334
      %v575 = vmul.f32 %v439, 0.93333334
      %v576 = vmul.f32 %v442, 0.93333334
      %v577 = vmul.f32 %v445, 0.93333334
      %v578 = vmul.f32 %v448, 0.93333334
      %v579 = vmul.f32 %v451, 0.93333334
      %v580 = vmul.f32 %v454, 0.93333334
      %v581 = vmul.f32 %v457, 0.93333334
      %v590 = vrot.slane %v574, 1
      %v591 = vrot.slane %v575, 1
      %v592 = vrot.slane %v576, 1
      %v593 = vrot.slane %v577, 1
      %v594 = vrot.slane %v578, 1
      %v595 = vrot.slane %v579, 1
      %v596 = vrot.slane %v580, 1
      %v597 = vrot.slane %v581, 1
      %v606 = vadd.f32 %v566, %v590
      %v607 = vadd.f32 %v567, %v591
      %v608 = vadd.f32 %v568, %v592
      %v609 = vadd.f32 %v569, %v593
      %v610 = vadd.f32 %v570, %v594
      %v611 = vadd.f32 %v571, %v595
      %v612 = vadd.f32 %v572, %v596
      %v613 = vadd.f32 %v573, %v597
      %v622 = vrot.slane %v607, 7
      %v623 = vsel %vm468, %v622, %v606
      %v624 = vrot.slane %v608, 6
      %v625 = vsel %vm471, %v624, %v623
      %v626 = vrot.slane %v609, 5
      %v627 = vsel %vm474, %v626, %v625
      %v628 = vrot.slane %v610, 4
      %v629 = vsel %vm477, %v628, %v627
      %v630 = vrot.slane %v611, 3
      %v631 = vsel %vm480, %v630, %v629
      %v632 = vrot.slane %v612, 2
      %v633 = vsel %vm483, %v632, %v631
      %v634 = vrot.slane %v613, 1
      %v635 = vsel %vm486, %v634, %v633
      %636 = vrot.lane.b32.xlu0 %v635, 32
      %v637 = vpop.permute.xlu0 %636
      %vm639 = vcmask 392448
      %640 = vst.msk [vmem:[#allocation2 + $0x28] sm:$0xff] %vm639, %v637
      %v641 = vmul.f32 %v436, 0.6
      %v642 = vmul.f32 %v439, 0.6
      %v643 = vmul.f32 %v442, 0.6
      %v644 = vmul.f32 %v445, 0.6
      %v645 = vmul.f32 %v448, 0.6
      %v646 = vmul.f32 %v451, 0.6
      %v647 = vmul.f32 %v454, 0.6
      %v648 = vmul.f32 %v457, 0.6
      %v649 = vmul.f32 %v436, 0.39999998
      %v650 = vmul.f32 %v439, 0.39999998
      %v651 = vmul.f32 %v442, 0.39999998
      %v652 = vmul.f32 %v445, 0.39999998
      %v653 = vmul.f32 %v448, 0.39999998
      %v654 = vmul.f32 %v451, 0.39999998
      %v655 = vmul.f32 %v454, 0.39999998
      %v656 = vmul.f32 %v457, 0.39999998
      %v665 = vrot.slane %v649, 1
      %v666 = vrot.slane %v650, 1
      %v667 = vrot.slane %v651, 1
      %v668 = vrot.slane %v652, 1
      %v669 = vrot.slane %v653, 1
      %v670 = vrot.slane %v654, 1
      %v671 = vrot.slane %v655, 1
      %v672 = vrot.slane %v656, 1
      %v681 = vadd.f32 %v641, %v665
      %v682 = vadd.f32 %v642, %v666
      %v683 = vadd.f32 %v643, %v667
      %v684 = vadd.f32 %v644, %v668
      %v685 = vadd.f32 %v645, %v669
      %v686 = vadd.f32 %v646, %v670
      %v687 = vadd.f32 %v647, %v671
      %v688 = vadd.f32 %v648, %v672
      %v697 = vrot.slane %v681, 1
      %v698 = vsel %vm468, %v682, %v697
      %v699 = vrot.slane %v683, 7
      %v700 = vsel %vm471, %v699, %v698
      %v701 = vrot.slane %v684, 6
      %v702 = vsel %vm474, %v701, %v700
      %v703 = vrot.slane %v685, 5
      %v704 = vsel %vm477, %v703, %v702
      %v705 = vrot.slane %v686, 4
      %v706 = vsel %vm480, %v705, %v704
      %v707 = vrot.slane %v687, 3
      %v708 = vsel %vm483, %v707, %v706
      %v709 = vrot.slane %v688, 2
      %v710 = vsel %vm486, %v709, %v708
      %711 = vrot.lane.b32.xlu0 %v710, 48
      %v712 = vpop.permute.xlu0 %711
      %vm714 = vcmask 523648
      %715 = vst.msk [vmem:[#allocation2 + $0x28] sm:$0xff] %vm714, %v712
      %v716 = vmul.f32 %v436, 0.13333333
      %v717 = vmul.f32 %v439, 0.13333333
      %v718 = vmul.f32 %v442, 0.13333333
      %v719 = vmul.f32 %v445, 0.13333333
      %v720 = vmul.f32 %v448, 0.13333333
      %v721 = vmul.f32 %v451, 0.13333333
      %v722 = vmul.f32 %v454, 0.13333333
      %v723 = vmul.f32 %v457, 0.13333333
      %v724 = vmul.f32 %v436, 0.8666667
      %v725 = vmul.f32 %v439, 0.8666667
      %v726 = vmul.f32 %v442, 0.8666667
      %v727 = vmul.f32 %v445, 0.8666667
      %v728 = vmul.f32 %v448, 0.8666667
      %v729 = vmul.f32 %v451, 0.8666667
      %v730 = vmul.f32 %v454, 0.8666667
      %v731 = vmul.f32 %v457, 0.8666667
      %v740 = vrot.slane %v724, 1
      %v741 = vrot.slane %v725, 1
      %v742 = vrot.slane %v726, 1
      %v743 = vrot.slane %v727, 1
      %v744 = vrot.slane %v728, 1
      %v745 = vrot.slane %v729, 1
      %v746 = vrot.slane %v730, 1
      %v747 = vrot.slane %v731, 1
      %v756 = vadd.f32 %v716, %v740
      %v757 = vadd.f32 %v717, %v741
      %v758 = vadd.f32 %v718, %v742
      %v759 = vadd.f32 %v719, %v743
      %v760 = vadd.f32 %v720, %v744
      %v761 = vadd.f32 %v721, %v745
      %v762 = vadd.f32 %v722, %v746
      %v763 = vadd.f32 %v723, %v747
      %v772 = vrot.slane %v756, 1
      %v773 = vsel %vm468, %v757, %v772
      %v774 = vrot.slane %v758, 7
      %v775 = vsel %vm471, %v774, %v773
      %v776 = vrot.slane %v759, 6
      %v777 = vsel %vm474, %v776, %v775
      %v778 = vrot.slane %v760, 5
      %v779 = vsel %vm477, %v778, %v777
      %v780 = vrot.slane %v761, 4
      %v781 = vsel %vm480, %v780, %v779
      %v782 = vrot.slane %v762, 3
      %v783 = vsel %vm483, %v782, %v781
      %v784 = vrot.slane %v763, 2
      %v785 = vsel %vm486, %v784, %v783
      %786 = vrot.lane.b32.xlu0 %v785, 64
      %v787 = vpop.permute.xlu0 %786
      %vm789 = vcmask 654848
      %790 = vst.msk [vmem:[#allocation2 + $0x28] sm:$0xff] %vm789, %v787
      %v791 = vmul.f32 %v436, 0.66666675
      %v792 = vmul.f32 %v439, 0.66666675
      %v793 = vmul.f32 %v442, 0.66666675
      %v794 = vmul.f32 %v445, 0.66666675
      %v795 = vmul.f32 %v448, 0.66666675
      %v796 = vmul.f32 %v451, 0.66666675
      %v797 = vmul.f32 %v454, 0.66666675
      %v798 = vmul.f32 %v457, 0.66666675
      %v799 = vmul.f32 %v436, 0.33333325
      %v800 = vmul.f32 %v439, 0.33333325
      %v801 = vmul.f32 %v442, 0.33333325
      %v802 = vmul.f32 %v445, 0.33333325
      %v803 = vmul.f32 %v448, 0.33333325
      %v804 = vmul.f32 %v451, 0.33333325
      %v805 = vmul.f32 %v454, 0.33333325
      %v806 = vmul.f32 %v457, 0.33333325
      %v815 = vrot.slane %v799, 1
      %v816 = vrot.slane %v800, 1
      %v817 = vrot.slane %v801, 1
      %v818 = vrot.slane %v802, 1
      %v819 = vrot.slane %v803, 1
      %v820 = vrot.slane %v804, 1
      %v821 = vrot.slane %v805, 1
      %v822 = vrot.slane %v806, 1
      %v831 = vadd.f32 %v791, %v815
      %v832 = vadd.f32 %v792, %v816
      %v833 = vadd.f32 %v793, %v817
      %v834 = vadd.f32 %v794, %v818
      %v835 = vadd.f32 %v795, %v819
      %v836 = vadd.f32 %v796, %v820
      %v837 = vadd.f32 %v797, %v821
      %v838 = vadd.f32 %v798, %v822
      %v847 = vrot.slane %v831, 2
      %v848 = vrot.slane %v832, 1
      %v849 = vsel %vm468, %v848, %v847
      %v850 = vsel %vm471, %v833, %v849
      %v851 = vrot.slane %v834, 7
      %v852 = vsel %vm474, %v851, %v850
      %v853 = vrot.slane %v835, 6
      %v854 = vsel %vm477, %v853, %v852
      %v855 = vrot.slane %v836, 5
      %v856 = vsel %vm480, %v855, %v854
      %v857 = vrot.slane %v837, 4
      %v858 = vsel %vm483, %v857, %v856
      %v859 = vrot.slane %v838, 3
      %v860 = vsel %vm486, %v859, %v858
      %861 = vrot.lane.b32.xlu0 %v860, 80
      %v862 = vpop.permute.xlu0 %861
      %vm864 = vcmask 786048
      %865 = vst.msk [vmem:[#allocation2 + $0x28] sm:$0xff] %vm864, %v862
      %v866 = vmul.f32 %v436, 0.20000005
      %v867 = vmul.f32 %v439, 0.20000005
      %v868 = vmul.f32 %v442, 0.20000005
      %v869 = vmul.f32 %v445, 0.20000005
      %v870 = vmul.f32 %v448, 0.20000005
      %v871 = vmul.f32 %v451, 0.20000005
      %v872 = vmul.f32 %v454, 0.20000005
      %v873 = vmul.f32 %v457, 0.20000005
      %v874 = vmul.f32 %v436, 0.79999995
      %v875 = vmul.f32 %v439, 0.79999995
      %v876 = vmul.f32 %v442, 0.79999995
      %v877 = vmul.f32 %v445, 0.79999995
      %v878 = vmul.f32 %v448, 0.79999995
      %v879 = vmul.f32 %v451, 0.79999995
      %v880 = vmul.f32 %v454, 0.79999995
      %v881 = vmul.f32 %v457, 0.79999995
      %v890 = vrot.slane %v874, 1
      %v891 = vrot.slane %v875, 1
      %v892 = vrot.slane %v876, 1
      %v893 = vrot.slane %v877, 1
      %v894 = vrot.slane %v878, 1
      %v895 = vrot.slane %v879, 1
      %v896 = vrot.slane %v880, 1
      %v897 = vrot.slane %v881, 1
      %v906 = vadd.f32 %v866, %v890
      %v907 = vadd.f32 %v867, %v891
      %v908 = vadd.f32 %v868, %v892
      %v909 = vadd.f32 %v869, %v893
      %v910 = vadd.f32 %v870, %v894
      %v911 = vadd.f32 %v871, %v895
      %v912 = vadd.f32 %v872, %v896
      %v913 = vadd.f32 %v873, %v897
      %v922 = vrot.slane %v906, 2
      %v923 = vrot.slane %v907, 1
      %v924 = vsel %vm468, %v923, %v922
      %v925 = vsel %vm471, %v908, %v924
      %v926 = vrot.slane %v909, 7
      %v927 = vsel %vm474, %v926, %v925
      %v928 = vrot.slane %v910, 6
      %v929 = vsel %vm477, %v928, %v927
      %v930 = vrot.slane %v911, 5
      %v931 = vsel %vm480, %v930, %v929
      %v932 = vrot.slane %v912, 4
      %v933 = vsel %vm483, %v932, %v931
      %v934 = vrot.slane %v913, 3
      %v935 = vsel %vm486, %v934, %v933
      %936 = vrot.lane.b32.xlu0 %v935, 96
      %v937 = vpop.permute.xlu0 %936
      %vm939 = vcmask 917248
      %940 = vst.msk [vmem:[#allocation2 + $0x28] sm:$0xff] %vm939, %v937
      %v941 = vmul.f32 %v436, 0.73333335
      %v942 = vmul.f32 %v439, 0.73333335
      %v943 = vmul.f32 %v442, 0.73333335
      %v944 = vmul.f32 %v445, 0.73333335
      %v945 = vmul.f32 %v448, 0.73333335
      %v946 = vmul.f32 %v451, 0.73333335
      %v947 = vmul.f32 %v454, 0.73333335
      %v948 = vmul.f32 %v457, 0.73333335
      %v949 = vmul.f32 %v436, 0.26666665
      %v950 = vmul.f32 %v439, 0.26666665
      %v951 = vmul.f32 %v442, 0.26666665
      %v952 = vmul.f32 %v445, 0.26666665
      %v953 = vmul.f32 %v448, 0.26666665
      %v954 = vmul.f32 %v451, 0.26666665
      %v955 = vmul.f32 %v454, 0.26666665
      %v956 = vmul.f32 %v457, 0.26666665
      %v965 = vrot.slane %v949, 1
      %v966 = vrot.slane %v950, 1
      %v967 = vrot.slane %v951, 1
      %v968 = vrot.slane %v952, 1
      %v969 = vrot.slane %v953, 1
      %v970 = vrot.slane %v954, 1
      %v971 = vrot.slane %v955, 1
      %v972 = vrot.slane %v956, 1
      %v981 = vadd.f32 %v941, %v965
      %v982 = vadd.f32 %v942, %v966
      %v983 = vadd.f32 %v943, %v967
      %v984 = vadd.f32 %v944, %v968
      %v985 = vadd.f32 %v945, %v969
      %v986 = vadd.f32 %v946, %v970
      %v987 = vadd.f32 %v947, %v971
      %v988 = vadd.f32 %v948, %v972
      %v997 = vrot.slane %v981, 3
      %v998 = vrot.slane %v982, 2
      %v999 = vsel %vm468, %v998, %v997
      %v1000 = vrot.slane %v983, 1
      %v1001 = vsel %vm471, %v1000, %v999
      %v1002 = vsel %vm474, %v984, %v1001
      %v1003 = vrot.slane %v985, 7
      %v1004 = vsel %vm477, %v1003, %v1002
      %v1005 = vrot.slane %v986, 6
      %v1006 = vsel %vm480, %v1005, %v1004
      %v1007 = vrot.slane %v987, 5
      %v1008 = vsel %vm483, %v1007, %v1006
      %v1009 = vrot.slane %v988, 4
      %v1010 = vsel %vm486, %v1009, %v1008
      %1011 = vrot.lane.b32.xlu0 %v1010, 112
      %v1012 = vpop.permute.xlu0 %1011
      %vm1014 = vcmask 1048448
      %1015 = vst.msk [vmem:[#allocation2 + $0x28] sm:$0xff] %vm1014, %v1012
      %v1024 = vrot.slane %v941, 1
      %v1025 = vrot.slane %v942, 1
      %v1026 = vrot.slane %v943, 1
      %v1027 = vrot.slane %v944, 1
      %v1028 = vrot.slane %v945, 1
      %v1029 = vrot.slane %v946, 1
      %v1030 = vrot.slane %v947, 1
      %v1031 = vrot.slane %v948, 1
      %v1040 = vadd.f32 %v949, %v1024
      %v1041 = vadd.f32 %v950, %v1025
      %v1042 = vadd.f32 %v951, %v1026
      %v1043 = vadd.f32 %v952, %v1027
      %v1044 = vadd.f32 %v953, %v1028
      %v1045 = vadd.f32 %v954, %v1029
      %v1046 = vadd.f32 %v955, %v1030
      %v1047 = vadd.f32 %v956, %v1031
      %v1056 = vrot.slane %v1040, 3
      %v1057 = vrot.slane %v1041, 2
      %v1058 = vsel %vm468, %v1057, %v1056
      %v1059 = vrot.slane %v1042, 1
      %v1060 = vsel %vm471, %v1059, %v1058
      %v1061 = vsel %vm474, %v1043, %v1060
      %v1062 = vrot.slane %v1044, 7
      %v1063 = vsel %vm477, %v1062, %v1061
      %v1064 = vrot.slane %v1045, 6
      %v1065 = vsel %vm480, %v1064, %v1063
      %v1066 = vrot.slane %v1046, 5
      %v1067 = vsel %vm483, %v1066, %v1065
      %v1068 = vrot.slane %v1047, 4
      %v1069 = vsel %vm486, %v1068, %v1067
      %1071 = vst.msk [vmem:[#allocation2 + $0x30] sm:$0xff] %vm489, %v1069
      %v1072 = vmul.f32 %v436, 0.8000002
      %v1073 = vmul.f32 %v439, 0.8000002
      %v1074 = vmul.f32 %v442, 0.8000002
      %v1075 = vmul.f32 %v445, 0.8000002
      %v1076 = vmul.f32 %v448, 0.8000002
      %v1077 = vmul.f32 %v451, 0.8000002
      %v1078 = vmul.f32 %v454, 0.8000002
      %v1079 = vmul.f32 %v457, 0.8000002
      %v1080 = vmul.f32 %v436, 0.19999981
      %v1081 = vmul.f32 %v439, 0.19999981
      %v1082 = vmul.f32 %v442, 0.19999981
      %v1083 = vmul.f32 %v445, 0.19999981
      %v1084 = vmul.f32 %v448, 0.19999981
      %v1085 = vmul.f32 %v451, 0.19999981
      %v1086 = vmul.f32 %v454, 0.19999981
      %v1087 = vmul.f32 %v457, 0.19999981
      %v1096 = vrot.slane %v1080, 1
      %v1097 = vrot.slane %v1081, 1
      %v1098 = vrot.slane %v1082, 1
      %v1099 = vrot.slane %v1083, 1
      %v1100 = vrot.slane %v1084, 1
      %v1101 = vrot.slane %v1085, 1
      %v1102 = vrot.slane %v1086, 1
      %v1103 = vrot.slane %v1087, 1
      %v1112 = vadd.f32 %v1072, %v1096
      %v1113 = vadd.f32 %v1073, %v1097
      %v1114 = vadd.f32 %v1074, %v1098
      %v1115 = vadd.f32 %v1075, %v1099
      %v1116 = vadd.f32 %v1076, %v1100
      %v1117 = vadd.f32 %v1077, %v1101
      %v1118 = vadd.f32 %v1078, %v1102
      %v1119 = vadd.f32 %v1079, %v1103
      %v1128 = vrot.slane %v1112, 4
      %v1129 = vrot.slane %v1113, 3
      %v1130 = vsel %vm468, %v1129, %v1128
      %v1131 = vrot.slane %v1114, 2
      %v1132 = vsel %vm471, %v1131, %v1130
      %v1133 = vrot.slane %v1115, 1
      %v1134 = vsel %vm474, %v1133, %v1132
      %v1135 = vsel %vm477, %v1116, %v1134
      %v1136 = vrot.slane %v1117, 7
      %v1137 = vsel %vm480, %v1136, %v1135
      %v1138 = vrot.slane %v1118, 6
      %v1139 = vsel %vm483, %v1138, %v1137
      %v1140 = vrot.slane %v1119, 5
      %v1141 = vsel %vm486, %v1140, %v1139
      %1142 = vrot.lane.b32.xlu0 %v1141, 16
      %v1143 = vpop.permute.xlu0 %1142
      %1145 = vst.msk [vmem:[#allocation2 + $0x30] sm:$0xff] %vm564, %v1143
      %v1146 = vmul.f32 %v436, 0.3333335
      %v1147 = vmul.f32 %v439, 0.3333335
      %v1148 = vmul.f32 %v442, 0.3333335
      %v1149 = vmul.f32 %v445, 0.3333335
      %v1150 = vmul.f32 %v448, 0.3333335
      %v1151 = vmul.f32 %v451, 0.3333335
      %v1152 = vmul.f32 %v454, 0.3333335
      %v1153 = vmul.f32 %v457, 0.3333335
      %v1154 = vmul.f32 %v436, 0.6666665
      %v1155 = vmul.f32 %v439, 0.6666665
      %v1156 = vmul.f32 %v442, 0.6666665
      %v1157 = vmul.f32 %v445, 0.6666665
      %v1158 = vmul.f32 %v448, 0.6666665
      %v1159 = vmul.f32 %v451, 0.6666665
      %v1160 = vmul.f32 %v454, 0.6666665
      %v1161 = vmul.f32 %v457, 0.6666665
      %v1170 = vrot.slane %v1154, 1
      %v1171 = vrot.slane %v1155, 1
      %v1172 = vrot.slane %v1156, 1
      %v1173 = vrot.slane %v1157, 1
      %v1174 = vrot.slane %v1158, 1
      %v1175 = vrot.slane %v1159, 1
      %v1176 = vrot.slane %v1160, 1
      %v1177 = vrot.slane %v1161, 1
      %v1186 = vadd.f32 %v1146, %v1170
      %v1187 = vadd.f32 %v1147, %v1171
      %v1188 = vadd.f32 %v1148, %v1172
      %v1189 = vadd.f32 %v1149, %v1173
      %v1190 = vadd.f32 %v1150, %v1174
      %v1191 = vadd.f32 %v1151, %v1175
      %v1192 = vadd.f32 %v1152, %v1176
      %v1193 = vadd.f32 %v1153, %v1177
      %v1202 = vrot.slane %v1186, 4
      %v1203 = vrot.slane %v1187, 3
      %v1204 = vsel %vm468, %v1203, %v1202
      %v1205 = vrot.slane %v1188, 2
      %v1206 = vsel %vm471, %v1205, %v1204
      %v1207 = vrot.slane %v1189, 1
      %v1208 = vsel %vm474, %v1207, %v1206
      %v1209 = vsel %vm477, %v1190, %v1208
      %v1210 = vrot.slane %v1191, 7
      %v1211 = vsel %vm480, %v1210, %v1209
      %v1212 = vrot.slane %v1192, 6
      %v1213 = vsel %vm483, %v1212, %v1211
      %v1214 = vrot.slane %v1193, 5
      %v1215 = vsel %vm486, %v1214, %v1213
      %1216 = vrot.lane.b32.xlu0 %v1215, 32
      %v1217 = vpop.permute.xlu0 %1216
      %1219 = vst.msk [vmem:[#allocation2 + $0x30] sm:$0xff] %vm639, %v1217
      %v1220 = vmul.f32 %v436, 0.8666668
      %v1221 = vmul.f32 %v439, 0.8666668
      %v1222 = vmul.f32 %v442, 0.8666668
      %v1223 = vmul.f32 %v445, 0.8666668
      %v1224 = vmul.f32 %v448, 0.8666668
      %v1225 = vmul.f32 %v451, 0.8666668
      %v1226 = vmul.f32 %v454, 0.8666668
      %v1227 = vmul.f32 %v457, 0.8666668
      %v1228 = vmul.f32 %v436, 0.1333332
      %v1229 = vmul.f32 %v439, 0.1333332
      %v1230 = vmul.f32 %v442, 0.1333332
      %v1231 = vmul.f32 %v445, 0.1333332
      %v1232 = vmul.f32 %v448, 0.1333332
      %v1233 = vmul.f32 %v451, 0.1333332
      %v1234 = vmul.f32 %v454, 0.1333332
      %v1235 = vmul.f32 %v457, 0.1333332
      %v1244 = vrot.slane %v1228, 1
      %v1245 = vrot.slane %v1229, 1
      %v1246 = vrot.slane %v1230, 1
      %v1247 = vrot.slane %v1231, 1
      %v1248 = vrot.slane %v1232, 1
      %v1249 = vrot.slane %v1233, 1
      %v1250 = vrot.slane %v1234, 1
      %v1251 = vrot.slane %v1235, 1
      %v1260 = vadd.f32 %v1220, %v1244
      %v1261 = vadd.f32 %v1221, %v1245
      %v1262 = vadd.f32 %v1222, %v1246
      %v1263 = vadd.f32 %v1223, %v1247
      %v1264 = vadd.f32 %v1224, %v1248
      %v1265 = vadd.f32 %v1225, %v1249
      %v1266 = vadd.f32 %v1226, %v1250
      %v1267 = vadd.f32 %v1227, %v1251
      %v1276 = vrot.slane %v1260, 5
      %v1277 = vrot.slane %v1261, 4
      %v1278 = vsel %vm468, %v1277, %v1276
      %v1279 = vrot.slane %v1262, 3
      %v1280 = vsel %vm471, %v1279, %v1278
      %v1281 = vrot.slane %v1263, 2
      %v1282 = vsel %vm474, %v1281, %v1280
      %v1283 = vrot.slane %v1264, 1
      %v1284 = vsel %vm477, %v1283, %v1282
      %v1285 = vsel %vm480, %v1265, %v1284
      %v1286 = vrot.slane %v1266, 7
      %v1287 = vsel %vm483, %v1286, %v1285
      %v1288 = vrot.slane %v1267, 6
      %v1289 = vsel %vm486, %v1288, %v1287
      %1290 = vrot.lane.b32.xlu0 %v1289, 48
      %v1291 = vpop.permute.xlu0 %1290
      %1293 = vst.msk [vmem:[#allocation2 + $0x30] sm:$0xff] %vm714, %v1291
      %v1294 = vmul.f32 %v436, 0.4000001
      %v1295 = vmul.f32 %v439, 0.4000001
      %v1296 = vmul.f32 %v442, 0.4000001
      %v1297 = vmul.f32 %v445, 0.4000001
      %v1298 = vmul.f32 %v448, 0.4000001
      %v1299 = vmul.f32 %v451, 0.4000001
      %v1300 = vmul.f32 %v454, 0.4000001
      %v1301 = vmul.f32 %v457, 0.4000001
      %v1302 = vmul.f32 %v436, 0.5999999
      %v1303 = vmul.f32 %v439, 0.5999999
      %v1304 = vmul.f32 %v442, 0.5999999
      %v1305 = vmul.f32 %v445, 0.5999999
      %v1306 = vmul.f32 %v448, 0.5999999
      %v1307 = vmul.f32 %v451, 0.5999999
      %v1308 = vmul.f32 %v454, 0.5999999
      %v1309 = vmul.f32 %v457, 0.5999999
      %v1318 = vrot.slane %v1302, 1
      %v1319 = vrot.slane %v1303, 1
      %v1320 = vrot.slane %v1304, 1
      %v1321 = vrot.slane %v1305, 1
      %v1322 = vrot.slane %v1306, 1
      %v1323 = vrot.slane %v1307, 1
      %v1324 = vrot.slane %v1308, 1
      %v1325 = vrot.slane %v1309, 1
      %v1334 = vadd.f32 %v1294, %v1318
      %v1335 = vadd.f32 %v1295, %v1319
      %v1336 = vadd.f32 %v1296, %v1320
      %v1337 = vadd.f32 %v1297, %v1321
      %v1338 = vadd.f32 %v1298, %v1322
      %v1339 = vadd.f32 %v1299, %v1323
      %v1340 = vadd.f32 %v1300, %v1324
      %v1341 = vadd.f32 %v1301, %v1325
      %v1350 = vrot.slane %v1334, 5
      %v1351 = vrot.slane %v1335, 4
      %v1352 = vsel %vm468, %v1351, %v1350
      %v1353 = vrot.slane %v1336, 3
      %v1354 = vsel %vm471, %v1353, %v1352
      %v1355 = vrot.slane %v1337, 2
      %v1356 = vsel %vm474, %v1355, %v1354
      %v1357 = vrot.slane %v1338, 1
      %v1358 = vsel %vm477, %v1357, %v1356
      %v1359 = vsel %vm480, %v1339, %v1358
      %v1360 = vrot.slane %v1340, 7
      %v1361 = vsel %vm483, %v1360, %v1359
      %v1362 = vrot.slane %v1341, 6
      %v1363 = vsel %vm486, %v1362, %v1361
      %1364 = vrot.lane.b32.xlu0 %v1363, 64
      %v1365 = vpop.permute.xlu0 %1364
      %1367 = vst.msk [vmem:[#allocation2 + $0x30] sm:$0xff] %vm789, %v1365
      %v1368 = vmul.f32 %v436, 0.9333334
      %v1369 = vmul.f32 %v439, 0.9333334
      %v1370 = vmul.f32 %v442, 0.9333334
      %v1371 = vmul.f32 %v445, 0.9333334
      %v1372 = vmul.f32 %v448, 0.9333334
      %v1373 = vmul.f32 %v451, 0.9333334
      %v1374 = vmul.f32 %v454, 0.9333334
      %v1375 = vmul.f32 %v457, 0.9333334
      %v1376 = vmul.f32 %v436, 0.0666666
      %v1377 = vmul.f32 %v439, 0.0666666
      %v1378 = vmul.f32 %v442, 0.0666666
      %v1379 = vmul.f32 %v445, 0.0666666
      %v1380 = vmul.f32 %v448, 0.0666666
      %v1381 = vmul.f32 %v451, 0.0666666
      %v1382 = vmul.f32 %v454, 0.0666666
      %v1383 = vmul.f32 %v457, 0.0666666
      %v1392 = vrot.slane %v1376, 1
      %v1393 = vrot.slane %v1377, 1
      %v1394 = vrot.slane %v1378, 1
      %v1395 = vrot.slane %v1379, 1
      %v1396 = vrot.slane %v1380, 1
      %v1397 = vrot.slane %v1381, 1
      %v1398 = vrot.slane %v1382, 1
      %v1399 = vrot.slane %v1383, 1
      %v1408 = vadd.f32 %v1368, %v1392
      %v1409 = vadd.f32 %v1369, %v1393
      %v1410 = vadd.f32 %v1370, %v1394
      %v1411 = vadd.f32 %v1371, %v1395
      %v1412 = vadd.f32 %v1372, %v1396
      %v1413 = vadd.f32 %v1373, %v1397
      %v1414 = vadd.f32 %v1374, %v1398
      %v1415 = vadd.f32 %v1375, %v1399
      %v1424 = vrot.slane %v1408, 6
      %v1425 = vrot.slane %v1409, 5
      %v1426 = vsel %vm468, %v1425, %v1424
      %v1427 = vrot.slane %v1410, 4
      %v1428 = vsel %vm471, %v1427, %v1426
      %v1429 = vrot.slane %v1411, 3
      %v1430 = vsel %vm474, %v1429, %v1428
      %v1431 = vrot.slane %v1412, 2
      %v1432 = vsel %vm477, %v1431, %v1430
      %v1433 = vrot.slane %v1413, 1
      %v1434 = vsel %vm480, %v1433, %v1432
      %v1435 = vsel %vm483, %v1414, %v1434
      %v1436 = vrot.slane %v1415, 7
      %v1437 = vsel %vm486, %v1436, %v1435
      %1438 = vrot.lane.b32.xlu0 %v1437, 80
      %v1439 = vpop.permute.xlu0 %1438
      %1441 = vst.msk [vmem:[#allocation2 + $0x30] sm:$0xff] %vm864, %v1439
      %v1442 = vmul.f32 %v436, 0.4666667
      %v1443 = vmul.f32 %v439, 0.4666667
      %v1444 = vmul.f32 %v442, 0.4666667
      %v1445 = vmul.f32 %v445, 0.4666667
      %v1446 = vmul.f32 %v448, 0.4666667
      %v1447 = vmul.f32 %v451, 0.4666667
      %v1448 = vmul.f32 %v454, 0.4666667
      %v1449 = vmul.f32 %v457, 0.4666667
      %v1458 = vrot.slane %v491, 1
      %v1459 = vrot.slane %v492, 1
      %v1460 = vrot.slane %v493, 1
      %v1461 = vrot.slane %v494, 1
      %v1462 = vrot.slane %v495, 1
      %v1463 = vrot.slane %v496, 1
      %v1464 = vrot.slane %v497, 1
      %v1465 = vrot.slane %v498, 1
      %v1474 = vadd.f32 %v1442, %v1458
      %v1475 = vadd.f32 %v1443, %v1459
      %v1476 = vadd.f32 %v1444, %v1460
      %v1477 = vadd.f32 %v1445, %v1461
      %v1478 = vadd.f32 %v1446, %v1462
      %v1479 = vadd.f32 %v1447, %v1463
      %v1480 = vadd.f32 %v1448, %v1464
      %v1481 = vadd.f32 %v1449, %v1465
      %v1490 = vrot.slane %v1474, 6
      %v1491 = vrot.slane %v1475, 5
      %v1492 = vsel %vm468, %v1491, %v1490
      %v1493 = vrot.slane %v1476, 4
      %v1494 = vsel %vm471, %v1493, %v1492
      %v1495 = vrot.slane %v1477, 3
      %v1496 = vsel %vm474, %v1495, %v1494
      %v1497 = vrot.slane %v1478, 2
      %v1498 = vsel %vm477, %v1497, %v1496
      %v1499 = vrot.slane %v1479, 1
      %v1500 = vsel %vm480, %v1499, %v1498
      %v1501 = vsel %vm483, %v1480, %v1500
      %v1502 = vrot.slane %v1481, 7
      %v1503 = vsel %vm486, %v1502, %v1501
      %1504 = vrot.lane.b32.xlu0 %v1503, 96
      %v1505 = vpop.permute.xlu0 %1504
      %1507 = vst.msk [vmem:[#allocation2 + $0x30] sm:$0xff] %vm939, %v1505
      %v1508 = vrot.slane %v436, 7
      %v1509 = vrot.slane %v439, 6
      %v1510 = vsel %vm468, %v1509, %v1508
      %v1511 = vrot.slane %v442, 5
      %v1512 = vsel %vm471, %v1511, %v1510
      %v1513 = vrot.slane %v445, 4
      %v1514 = vsel %vm474, %v1513, %v1512
      %v1515 = vrot.slane %v448, 3
      %v1516 = vsel %vm477, %v1515, %v1514
      %v1517 = vrot.slane %v451, 2
      %v1518 = vsel %vm480, %v1517, %v1516
      %v1519 = vrot.slane %v454, 1
      %v1520 = vsel %vm483, %v1519, %v1518
      %v1521 = vsel %vm486, %v457, %v1520
      %1522 = vrot.lane.b32.xlu0 %v1521, 112
      %v1523 = vpop.permute.xlu0 %1522
      %1525 = vst.msk [vmem:[#allocation2 + $0x30] sm:$0xff] %vm1014, %v1523
      %v1526 = vld [vmem:[%s3] sm:$0x3]
      %vm1527 = vcmp.gt.f32.partialorder %v1526, 0.5
      %s1528 = scalar_lea.vmem %s3, 2
      %v1529 = vld [vmem:[%s1528] sm:$0x3]
      %vm1530 = vcmp.gt.f32.partialorder %v1529, 0.5
      %s1531 = scalar_lea.vmem %s3, 4
      %v1532 = vld [vmem:[%s1531] sm:$0x3]
      %vm1533 = vcmp.gt.f32.partialorder %v1532, 0.5
      %s1534 = scalar_lea.vmem %s3, 6
      %v1535 = vld [vmem:[%s1534] sm:$0x3]
      %vm1536 = vcmp.gt.f32.partialorder %v1535, 0.5
      %s1537 = scalar_lea.vmem %s3, 10
      %v1538 = vld [vmem:[%s1537] sm:$0x3]
      %vm1539 = vcmp.gt.f32.partialorder %v1538, 0.5
      %s1540 = scalar_lea.vmem %s3, 12
      %v1541 = vld [vmem:[%s1540] sm:$0x3]
      %vm1542 = vcmp.gt.f32.partialorder %v1541, 0.5
      %s1543 = scalar_lea.vmem %s3, 14
      %v1544 = vld [vmem:[%s1543] sm:$0x3]
      %vm1545 = vcmp.gt.f32.partialorder %v1544, 0.5
      %s1546 = scalar_lea.vmem %s3, 16
      %v1547 = vld [vmem:[%s1546] sm:$0x3]
      %vm1548 = vcmp.gt.f32.partialorder %v1547, 0.5
      %v1549 = vld [vmem:[#allocation2] sm:$0xff]
      %v1550 = vld [vmem:[#allocation2 + $0x8] sm:$0xff]
      %v1551 = vld [vmem:[#allocation2 + $0x10] sm:$0xff]
      %v1552 = vld [vmem:[#allocation2 + $0x20] sm:$0xff]
      %v1553 = vld [vmem:[#allocation2 + $0x28] sm:$0xff]
      %v1554 = vld [vmem:[#allocation2 + $0x30] sm:$0xff]
      %v1555 = vsel %vm1527, 1, 0
      %v1556 = vperm.slane %v1555, 0
      %v1557 = vperm.slane %v1555, 1
      %vm1558 = vcmp.eq.s32.totalorder %v1556, 1
      %vm1559 = vcmp.eq.s32.totalorder %v1557, 1
      %1566 = vrot.lane.b32.xlu0 %v1549, 17
      %v1567 = vpop.permute.xlu0 %1566
      %1568 = vrot.lane.b32.xlu0 %v1550, 17
      %v1569 = vpop.permute.xlu0 %1568
      %1570 = vrot.lane.b32.xlu0 %v1551, 17
      %v1571 = vpop.permute.xlu0 %1570
      %1572 = vrot.lane.b32.xlu0 %v1552, 17
      %v1573 = vpop.permute.xlu0 %1572
      %1574 = vrot.lane.b32.xlu0 %v1553, 17
      %v1575 = vpop.permute.xlu0 %1574
      %1576 = vrot.lane.b32.xlu0 %v1554, 17
      %v1577 = vpop.permute.xlu0 %1576
      %vm1578 = vcmask 138240
      %v1579 = vsel %vm1578, %v1567, %v1569
      %v1580 = vsel %vm1578, %v1569, %v1571
      %v1581 = vsel %vm1578, %v1573, %v1575
      %v1582 = vsel %vm1578, %v1575, %v1577
      %v1587 = vsel %vm1558, %v1579, 0.0
      %v1588 = vsel %vm1559, %v1580, 0.0
      %v1589 = vsel %vm1558, %v1581, 0.0
      %v1590 = vsel %vm1559, %v1582, 0.0
      %v1591 = vld [vmem:[%s4] sm:$0xff]
      %v1592 = vld [vmem:[%s4 + $0x8] sm:$0xff]
      %v1593 = vsel %vm1530, 1, 0
      %v1594 = vperm.slane %v1593, 0
      %v1595 = vperm.slane %v1593, 1
      %vm1596 = vcmp.eq.s32.totalorder %v1594, 1
      %vm1597 = vcmp.eq.s32.totalorder %v1595, 1
      %1598 = vrot.lane.b32.xlu0 %v1549, 16
      %v1599 = vpop.permute.xlu0 %1598
      %1600 = vrot.lane.b32.xlu0 %v1550, 16
      %v1601 = vpop.permute.xlu0 %1600
      %1602 = vrot.lane.b32.xlu0 %v1551, 16
      %v1603 = vpop.permute.xlu0 %1602
      %1604 = vrot.lane.b32.xlu0 %v1552, 16
      %v1605 = vpop.permute.xlu0 %1604
      %1606 = vrot.lane.b32.xlu0 %v1553, 16
      %v1607 = vpop.permute.xlu0 %1606
      %1608 = vrot.lane.b32.xlu0 %v1554, 16
      %v1609 = vpop.permute.xlu0 %1608
      %v1610 = vsel %vm489, %v1599, %v1601
      %v1611 = vsel %vm489, %v1601, %v1603
      %v1612 = vsel %vm489, %v1605, %v1607
      %v1613 = vsel %vm489, %v1607, %v1609
      %v1618 = vsel %vm1596, %v1610, 0.0
      %v1619 = vsel %vm1597, %v1611, 0.0
      %v1620 = vsel %vm1596, %v1612, 0.0
      %v1621 = vsel %vm1597, %v1613, 0.0
      %s1622 = scalar_lea.vmem %s4, 16
      %v1623 = vld [vmem:[%s1622] sm:$0xff]
      %v1624 = vld [vmem:[%s1622 + $0x8] sm:$0xff]
      %v1626 = vsel %vm489, %v1623, 0
      %v1629 = vsel %vm489, %v1624, 0
      %1631 = vmatpush.msra.mxu0 0.0
      %1632 = vmatpush.msra.mxu0 0.0
      %1633 = vmatpush.msra.mxu0 0.0
      %1634 = vmatpush.msra.mxu0 0.0
      %1635 = vmatpush.msra.mxu0 0.0
      %1636 = vmatpush.msra.mxu0 0.0
      %1637 = vmatpush.msra.mxu0 0.0
      %1638 = vmatpush.msra.mxu0 0.0
      %1639 = vmatpush.msra.mxu0 0.0
      %1640 = vmatpush.msra.mxu0 0.0
      %1641 = vmatpush.msra.mxu0 0.0
      %1642 = vmatpush.msra.mxu0 0.0
      %1643 = vmatpush.msra.mxu0 0.0
      %1644 = vmatpush.msra.mxu0 0.0
      %1645 = vmatpush.msra.mxu0 %v1620
      %1646 = vmatpush.msra.mxu0 %v1618
      %1647 = vmatmul.f32.gmra.mxu0 %v1626
      %v1648 = vpop.f32.mrf.mxu0
      %v1649 = vadd.f32 0.0, %v1648
      %1650 = vmatmul.f32.gmra.mxu0 %v1629
      %v1651 = vpop.f32.mrf.mxu0
      %v1652 = vadd.f32 0.0, %v1651
      %1653 = vdwg.mxu0
      %1654 = vmatpush.msra.mxu0 0.0
      %1655 = vmatpush.msra.mxu0 0.0
      %1656 = vmatpush.msra.mxu0 0.0
      %1657 = vmatpush.msra.mxu0 0.0
      %1658 = vmatpush.msra.mxu0 0.0
      %1659 = vmatpush.msra.mxu0 0.0
      %1660 = vmatpush.msra.mxu0 0.0
      %1661 = vmatpush.msra.mxu0 0.0
      %1662 = vmatpush.msra.mxu0 0.0
      %1663 = vmatpush.msra.mxu0 0.0
      %1664 = vmatpush.msra.mxu0 0.0
      %1665 = vmatpush.msra.mxu0 0.0
      %1666 = vmatpush.msra.mxu0 0.0
      %1667 = vmatpush.msra.mxu0 0.0
      %1668 = vmatpush.msra.mxu0 %v1621
      %1669 = vmatpush.msra.mxu0 %v1619
      %1670 = vmatmul.f32.gmra.mxu0 %v1626
      %v1671 = vpop.f32.mrf.mxu0
      %v1672 = vadd.f32 0.0, %v1671
      %1673 = vmatmul.f32.gmra.mxu0 %v1629
      %v1674 = vpop.f32.mrf.mxu0
      %v1675 = vadd.f32 0.0, %v1674
      %1676 = vdwg.mxu0
      %v1678 = vsel %vm489, %v1591, 0
      %v1681 = vsel %vm489, %v1592, 0
      %1683 = vmatpush.msra.mxu0 0.0
      %1684 = vmatpush.msra.mxu0 0.0
      %1685 = vmatpush.msra.mxu0 0.0
      %1686 = vmatpush.msra.mxu0 0.0
      %1687 = vmatpush.msra.mxu0 0.0
      %1688 = vmatpush.msra.mxu0 0.0
      %1689 = vmatpush.msra.mxu0 0.0
      %1690 = vmatpush.msra.mxu0 0.0
      %1691 = vmatpush.msra.mxu0 0.0
      %1692 = vmatpush.msra.mxu0 0.0
      %1693 = vmatpush.msra.mxu0 0.0
      %1694 = vmatpush.msra.mxu0 0.0
      %1695 = vmatpush.msra.mxu0 0.0
      %1696 = vmatpush.msra.mxu0 0.0
      %1697 = vmatpush.msra.mxu0 %v1589
      %1698 = vmatpush.msra.mxu0 %v1587
      %1699 = vmatmul.f32.gmra.mxu0 %v1678
      %v1700 = vpop.f32.mrf.mxu0
      %v1701 = vadd.f32 %v1649, %v1700
      %1702 = vmatmul.f32.gmra.mxu0 %v1681
      %v1703 = vpop.f32.mrf.mxu0
      %v1704 = vadd.f32 %v1652, %v1703
      %1705 = vdwg.mxu0
      %1706 = vmatpush.msra.mxu0 0.0
      %1707 = vmatpush.msra.mxu0 0.0
      %1708 = vmatpush.msra.mxu0 0.0
      %1709 = vmatpush.msra.mxu0 0.0
      %1710 = vmatpush.msra.mxu0 0.0
      %1711 = vmatpush.msra.mxu0 0.0
      %1712 = vmatpush.msra.mxu0 0.0
      %1713 = vmatpush.msra.mxu0 0.0
      %1714 = vmatpush.msra.mxu0 0.0
      %1715 = vmatpush.msra.mxu0 0.0
      %1716 = vmatpush.msra.mxu0 0.0
      %1717 = vmatpush.msra.mxu0 0.0
      %1718 = vmatpush.msra.mxu0 0.0
      %1719 = vmatpush.msra.mxu0 0.0
      %1720 = vmatpush.msra.mxu0 %v1590
      %1721 = vmatpush.msra.mxu0 %v1588
      %1722 = vmatmul.f32.gmra.mxu0 %v1678
      %v1723 = vpop.f32.mrf.mxu0
      %v1724 = vadd.f32 %v1672, %v1723
      %1725 = vmatmul.f32.gmra.mxu0 %v1681
      %v1726 = vpop.f32.mrf.mxu0
      %v1727 = vadd.f32 %v1675, %v1726
      %1728 = vdwg.mxu0
      %v1729 = vsel %vm1533, 1, 0
      %v1730 = vperm.slane %v1729, 0
      %v1731 = vperm.slane %v1729, 1
      %vm1732 = vcmp.eq.s32.totalorder %v1730, 1
      %vm1733 = vcmp.eq.s32.totalorder %v1731, 1
      %1734 = vrot.lane.b32.xlu0 %v1549, 15
      %v1735 = vpop.permute.xlu0 %1734
      %1736 = vrot.lane.b32.xlu0 %v1550, 15
      %v1737 = vpop.permute.xlu0 %1736
      %1738 = vrot.lane.b32.xlu0 %v1551, 15
      %v1739 = vpop.permute.xlu0 %1738
      %1740 = vrot.lane.b32.xlu0 %v1552, 15
      %v1741 = vpop.permute.xlu0 %1740
      %1742 = vrot.lane.b32.xlu0 %v1553, 15
      %v1743 = vpop.permute.xlu0 %1742
      %1744 = vrot.lane.b32.xlu0 %v1554, 15
      %v1745 = vpop.permute.xlu0 %1744
      %vm1746 = vcmask 121856
      %v1747 = vsel %vm1746, %v1735, %v1737
      %v1748 = vsel %vm1746, %v1737, %v1739
      %v1749 = vsel %vm1746, %v1741, %v1743
      %v1750 = vsel %vm1746, %v1743, %v1745
      %v1755 = vsel %vm1732, %v1747, 0.0
      %v1756 = vsel %vm1733, %v1748, 0.0
      %v1757 = vsel %vm1732, %v1749, 0.0
      %v1758 = vsel %vm1733, %v1750, 0.0
      %s1759 = scalar_lea.vmem %s4, 32
      %v1760 = vld [vmem:[%s1759] sm:$0xff]
      %v1761 = vld [vmem:[%s1759 + $0x8] sm:$0xff]
      %v1763 = vsel %vm489, %v1760, 0
      %v1766 = vsel %vm489, %v1761, 0
      %1768 = vmatpush.msra.mxu0 0.0
      %1769 = vmatpush.msra.mxu0 0.0
      %1770 = vmatpush.msra.mxu0 0.0
      %1771 = vmatpush.msra.mxu0 0.0
      %1772 = vmatpush.msra.mxu0 0.0
      %1773 = vmatpush.msra.mxu0 0.0
      %1774 = vmatpush.msra.mxu0 0.0
      %1775 = vmatpush.msra.mxu0 0.0
      %1776 = vmatpush.msra.mxu0 0.0
      %1777 = vmatpush.msra.mxu0 0.0
      %1778 = vmatpush.msra.mxu0 0.0
      %1779 = vmatpush.msra.mxu0 0.0
      %1780 = vmatpush.msra.mxu0 0.0
      %1781 = vmatpush.msra.mxu0 0.0
      %1782 = vmatpush.msra.mxu0 %v1757
      %1783 = vmatpush.msra.mxu0 %v1755
      %1784 = vmatmul.f32.gmra.mxu0 %v1763
      %v1785 = vpop.f32.mrf.mxu0
      %v1786 = vadd.f32 0.0, %v1785
      %1787 = vmatmul.f32.gmra.mxu0 %v1766
      %v1788 = vpop.f32.mrf.mxu0
      %v1789 = vadd.f32 0.0, %v1788
      %1790 = vdwg.mxu0
      %1791 = vmatpush.msra.mxu0 0.0
      %1792 = vmatpush.msra.mxu0 0.0
      %1793 = vmatpush.msra.mxu0 0.0
      %1794 = vmatpush.msra.mxu0 0.0
      %1795 = vmatpush.msra.mxu0 0.0
      %1796 = vmatpush.msra.mxu0 0.0
      %1797 = vmatpush.msra.mxu0 0.0
      %1798 = vmatpush.msra.mxu0 0.0
      %1799 = vmatpush.msra.mxu0 0.0
      %1800 = vmatpush.msra.mxu0 0.0
      %1801 = vmatpush.msra.mxu0 0.0
      %1802 = vmatpush.msra.mxu0 0.0
      %1803 = vmatpush.msra.mxu0 0.0
      %1804 = vmatpush.msra.mxu0 0.0
      %1805 = vmatpush.msra.mxu0 %v1758
      %1806 = vmatpush.msra.mxu0 %v1756
      %1807 = vmatmul.f32.gmra.mxu0 %v1763
      %v1808 = vpop.f32.mrf.mxu0
      %v1809 = vadd.f32 0.0, %v1808
      %1810 = vmatmul.f32.gmra.mxu0 %v1766
      %v1811 = vpop.f32.mrf.mxu0
      %v1812 = vadd.f32 0.0, %v1811
      %1813 = vdwg.mxu0
      %v1814 = vadd.f32 %v1701, %v1786
      %v1815 = vadd.f32 %v1724, %v1809
      %v1816 = vadd.f32 %v1704, %v1789
      %v1817 = vadd.f32 %v1727, %v1812
      %v1818 = vsel %vm1536, 1, 0
      %v1819 = vperm.slane %v1818, 0
      %v1820 = vperm.slane %v1818, 1
      %vm1821 = vcmp.eq.s32.totalorder %v1819, 1
      %vm1822 = vcmp.eq.s32.totalorder %v1820, 1
      %1823 = vrot.lane.b32.xlu0 %v1549, 1
      %v1824 = vpop.permute.xlu0 %1823
      %1825 = vrot.lane.b32.xlu0 %v1550, 1
      %v1826 = vpop.permute.xlu0 %1825
      %1827 = vrot.lane.b32.xlu0 %v1551, 1
      %v1828 = vpop.permute.xlu0 %1827
      %1829 = vrot.lane.b32.xlu0 %v1552, 1
      %v1830 = vpop.permute.xlu0 %1829
      %1831 = vrot.lane.b32.xlu0 %v1553, 1
      %v1832 = vpop.permute.xlu0 %1831
      %1833 = vrot.lane.b32.xlu0 %v1554, 1
      %v1834 = vpop.permute.xlu0 %1833
      %vm1835 = vcmask 7168
      %v1836 = vsel %vm1835, %v1824, %v1826
      %v1837 = vsel %vm1835, %v1826, %v1828
      %v1838 = vsel %vm1835, %v1830, %v1832
      %v1839 = vsel %vm1835, %v1832, %v1834
      %v1844 = vsel %vm1821, %v1836, 0.0
      %v1845 = vsel %vm1822, %v1837, 0.0
      %v1846 = vsel %vm1821, %v1838, 0.0
      %v1847 = vsel %vm1822, %v1839, 0.0
      %s1848 = scalar_lea.vmem %s4, 48
      %v1849 = vld [vmem:[%s1848] sm:$0xff]
      %v1850 = vld [vmem:[%s1848 + $0x8] sm:$0xff]
      %v1852 = vsel %vm489, %v1849, 0
      %v1855 = vsel %vm489, %v1850, 0
      %1857 = vmatpush.msra.mxu0 0.0
      %1858 = vmatpush.msra.mxu0 0.0
      %1859 = vmatpush.msra.mxu0 0.0
      %1860 = vmatpush.msra.mxu0 0.0
      %1861 = vmatpush.msra.mxu0 0.0
      %1862 = vmatpush.msra.mxu0 0.0
      %1863 = vmatpush.msra.mxu0 0.0
      %1864 = vmatpush.msra.mxu0 0.0
      %1865 = vmatpush.msra.mxu0 0.0
      %1866 = vmatpush.msra.mxu0 0.0
      %1867 = vmatpush.msra.mxu0 0.0
      %1868 = vmatpush.msra.mxu0 0.0
      %1869 = vmatpush.msra.mxu0 0.0
      %1870 = vmatpush.msra.mxu0 0.0
      %1871 = vmatpush.msra.mxu0 %v1846
      %1872 = vmatpush.msra.mxu0 %v1844
      %1873 = vmatmul.f32.gmra.mxu0 %v1852
      %v1874 = vpop.f32.mrf.mxu0
      %v1875 = vadd.f32 0.0, %v1874
      %1876 = vmatmul.f32.gmra.mxu0 %v1855
      %v1877 = vpop.f32.mrf.mxu0
      %v1878 = vadd.f32 0.0, %v1877
      %1879 = vdwg.mxu0
      %1880 = vmatpush.msra.mxu0 0.0
      %1881 = vmatpush.msra.mxu0 0.0
      %1882 = vmatpush.msra.mxu0 0.0
      %1883 = vmatpush.msra.mxu0 0.0
      %1884 = vmatpush.msra.mxu0 0.0
      %1885 = vmatpush.msra.mxu0 0.0
      %1886 = vmatpush.msra.mxu0 0.0
      %1887 = vmatpush.msra.mxu0 0.0
      %1888 = vmatpush.msra.mxu0 0.0
      %1889 = vmatpush.msra.mxu0 0.0
      %1890 = vmatpush.msra.mxu0 0.0
      %1891 = vmatpush.msra.mxu0 0.0
      %1892 = vmatpush.msra.mxu0 0.0
      %1893 = vmatpush.msra.mxu0 0.0
      %1894 = vmatpush.msra.mxu0 %v1847
      %1895 = vmatpush.msra.mxu0 %v1845
      %1896 = vmatmul.f32.gmra.mxu0 %v1852
      %v1897 = vpop.f32.mrf.mxu0
      %v1898 = vadd.f32 0.0, %v1897
      %1899 = vmatmul.f32.gmra.mxu0 %v1855
      %v1900 = vpop.f32.mrf.mxu0
      %v1901 = vadd.f32 0.0, %v1900
      %1902 = vdwg.mxu0
      %v1903 = vadd.f32 %v1814, %v1875
      %v1904 = vadd.f32 %v1815, %v1898
      %v1905 = vadd.f32 %v1816, %v1878
      %v1906 = vadd.f32 %v1817, %v1901
      %s1907 = scalar_lea.vmem %s4, 64
      %v1908 = vld [vmem:[%s1907] sm:$0xff]
      %v1909 = vld [vmem:[%s1907 + $0x8] sm:$0xff]
      %v1911 = vsel %vm489, %v1908, 0
      %v1914 = vsel %vm489, %v1909, 0
      %1916 = vmatpush.msra.mxu0 0.0
      %1917 = vmatpush.msra.mxu0 0.0
      %1918 = vmatpush.msra.mxu0 0.0
      %1919 = vmatpush.msra.mxu0 0.0
      %1920 = vmatpush.msra.mxu0 0.0
      %1921 = vmatpush.msra.mxu0 0.0
      %1922 = vmatpush.msra.mxu0 0.0
      %1923 = vmatpush.msra.mxu0 0.0
      %1924 = vmatpush.msra.mxu0 0.0
      %1925 = vmatpush.msra.mxu0 0.0
      %1926 = vmatpush.msra.mxu0 0.0
      %1927 = vmatpush.msra.mxu0 0.0
      %1928 = vmatpush.msra.mxu0 0.0
      %1929 = vmatpush.msra.mxu0 0.0
      %1930 = vmatpush.msra.mxu0 %v1553
      %1931 = vmatpush.msra.mxu0 %v1550
      %1932 = vmatmul.f32.gmra.mxu0 %v1911
      %v1933 = vpop.f32.mrf.mxu0
      %v1934 = vadd.f32 0.0, %v1933
      %1935 = vmatmul.f32.gmra.mxu0 %v1914
      %v1936 = vpop.f32.mrf.mxu0
      %v1937 = vadd.f32 0.0, %v1936
      %1938 = vdwg.mxu0
      %1939 = vmatpush.msra.mxu0 0.0
      %1940 = vmatpush.msra.mxu0 0.0
      %1941 = vmatpush.msra.mxu0 0.0
      %1942 = vmatpush.msra.mxu0 0.0
      %1943 = vmatpush.msra.mxu0 0.0
      %1944 = vmatpush.msra.mxu0 0.0
      %1945 = vmatpush.msra.mxu0 0.0
      %1946 = vmatpush.msra.mxu0 0.0
      %1947 = vmatpush.msra.mxu0 0.0
      %1948 = vmatpush.msra.mxu0 0.0
      %1949 = vmatpush.msra.mxu0 0.0
      %1950 = vmatpush.msra.mxu0 0.0
      %1951 = vmatpush.msra.mxu0 0.0
      %1952 = vmatpush.msra.mxu0 0.0
      %1953 = vmatpush.msra.mxu0 %v1554
      %1954 = vmatpush.msra.mxu0 %v1551
      %1955 = vmatmul.f32.gmra.mxu0 %v1911
      %v1956 = vpop.f32.mrf.mxu0
      %v1957 = vadd.f32 0.0, %v1956
      %1958 = vmatmul.f32.gmra.mxu0 %v1914
      %v1959 = vpop.f32.mrf.mxu0
      %v1960 = vadd.f32 0.0, %v1959
      %1961 = vdwg.mxu0
      %v1962 = vadd.f32 %v1903, %v1934
      %v1963 = vadd.f32 %v1904, %v1957
      %v1964 = vadd.f32 %v1905, %v1937
      %v1965 = vadd.f32 %v1906, %v1960
      %v1966 = vld [vmem:[#allocation2 + $0x8] sm:$0xff]
      %v1967 = vld [vmem:[#allocation2 + $0x10] sm:$0xff]
      %v1968 = vld [vmem:[#allocation2 + $0x18] sm:$0xff]
      %v1969 = vld [vmem:[#allocation2 + $0x28] sm:$0xff]
      %v1970 = vld [vmem:[#allocation2 + $0x30] sm:$0xff]
      %v1971 = vld [vmem:[#allocation2 + $0x38] sm:$0xff]
      %v1972 = vsel %vm1539, 1, 0
      %v1973 = vperm.slane %v1972, 0
      %v1974 = vperm.slane %v1972, 1
      %vm1975 = vcmp.eq.s32.totalorder %v1973, 1
      %vm1976 = vcmp.eq.s32.totalorder %v1974, 1
      %1983 = vrot.lane.b32.xlu0 %v1966, 127
      %v1984 = vpop.permute.xlu0 %1983
      %1985 = vrot.lane.b32.xlu0 %v1967, 127
      %v1986 = vpop.permute.xlu0 %1985
      %1987 = vrot.lane.b32.xlu0 %v1968, 127
      %v1988 = vpop.permute.xlu0 %1987
      %1989 = vrot.lane.b32.xlu0 %v1969, 127
      %v1990 = vpop.permute.xlu0 %1989
      %1991 = vrot.lane.b32.xlu0 %v1970, 127
      %v1992 = vpop.permute.xlu0 %1991
      %1993 = vrot.lane.b32.xlu0 %v1971, 127
      %v1994 = vpop.permute.xlu0 %1993
      %vm1995 = vcmask 1039360
      %v1996 = vsel %vm1995, %v1984, %v1986
      %v1997 = vsel %vm1995, %v1986, %v1988
      %v1998 = vsel %vm1995, %v1990, %v1992
      %v1999 = vsel %vm1995, %v1992, %v1994
      %v2004 = vsel %vm1975, %v1996, 0.0
      %v2005 = vsel %vm1976, %v1997, 0.0
      %v2006 = vsel %vm1975, %v1998, 0.0
      %v2007 = vsel %vm1976, %v1999, 0.0
      %s2008 = scalar_lea.vmem %s4, 80
      %v2009 = vld [vmem:[%s2008] sm:$0xff]
      %v2010 = vld [vmem:[%s2008 + $0x8] sm:$0xff]
      %v2012 = vsel %vm489, %v2009, 0
      %v2015 = vsel %vm489, %v2010, 0
      %2017 = vmatpush.msra.mxu0 0.0
      %2018 = vmatpush.msra.mxu0 0.0
      %2019 = vmatpush.msra.mxu0 0.0
      %2020 = vmatpush.msra.mxu0 0.0
      %2021 = vmatpush.msra.mxu0 0.0
      %2022 = vmatpush.msra.mxu0 0.0
      %2023 = vmatpush.msra.mxu0 0.0
      %2024 = vmatpush.msra.mxu0 0.0
      %2025 = vmatpush.msra.mxu0 0.0
      %2026 = vmatpush.msra.mxu0 0.0
      %2027 = vmatpush.msra.mxu0 0.0
      %2028 = vmatpush.msra.mxu0 0.0
      %2029 = vmatpush.msra.mxu0 0.0
      %2030 = vmatpush.msra.mxu0 0.0
      %2031 = vmatpush.msra.mxu0 %v2006
      %2032 = vmatpush.msra.mxu0 %v2004
      %2033 = vmatmul.f32.gmra.mxu0 %v2012
      %v2034 = vpop.f32.mrf.mxu0
      %v2035 = vadd.f32 0.0, %v2034
      %2036 = vmatmul.f32.gmra.mxu0 %v2015
      %v2037 = vpop.f32.mrf.mxu0
      %v2038 = vadd.f32 0.0, %v2037
      %2039 = vdwg.mxu0
      %2040 = vmatpush.msra.mxu0 0.0
      %2041 = vmatpush.msra.mxu0 0.0
      %2042 = vmatpush.msra.mxu0 0.0
      %2043 = vmatpush.msra.mxu0 0.0
      %2044 = vmatpush.msra.mxu0 0.0
      %2045 = vmatpush.msra.mxu0 0.0
      %2046 = vmatpush.msra.mxu0 0.0
      %2047 = vmatpush.msra.mxu0 0.0
      %2048 = vmatpush.msra.mxu0 0.0
      %2049 = vmatpush.msra.mxu0 0.0
      %2050 = vmatpush.msra.mxu0 0.0
      %2051 = vmatpush.msra.mxu0 0.0
      %2052 = vmatpush.msra.mxu0 0.0
      %2053 = vmatpush.msra.mxu0 0.0
      %2054 = vmatpush.msra.mxu0 %v2007
      %2055 = vmatpush.msra.mxu0 %v2005
      %2056 = vmatmul.f32.gmra.mxu0 %v2012
      %v2057 = vpop.f32.mrf.mxu0
      %v2058 = vadd.f32 0.0, %v2057
      %2059 = vmatmul.f32.gmra.mxu0 %v2015
      %v2060 = vpop.f32.mrf.mxu0
      %v2061 = vadd.f32 0.0, %v2060
      %2062 = vdwg.mxu0
      %v2063 = vadd.f32 %v1962, %v2035
      %v2064 = vadd.f32 %v1963, %v2058
      %v2065 = vadd.f32 %v1964, %v2038
      %v2066 = vadd.f32 %v1965, %v2061
      %v2067 = vsel %vm1542, 1, 0
      %v2068 = vperm.slane %v2067, 0
      %v2069 = vperm.slane %v2067, 1
      %vm2070 = vcmp.eq.s32.totalorder %v2068, 1
      %vm2071 = vcmp.eq.s32.totalorder %v2069, 1
      %2072 = vrot.lane.b32.xlu0 %v1966, 113
      %v2073 = vpop.permute.xlu0 %2072
      %2074 = vrot.lane.b32.xlu0 %v1967, 113
      %v2075 = vpop.permute.xlu0 %2074
      %2076 = vrot.lane.b32.xlu0 %v1968, 113
      %v2077 = vpop.permute.xlu0 %2076
      %2078 = vrot.lane.b32.xlu0 %v1969, 113
      %v2079 = vpop.permute.xlu0 %2078
      %2080 = vrot.lane.b32.xlu0 %v1970, 113
      %v2081 = vpop.permute.xlu0 %2080
      %2082 = vrot.lane.b32.xlu0 %v1971, 113
      %v2083 = vpop.permute.xlu0 %2082
      %vm2084 = vcmask 924672
      %v2085 = vsel %vm2084, %v2073, %v2075
      %v2086 = vsel %vm2084, %v2075, %v2077
      %v2087 = vsel %vm2084, %v2079, %v2081
      %v2088 = vsel %vm2084, %v2081, %v2083
      %v2093 = vsel %vm2070, %v2085, 0.0
      %v2094 = vsel %vm2071, %v2086, 0.0
      %v2095 = vsel %vm2070, %v2087, 0.0
      %v2096 = vsel %vm2071, %v2088, 0.0
      %s2097 = scalar_lea.vmem %s4, 96
      %v2098 = vld [vmem:[%s2097] sm:$0xff]
      %v2099 = vld [vmem:[%s2097 + $0x8] sm:$0xff]
      %v2101 = vsel %vm489, %v2098, 0
      %v2104 = vsel %vm489, %v2099, 0
      %2106 = vmatpush.msra.mxu0 0.0
      %2107 = vmatpush.msra.mxu0 0.0
      %2108 = vmatpush.msra.mxu0 0.0
      %2109 = vmatpush.msra.mxu0 0.0
      %2110 = vmatpush.msra.mxu0 0.0
      %2111 = vmatpush.msra.mxu0 0.0
      %2112 = vmatpush.msra.mxu0 0.0
      %2113 = vmatpush.msra.mxu0 0.0
      %2114 = vmatpush.msra.mxu0 0.0
      %2115 = vmatpush.msra.mxu0 0.0
      %2116 = vmatpush.msra.mxu0 0.0
      %2117 = vmatpush.msra.mxu0 0.0
      %2118 = vmatpush.msra.mxu0 0.0
      %2119 = vmatpush.msra.mxu0 0.0
      %2120 = vmatpush.msra.mxu0 %v2095
      %2121 = vmatpush.msra.mxu0 %v2093
      %2122 = vmatmul.f32.gmra.mxu0 %v2101
      %v2123 = vpop.f32.mrf.mxu0
      %v2124 = vadd.f32 0.0, %v2123
      %2125 = vmatmul.f32.gmra.mxu0 %v2104
      %v2126 = vpop.f32.mrf.mxu0
      %v2127 = vadd.f32 0.0, %v2126
      %2128 = vdwg.mxu0
      %2129 = vmatpush.msra.mxu0 0.0
      %2130 = vmatpush.msra.mxu0 0.0
      %2131 = vmatpush.msra.mxu0 0.0
      %2132 = vmatpush.msra.mxu0 0.0
      %2133 = vmatpush.msra.mxu0 0.0
      %2134 = vmatpush.msra.mxu0 0.0
      %2135 = vmatpush.msra.mxu0 0.0
      %2136 = vmatpush.msra.mxu0 0.0
      %2137 = vmatpush.msra.mxu0 0.0
      %2138 = vmatpush.msra.mxu0 0.0
      %2139 = vmatpush.msra.mxu0 0.0
      %2140 = vmatpush.msra.mxu0 0.0
      %2141 = vmatpush.msra.mxu0 0.0
      %2142 = vmatpush.msra.mxu0 0.0
      %2143 = vmatpush.msra.mxu0 %v2096
      %2144 = vmatpush.msra.mxu0 %v2094
      %2145 = vmatmul.f32.gmra.mxu0 %v2101
      %v2146 = vpop.f32.mrf.mxu0
      %v2147 = vadd.f32 0.0, %v2146
      %2148 = vmatmul.f32.gmra.mxu0 %v2104
      %v2149 = vpop.f32.mrf.mxu0
      %v2150 = vadd.f32 0.0, %v2149
      %2151 = vdwg.mxu0
      %v2152 = vadd.f32 %v2063, %v2124
      %v2153 = vadd.f32 %v2064, %v2147
      %v2154 = vadd.f32 %v2065, %v2127
      %v2155 = vadd.f32 %v2066, %v2150
      %v2156 = vsel %vm1545, 1, 0
      %v2157 = vperm.slane %v2156, 0
      %v2158 = vperm.slane %v2156, 1
      %vm2159 = vcmp.eq.s32.totalorder %v2157, 1
      %vm2160 = vcmp.eq.s32.totalorder %v2158, 1
      %2161 = vrot.lane.b32.xlu0 %v1966, 112
      %v2162 = vpop.permute.xlu0 %2161
      %2163 = vrot.lane.b32.xlu0 %v1967, 112
      %v2164 = vpop.permute.xlu0 %2163
      %2165 = vrot.lane.b32.xlu0 %v1968, 112
      %v2166 = vpop.permute.xlu0 %2165
      %2167 = vrot.lane.b32.xlu0 %v1969, 112
      %v2168 = vpop.permute.xlu0 %2167
      %2169 = vrot.lane.b32.xlu0 %v1970, 112
      %v2170 = vpop.permute.xlu0 %2169
      %2171 = vrot.lane.b32.xlu0 %v1971, 112
      %v2172 = vpop.permute.xlu0 %2171
      %vm2173 = vcmask 916480
      %v2174 = vsel %vm2173, %v2162, %v2164
      %v2175 = vsel %vm2173, %v2164, %v2166
      %v2176 = vsel %vm2173, %v2168, %v2170
      %v2177 = vsel %vm2173, %v2170, %v2172
      %v2182 = vsel %vm2159, %v2174, 0.0
      %v2183 = vsel %vm2160, %v2175, 0.0
      %v2184 = vsel %vm2159, %v2176, 0.0
      %v2185 = vsel %vm2160, %v2177, 0.0
      %s2186 = scalar_lea.vmem %s4, 112
      %v2187 = vld [vmem:[%s2186] sm:$0xff]
      %v2188 = vld [vmem:[%s2186 + $0x8] sm:$0xff]
      %v2190 = vsel %vm489, %v2187, 0
      %v2193 = vsel %vm489, %v2188, 0
      %2195 = vmatpush.msra.mxu0 0.0
      %2196 = vmatpush.msra.mxu0 0.0
      %2197 = vmatpush.msra.mxu0 0.0
      %2198 = vmatpush.msra.mxu0 0.0
      %2199 = vmatpush.msra.mxu0 0.0
      %2200 = vmatpush.msra.mxu0 0.0
      %2201 = vmatpush.msra.mxu0 0.0
      %2202 = vmatpush.msra.mxu0 0.0
      %2203 = vmatpush.msra.mxu0 0.0
      %2204 = vmatpush.msra.mxu0 0.0
      %2205 = vmatpush.msra.mxu0 0.0
      %2206 = vmatpush.msra.mxu0 0.0
      %2207 = vmatpush.msra.mxu0 0.0
      %2208 = vmatpush.msra.mxu0 0.0
      %2209 = vmatpush.msra.mxu0 %v2184
      %2210 = vmatpush.msra.mxu0 %v2182
      %2211 = vmatmul.f32.gmra.mxu0 %v2190
      %v2212 = vpop.f32.mrf.mxu0
      %v2213 = vadd.f32 0.0, %v2212
      %2214 = vmatmul.f32.gmra.mxu0 %v2193
      %v2215 = vpop.f32.mrf.mxu0
      %v2216 = vadd.f32 0.0, %v2215
      %2217 = vdwg.mxu0
      %2218 = vmatpush.msra.mxu0 0.0
      %2219 = vmatpush.msra.mxu0 0.0
      %2220 = vmatpush.msra.mxu0 0.0
      %2221 = vmatpush.msra.mxu0 0.0
      %2222 = vmatpush.msra.mxu0 0.0
      %2223 = vmatpush.msra.mxu0 0.0
      %2224 = vmatpush.msra.mxu0 0.0
      %2225 = vmatpush.msra.mxu0 0.0
      %2226 = vmatpush.msra.mxu0 0.0
      %2227 = vmatpush.msra.mxu0 0.0
      %2228 = vmatpush.msra.mxu0 0.0
      %2229 = vmatpush.msra.mxu0 0.0
      %2230 = vmatpush.msra.mxu0 0.0
      %2231 = vmatpush.msra.mxu0 0.0
      %2232 = vmatpush.msra.mxu0 %v2185
      %2233 = vmatpush.msra.mxu0 %v2183
      %2234 = vmatmul.f32.gmra.mxu0 %v2190
      %v2235 = vpop.f32.mrf.mxu0
      %v2236 = vadd.f32 0.0, %v2235
      %2237 = vmatmul.f32.gmra.mxu0 %v2193
      %v2238 = vpop.f32.mrf.mxu0
      %v2239 = vadd.f32 0.0, %v2238
      %2240 = vdwg.mxu0
      %v2241 = vadd.f32 %v2152, %v2213
      %v2242 = vadd.f32 %v2153, %v2236
      %v2243 = vadd.f32 %v2154, %v2216
      %v2244 = vadd.f32 %v2155, %v2239
      %v2245 = vsel %vm1548, 1, 0
      %v2246 = vperm.slane %v2245, 0
      %v2247 = vperm.slane %v2245, 1
      %vm2248 = vcmp.eq.s32.totalorder %v2246, 1
      %vm2249 = vcmp.eq.s32.totalorder %v2247, 1
      %2250 = vrot.lane.b32.xlu0 %v1966, 111
      %v2251 = vpop.permute.xlu0 %2250
      %2252 = vrot.lane.b32.xlu0 %v1967, 111
      %v2253 = vpop.permute.xlu0 %2252
      %2254 = vrot.lane.b32.xlu0 %v1968, 111
      %v2255 = vpop.permute.xlu0 %2254
      %2256 = vrot.lane.b32.xlu0 %v1969, 111
      %v2257 = vpop.permute.xlu0 %2256
      %2258 = vrot.lane.b32.xlu0 %v1970, 111
      %v2259 = vpop.permute.xlu0 %2258
      %2260 = vrot.lane.b32.xlu0 %v1971, 111
      %v2261 = vpop.permute.xlu0 %2260
      %vm2262 = vcmask 908288
      %v2263 = vsel %vm2262, %v2251, %v2253
      %v2264 = vsel %vm2262, %v2253, %v2255
      %v2265 = vsel %vm2262, %v2257, %v2259
      %v2266 = vsel %vm2262, %v2259, %v2261
      %v2271 = vsel %vm2248, %v2263, 0.0
      %v2272 = vsel %vm2249, %v2264, 0.0
      %v2273 = vsel %vm2248, %v2265, 0.0
      %v2274 = vsel %vm2249, %v2266, 0.0
      %s2275 = scalar_lea.vmem %s4, 128
      %v2276 = vld [vmem:[%s2275] sm:$0xff]
      %v2277 = vld [vmem:[%s2275 + $0x8] sm:$0xff]
      %v2279 = vsel %vm489, %v2276, 0
      %v2282 = vsel %vm489, %v2277, 0
      %2284 = vmatpush.msra.mxu0 0.0
      %2285 = vmatpush.msra.mxu0 0.0
      %2286 = vmatpush.msra.mxu0 0.0
      %2287 = vmatpush.msra.mxu0 0.0
      %2288 = vmatpush.msra.mxu0 0.0
      %2289 = vmatpush.msra.mxu0 0.0
      %2290 = vmatpush.msra.mxu0 0.0
      %2291 = vmatpush.msra.mxu0 0.0
      %2292 = vmatpush.msra.mxu0 0.0
      %2293 = vmatpush.msra.mxu0 0.0
      %2294 = vmatpush.msra.mxu0 0.0
      %2295 = vmatpush.msra.mxu0 0.0
      %2296 = vmatpush.msra.mxu0 0.0
      %2297 = vmatpush.msra.mxu0 0.0
      %2298 = vmatpush.msra.mxu0 %v2273
      %2299 = vmatpush.msra.mxu0 %v2271
      %2300 = vmatmul.f32.gmra.mxu0 %v2279
      %v2301 = vpop.f32.mrf.mxu0
      %v2302 = vadd.f32 0.0, %v2301
      %2303 = vmatmul.f32.gmra.mxu0 %v2282
      %v2304 = vpop.f32.mrf.mxu0
      %v2305 = vadd.f32 0.0, %v2304
      %2306 = vdwg.mxu0
      %2307 = vmatpush.msra.mxu0 0.0
      %2308 = vmatpush.msra.mxu0 0.0
      %2309 = vmatpush.msra.mxu0 0.0
      %2310 = vmatpush.msra.mxu0 0.0
      %2311 = vmatpush.msra.mxu0 0.0
      %2312 = vmatpush.msra.mxu0 0.0
      %2313 = vmatpush.msra.mxu0 0.0
      %2314 = vmatpush.msra.mxu0 0.0
      %2315 = vmatpush.msra.mxu0 0.0
      %2316 = vmatpush.msra.mxu0 0.0
      %2317 = vmatpush.msra.mxu0 0.0
      %2318 = vmatpush.msra.mxu0 0.0
      %2319 = vmatpush.msra.mxu0 0.0
      %2320 = vmatpush.msra.mxu0 0.0
      %2321 = vmatpush.msra.mxu0 %v2274
      %2322 = vmatpush.msra.mxu0 %v2272
      %2323 = vmatmul.f32.gmra.mxu0 %v2279
      %v2324 = vpop.f32.mrf.mxu0
      %v2325 = vadd.f32 0.0, %v2324
      %2326 = vmatmul.f32.gmra.mxu0 %v2282
      %v2327 = vpop.f32.mrf.mxu0
      %v2328 = vadd.f32 0.0, %v2327
      %2329 = vdwg.mxu0
      %v2330 = vadd.f32 %v2241, %v2302
      %v2331 = vadd.f32 %v2242, %v2325
      %v2332 = vadd.f32 %v2243, %v2305
      %v2333 = vadd.f32 %v2244, %v2328
      %v2334 = vld [vmem:[%s5] sm:$0xff]
      %v2335 = vld [vmem:[%s5 + $0x8] sm:$0xff]
      %2337 = vset.pattern.permute.xlu0 0
      %2338 = vperm.xlu0 %2337, %v2334
      %v2339 = vpop.permute.xlu0 %2338
      %2342 = vset.pattern.permute.xlu0 0
      %2343 = vperm.xlu0 %2342, %v2335
      %v2344 = vpop.permute.xlu0 %2343
      %v2346 = vmul.f32 %v2330, %v2339
      %v2347 = vmul.f32 %v2331, %v2339
      %v2348 = vmul.f32 %v2332, %v2344
      %v2349 = vmul.f32 %v2333, %v2344
      %v2350 = vld [vmem:[%s6] sm:$0xff]
      %v2351 = vld [vmem:[%s6 + $0x8] sm:$0xff]
      %2353 = vset.pattern.permute.xlu0 0
      %2354 = vperm.xlu0 %2353, %v2350
      %v2355 = vpop.permute.xlu0 %2354
      %2358 = vset.pattern.permute.xlu0 0
      %2359 = vperm.xlu0 %2358, %v2351
      %v2360 = vpop.permute.xlu0 %2359
      %v2362 = vadd.f32 %v2346, %v2355
      %v2363 = vadd.f32 %v2347, %v2355
      %v2364 = vadd.f32 %v2348, %v2360
      %v2365 = vadd.f32 %v2349, %v2360
      %v2366 = vmax.f32 %v2362, 0.0
      %v2367 = vmax.f32 %v2363, 0.0
      %v2368 = vmax.f32 %v2364, 0.0
      %v2369 = vmax.f32 %v2365, 0.0
      %2370 = vst [vmem:[#allocation3 + $0x8] sm:$0xff] %v2366
      %2371 = vst [vmem:[#allocation3 + $0x10] sm:$0xff] %v2367
      %2372 = vst [vmem:[#allocation3 + $0x28] sm:$0xff] %v2368
      %2373 = vst [vmem:[#allocation3 + $0x30] sm:$0xff] %v2369
      %v2374 = vld [vmem:[#allocation3] sm:$0xff]
      %v2375 = vld [vmem:[#allocation3 + $0x8] sm:$0xff]
      %v2376 = vld [vmem:[#allocation3 + $0x10] sm:$0xff]
      %v2377 = vld [vmem:[#allocation3 + $0x20] sm:$0xff]
      %v2378 = vld [vmem:[#allocation3 + $0x28] sm:$0xff]
      %v2379 = vld [vmem:[#allocation3 + $0x30] sm:$0xff]
      %2386 = vrot.lane.b32.xlu0 %v2374, 17
      %v2387 = vpop.permute.xlu0 %2386
      %2388 = vrot.lane.b32.xlu0 %v2375, 17
      %v2389 = vpop.permute.xlu0 %2388
      %2390 = vrot.lane.b32.xlu0 %v2376, 17
      %v2391 = vpop.permute.xlu0 %2390
      %2392 = vrot.lane.b32.xlu0 %v2377, 17
      %v2393 = vpop.permute.xlu0 %2392
      %2394 = vrot.lane.b32.xlu0 %v2378, 17
      %v2395 = vpop.permute.xlu0 %2394
      %2396 = vrot.lane.b32.xlu0 %v2379, 17
      %v2397 = vpop.permute.xlu0 %2396
      %v2398 = vsel %vm1578, %v2387, %v2389
      %v2399 = vsel %vm1578, %v2389, %v2391
      %v2400 = vsel %vm1578, %v2393, %v2395
      %v2401 = vsel %vm1578, %v2395, %v2397
      %v2406 = vsel %vm1558, %v2398, 0.0
      %v2407 = vsel %vm1559, %v2399, 0.0
      %v2408 = vsel %vm1558, %v2400, 0.0
      %v2409 = vsel %vm1559, %v2401, 0.0
      %v2410 = vld [vmem:[%s7] sm:$0xff]
      %v2411 = vld [vmem:[%s7 + $0x8] sm:$0xff]
      %2412 = vrot.lane.b32.xlu0 %v2374, 16
      %v2413 = vpop.permute.xlu0 %2412
      %2414 = vrot.lane.b32.xlu0 %v2375, 16
      %v2415 = vpop.permute.xlu0 %2414
      %2416 = vrot.lane.b32.xlu0 %v2376, 16
      %v2417 = vpop.permute.xlu0 %2416
      %2418 = vrot.lane.b32.xlu0 %v2377, 16
      %v2419 = vpop.permute.xlu0 %2418
      %2420 = vrot.lane.b32.xlu0 %v2378, 16
      %v2421 = vpop.permute.xlu0 %2420
      %2422 = vrot.lane.b32.xlu0 %v2379, 16
      %v2423 = vpop.permute.xlu0 %2422
      %v2424 = vsel %vm489, %v2413, %v2415
      %v2425 = vsel %vm489, %v2415, %v2417
      %v2426 = vsel %vm489, %v2419, %v2421
      %v2427 = vsel %vm489, %v2421, %v2423
      %v2432 = vsel %vm1596, %v2424, 0.0
      %v2433 = vsel %vm1597, %v2425, 0.0
      %v2434 = vsel %vm1596, %v2426, 0.0
      %v2435 = vsel %vm1597, %v2427, 0.0
      %s2436 = scalar_lea.vmem %s7, 16
      %v2437 = vld [vmem:[%s2436] sm:$0xff]
      %v2438 = vld [vmem:[%s2436 + $0x8] sm:$0xff]
      %v2440 = vsel %vm489, %v2437, 0
      %v2443 = vsel %vm489, %v2438, 0
      %2445 = vmatpush.msra.mxu0 0.0
      %2446 = vmatpush.msra.mxu0 0.0
      %2447 = vmatpush.msra.mxu0 0.0
      %2448 = vmatpush.msra.mxu0 0.0
      %2449 = vmatpush.msra.mxu0 0.0
      %2450 = vmatpush.msra.mxu0 0.0
      %2451 = vmatpush.msra.mxu0 0.0
      %2452 = vmatpush.msra.mxu0 0.0
      %2453 = vmatpush.msra.mxu0 0.0
      %2454 = vmatpush.msra.mxu0 0.0
      %2455 = vmatpush.msra.mxu0 0.0
      %2456 = vmatpush.msra.mxu0 0.0
      %2457 = vmatpush.msra.mxu0 0.0
      %2458 = vmatpush.msra.mxu0 0.0
      %2459 = vmatpush.msra.mxu0 %v2434
      %2460 = vmatpush.msra.mxu0 %v2432
      %2461 = vmatmul.f32.gmra.mxu0 %v2440
      %v2462 = vpop.f32.mrf.mxu0
      %v2463 = vadd.f32 0.0, %v2462
      %2464 = vmatmul.f32.gmra.mxu0 %v2443
      %v2465 = vpop.f32.mrf.mxu0
      %v2466 = vadd.f32 0.0, %v2465
      %2467 = vdwg.mxu0
      %2468 = vmatpush.msra.mxu0 0.0
      %2469 = vmatpush.msra.mxu0 0.0
      %2470 = vmatpush.msra.mxu0 0.0
      %2471 = vmatpush.msra.mxu0 0.0
      %2472 = vmatpush.msra.mxu0 0.0
      %2473 = vmatpush.msra.mxu0 0.0
      %2474 = vmatpush.msra.mxu0 0.0
      %2475 = vmatpush.msra.mxu0 0.0
      %2476 = vmatpush.msra.mxu0 0.0
      %2477 = vmatpush.msra.mxu0 0.0
      %2478 = vmatpush.msra.mxu0 0.0
      %2479 = vmatpush.msra.mxu0 0.0
      %2480 = vmatpush.msra.mxu0 0.0
      %2481 = vmatpush.msra.mxu0 0.0
      %2482 = vmatpush.msra.mxu0 %v2435
      %2483 = vmatpush.msra.mxu0 %v2433
      %2484 = vmatmul.f32.gmra.mxu0 %v2440
      %v2485 = vpop.f32.mrf.mxu0
      %v2486 = vadd.f32 0.0, %v2485
      %2487 = vmatmul.f32.gmra.mxu0 %v2443
      %v2488 = vpop.f32.mrf.mxu0
      %v2489 = vadd.f32 0.0, %v2488
      %2490 = vdwg.mxu0
      %v2492 = vsel %vm489, %v2410, 0
      %v2495 = vsel %vm489, %v2411, 0
      %2497 = vmatpush.msra.mxu0 0.0
      %2498 = vmatpush.msra.mxu0 0.0
      %2499 = vmatpush.msra.mxu0 0.0
      %2500 = vmatpush.msra.mxu0 0.0
      %2501 = vmatpush.msra.mxu0 0.0
      %2502 = vmatpush.msra.mxu0 0.0
      %2503 = vmatpush.msra.mxu0 0.0
      %2504 = vmatpush.msra.mxu0 0.0
      %2505 = vmatpush.msra.mxu0 0.0
      %2506 = vmatpush.msra.mxu0 0.0
      %2507 = vmatpush.msra.mxu0 0.0
      %2508 = vmatpush.msra.mxu0 0.0
      %2509 = vmatpush.msra.mxu0 0.0
      %2510 = vmatpush.msra.mxu0 0.0
      %2511 = vmatpush.msra.mxu0 %v2408
      %2512 = vmatpush.msra.mxu0 %v2406
      %2513 = vmatmul.f32.gmra.mxu0 %v2492
      %v2514 = vpop.f32.mrf.mxu0
      %v2515 = vadd.f32 %v2463, %v2514
      %2516 = vmatmul.f32.gmra.mxu0 %v2495
      %v2517 = vpop.f32.mrf.mxu0
      %v2518 = vadd.f32 %v2466, %v2517
      %2519 = vdwg.mxu0
      %2520 = vmatpush.msra.mxu0 0.0
      %2521 = vmatpush.msra.mxu0 0.0
      %2522 = vmatpush.msra.mxu0 0.0
      %2523 = vmatpush.msra.mxu0 0.0
      %2524 = vmatpush.msra.mxu0 0.0
      %2525 = vmatpush.msra.mxu0 0.0
      %2526 = vmatpush.msra.mxu0 0.0
      %2527 = vmatpush.msra.mxu0 0.0
      %2528 = vmatpush.msra.mxu0 0.0
      %2529 = vmatpush.msra.mxu0 0.0
      %2530 = vmatpush.msra.mxu0 0.0
      %2531 = vmatpush.msra.mxu0 0.0
      %2532 = vmatpush.msra.mxu0 0.0
      %2533 = vmatpush.msra.mxu0 0.0
      %2534 = vmatpush.msra.mxu0 %v2409
      %2535 = vmatpush.msra.mxu0 %v2407
      %2536 = vmatmul.f32.gmra.mxu0 %v2492
      %v2537 = vpop.f32.mrf.mxu0
      %v2538 = vadd.f32 %v2486, %v2537
      %2539 = vmatmul.f32.gmra.mxu0 %v2495
      %v2540 = vpop.f32.mrf.mxu0
      %v2541 = vadd.f32 %v2489, %v2540
      %2542 = vdwg.mxu0
      %2543 = vrot.lane.b32.xlu0 %v2374, 15
      %v2544 = vpop.permute.xlu0 %2543
      %2545 = vrot.lane.b32.xlu0 %v2375, 15
      %v2546 = vpop.permute.xlu0 %2545
      %2547 = vrot.lane.b32.xlu0 %v2376, 15
      %v2548 = vpop.permute.xlu0 %2547
      %2549 = vrot.lane.b32.xlu0 %v2377, 15
      %v2550 = vpop.permute.xlu0 %2549
      %2551 = vrot.lane.b32.xlu0 %v2378, 15
      %v2552 = vpop.permute.xlu0 %2551
      %2553 = vrot.lane.b32.xlu0 %v2379, 15
      %v2554 = vpop.permute.xlu0 %2553
      %v2555 = vsel %vm1746, %v2544, %v2546
      %v2556 = vsel %vm1746, %v2546, %v2548
      %v2557 = vsel %vm1746, %v2550, %v2552
      %v2558 = vsel %vm1746, %v2552, %v2554
      %v2563 = vsel %vm1732, %v2555, 0.0
      %v2564 = vsel %vm1733, %v2556, 0.0
      %v2565 = vsel %vm1732, %v2557, 0.0
      %v2566 = vsel %vm1733, %v2558, 0.0
      %s2567 = scalar_lea.vmem %s7, 32
      %v2568 = vld [vmem:[%s2567] sm:$0xff]
      %v2569 = vld [vmem:[%s2567 + $0x8] sm:$0xff]
      %v2571 = vsel %vm489, %v2568, 0
      %v2574 = vsel %vm489, %v2569, 0
      %2576 = vmatpush.msra.mxu0 0.0
      %2577 = vmatpush.msra.mxu0 0.0
      %2578 = vmatpush.msra.mxu0 0.0
      %2579 = vmatpush.msra.mxu0 0.0
      %2580 = vmatpush.msra.mxu0 0.0
      %2581 = vmatpush.msra.mxu0 0.0
      %2582 = vmatpush.msra.mxu0 0.0
      %2583 = vmatpush.msra.mxu0 0.0
      %2584 = vmatpush.msra.mxu0 0.0
      %2585 = vmatpush.msra.mxu0 0.0
      %2586 = vmatpush.msra.mxu0 0.0
      %2587 = vmatpush.msra.mxu0 0.0
      %2588 = vmatpush.msra.mxu0 0.0
      %2589 = vmatpush.msra.mxu0 0.0
      %2590 = vmatpush.msra.mxu0 %v2565
      %2591 = vmatpush.msra.mxu0 %v2563
      %2592 = vmatmul.f32.gmra.mxu0 %v2571
      %v2593 = vpop.f32.mrf.mxu0
      %v2594 = vadd.f32 0.0, %v2593
      %2595 = vmatmul.f32.gmra.mxu0 %v2574
      %v2596 = vpop.f32.mrf.mxu0
      %v2597 = vadd.f32 0.0, %v2596
      %2598 = vdwg.mxu0
      %2599 = vmatpush.msra.mxu0 0.0
      %2600 = vmatpush.msra.mxu0 0.0
      %2601 = vmatpush.msra.mxu0 0.0
      %2602 = vmatpush.msra.mxu0 0.0
      %2603 = vmatpush.msra.mxu0 0.0
      %2604 = vmatpush.msra.mxu0 0.0
      %2605 = vmatpush.msra.mxu0 0.0
      %2606 = vmatpush.msra.mxu0 0.0
      %2607 = vmatpush.msra.mxu0 0.0
      %2608 = vmatpush.msra.mxu0 0.0
      %2609 = vmatpush.msra.mxu0 0.0
      %2610 = vmatpush.msra.mxu0 0.0
      %2611 = vmatpush.msra.mxu0 0.0
      %2612 = vmatpush.msra.mxu0 0.0
      %2613 = vmatpush.msra.mxu0 %v2566
      %2614 = vmatpush.msra.mxu0 %v2564
      %2615 = vmatmul.f32.gmra.mxu0 %v2571
      %v2616 = vpop.f32.mrf.mxu0
      %v2617 = vadd.f32 0.0, %v2616
      %2618 = vmatmul.f32.gmra.mxu0 %v2574
      %v2619 = vpop.f32.mrf.mxu0
      %v2620 = vadd.f32 0.0, %v2619
      %2621 = vdwg.mxu0
      %v2622 = vadd.f32 %v2515, %v2594
      %v2623 = vadd.f32 %v2538, %v2617
      %v2624 = vadd.f32 %v2518, %v2597
      %v2625 = vadd.f32 %v2541, %v2620
      %2626 = vrot.lane.b32.xlu0 %v2374, 1
      %v2627 = vpop.permute.xlu0 %2626
      %2628 = vrot.lane.b32.xlu0 %v2375, 1
      %v2629 = vpop.permute.xlu0 %2628
      %2630 = vrot.lane.b32.xlu0 %v2376, 1
      %v2631 = vpop.permute.xlu0 %2630
      %2632 = vrot.lane.b32.xlu0 %v2377, 1
      %v2633 = vpop.permute.xlu0 %2632
      %2634 = vrot.lane.b32.xlu0 %v2378, 1
      %v2635 = vpop.permute.xlu0 %2634
      %2636 = vrot.lane.b32.xlu0 %v2379, 1
      %v2637 = vpop.permute.xlu0 %2636
      %v2638 = vsel %vm1835, %v2627, %v2629
      %v2639 = vsel %vm1835, %v2629, %v2631
      %v2640 = vsel %vm1835, %v2633, %v2635
      %v2641 = vsel %vm1835, %v2635, %v2637
      %v2646 = vsel %vm1821, %v2638, 0.0
      %v2647 = vsel %vm1822, %v2639, 0.0
      %v2648 = vsel %vm1821, %v2640, 0.0
      %v2649 = vsel %vm1822, %v2641, 0.0
      %s2650 = scalar_lea.vmem %s7, 48
      %v2651 = vld [vmem:[%s2650] sm:$0xff]
      %v2652 = vld [vmem:[%s2650 + $0x8] sm:$0xff]
      %v2654 = vsel %vm489, %v2651, 0
      %v2657 = vsel %vm489, %v2652, 0
      %2659 = vmatpush.msra.mxu0 0.0
      %2660 = vmatpush.msra.mxu0 0.0
      %2661 = vmatpush.msra.mxu0 0.0
      %2662 = vmatpush.msra.mxu0 0.0
      %2663 = vmatpush.msra.mxu0 0.0
      %2664 = vmatpush.msra.mxu0 0.0
      %2665 = vmatpush.msra.mxu0 0.0
      %2666 = vmatpush.msra.mxu0 0.0
      %2667 = vmatpush.msra.mxu0 0.0
      %2668 = vmatpush.msra.mxu0 0.0
      %2669 = vmatpush.msra.mxu0 0.0
      %2670 = vmatpush.msra.mxu0 0.0
      %2671 = vmatpush.msra.mxu0 0.0
      %2672 = vmatpush.msra.mxu0 0.0
      %2673 = vmatpush.msra.mxu0 %v2648
      %2674 = vmatpush.msra.mxu0 %v2646
      %2675 = vmatmul.f32.gmra.mxu0 %v2654
      %v2676 = vpop.f32.mrf.mxu0
      %v2677 = vadd.f32 0.0, %v2676
      %2678 = vmatmul.f32.gmra.mxu0 %v2657
      %v2679 = vpop.f32.mrf.mxu0
      %v2680 = vadd.f32 0.0, %v2679
      %2681 = vdwg.mxu0
      %2682 = vmatpush.msra.mxu0 0.0
      %2683 = vmatpush.msra.mxu0 0.0
      %2684 = vmatpush.msra.mxu0 0.0
      %2685 = vmatpush.msra.mxu0 0.0
      %2686 = vmatpush.msra.mxu0 0.0
      %2687 = vmatpush.msra.mxu0 0.0
      %2688 = vmatpush.msra.mxu0 0.0
      %2689 = vmatpush.msra.mxu0 0.0
      %2690 = vmatpush.msra.mxu0 0.0
      %2691 = vmatpush.msra.mxu0 0.0
      %2692 = vmatpush.msra.mxu0 0.0
      %2693 = vmatpush.msra.mxu0 0.0
      %2694 = vmatpush.msra.mxu0 0.0
      %2695 = vmatpush.msra.mxu0 0.0
      %2696 = vmatpush.msra.mxu0 %v2649
      %2697 = vmatpush.msra.mxu0 %v2647
      %2698 = vmatmul.f32.gmra.mxu0 %v2654
      %v2699 = vpop.f32.mrf.mxu0
      %v2700 = vadd.f32 0.0, %v2699
      %2701 = vmatmul.f32.gmra.mxu0 %v2657
      %v2702 = vpop.f32.mrf.mxu0
      %v2703 = vadd.f32 0.0, %v2702
      %2704 = vdwg.mxu0
      %v2705 = vadd.f32 %v2622, %v2677
      %v2706 = vadd.f32 %v2623, %v2700
      %v2707 = vadd.f32 %v2624, %v2680
      %v2708 = vadd.f32 %v2625, %v2703
      %s2709 = scalar_lea.vmem %s7, 64
      %v2710 = vld [vmem:[%s2709] sm:$0xff]
      %v2711 = vld [vmem:[%s2709 + $0x8] sm:$0xff]
      %v2713 = vsel %vm489, %v2710, 0
      %v2716 = vsel %vm489, %v2711, 0
      %2718 = vmatpush.msra.mxu0 0.0
      %2719 = vmatpush.msra.mxu0 0.0
      %2720 = vmatpush.msra.mxu0 0.0
      %2721 = vmatpush.msra.mxu0 0.0
      %2722 = vmatpush.msra.mxu0 0.0
      %2723 = vmatpush.msra.mxu0 0.0
      %2724 = vmatpush.msra.mxu0 0.0
      %2725 = vmatpush.msra.mxu0 0.0
      %2726 = vmatpush.msra.mxu0 0.0
      %2727 = vmatpush.msra.mxu0 0.0
      %2728 = vmatpush.msra.mxu0 0.0
      %2729 = vmatpush.msra.mxu0 0.0
      %2730 = vmatpush.msra.mxu0 0.0
      %2731 = vmatpush.msra.mxu0 0.0
      %2732 = vmatpush.msra.mxu0 %v2378
      %2733 = vmatpush.msra.mxu0 %v2375
      %2734 = vmatmul.f32.gmra.mxu0 %v2713
      %v2735 = vpop.f32.mrf.mxu0
      %v2736 = vadd.f32 0.0, %v2735
      %2737 = vmatmul.f32.gmra.mxu0 %v2716
      %v2738 = vpop.f32.mrf.mxu0
      %v2739 = vadd.f32 0.0, %v2738
      %2740 = vdwg.mxu0
      %2741 = vmatpush.msra.mxu0 0.0
      %2742 = vmatpush.msra.mxu0 0.0
      %2743 = vmatpush.msra.mxu0 0.0
      %2744 = vmatpush.msra.mxu0 0.0
      %2745 = vmatpush.msra.mxu0 0.0
      %2746 = vmatpush.msra.mxu0 0.0
      %2747 = vmatpush.msra.mxu0 0.0
      %2748 = vmatpush.msra.mxu0 0.0
      %2749 = vmatpush.msra.mxu0 0.0
      %2750 = vmatpush.msra.mxu0 0.0
      %2751 = vmatpush.msra.mxu0 0.0
      %2752 = vmatpush.msra.mxu0 0.0
      %2753 = vmatpush.msra.mxu0 0.0
      %2754 = vmatpush.msra.mxu0 0.0
      %2755 = vmatpush.msra.mxu0 %v2379
      %2756 = vmatpush.msra.mxu0 %v2376
      %2757 = vmatmul.f32.gmra.mxu0 %v2713
      %v2758 = vpop.f32.mrf.mxu0
      %v2759 = vadd.f32 0.0, %v2758
      %2760 = vmatmul.f32.gmra.mxu0 %v2716
      %v2761 = vpop.f32.mrf.mxu0
      %v2762 = vadd.f32 0.0, %v2761
      %2763 = vdwg.mxu0
      %v2764 = vadd.f32 %v2705, %v2736
      %v2765 = vadd.f32 %v2706, %v2759
      %v2766 = vadd.f32 %v2707, %v2739
      %v2767 = vadd.f32 %v2708, %v2762
      %v2768 = vld [vmem:[#allocation3 + $0x8] sm:$0xff]
      %v2769 = vld [vmem:[#allocation3 + $0x10] sm:$0xff]
      %v2770 = vld [vmem:[#allocation3 + $0x18] sm:$0xff]
      %v2771 = vld [vmem:[#allocation3 + $0x28] sm:$0xff]
      %v2772 = vld [vmem:[#allocation3 + $0x30] sm:$0xff]
      %v2773 = vld [vmem:[#allocation3 + $0x38] sm:$0xff]
      %2780 = vrot.lane.b32.xlu0 %v2768, 127
      %v2781 = vpop.permute.xlu0 %2780
      %2782 = vrot.lane.b32.xlu0 %v2769, 127
      %v2783 = vpop.permute.xlu0 %2782
      %2784 = vrot.lane.b32.xlu0 %v2770, 127
      %v2785 = vpop.permute.xlu0 %2784
      %2786 = vrot.lane.b32.xlu0 %v2771, 127
      %v2787 = vpop.permute.xlu0 %2786
      %2788 = vrot.lane.b32.xlu0 %v2772, 127
      %v2789 = vpop.permute.xlu0 %2788
      %2790 = vrot.lane.b32.xlu0 %v2773, 127
      %v2791 = vpop.permute.xlu0 %2790
      %v2792 = vsel %vm1995, %v2781, %v2783
      %v2793 = vsel %vm1995, %v2783, %v2785
      %v2794 = vsel %vm1995, %v2787, %v2789
      %v2795 = vsel %vm1995, %v2789, %v2791
      %v2800 = vsel %vm1975, %v2792, 0.0
      %v2801 = vsel %vm1976, %v2793, 0.0
      %v2802 = vsel %vm1975, %v2794, 0.0
      %v2803 = vsel %vm1976, %v2795, 0.0
      %s2804 = scalar_lea.vmem %s7, 80
      %v2805 = vld [vmem:[%s2804] sm:$0xff]
      %v2806 = vld [vmem:[%s2804 + $0x8] sm:$0xff]
      %v2808 = vsel %vm489, %v2805, 0
      %v2811 = vsel %vm489, %v2806, 0
      %2813 = vmatpush.msra.mxu0 0.0
      %2814 = vmatpush.msra.mxu0 0.0
      %2815 = vmatpush.msra.mxu0 0.0
      %2816 = vmatpush.msra.mxu0 0.0
      %2817 = vmatpush.msra.mxu0 0.0
      %2818 = vmatpush.msra.mxu0 0.0
      %2819 = vmatpush.msra.mxu0 0.0
      %2820 = vmatpush.msra.mxu0 0.0
      %2821 = vmatpush.msra.mxu0 0.0
      %2822 = vmatpush.msra.mxu0 0.0
      %2823 = vmatpush.msra.mxu0 0.0
      %2824 = vmatpush.msra.mxu0 0.0
      %2825 = vmatpush.msra.mxu0 0.0
      %2826 = vmatpush.msra.mxu0 0.0
      %2827 = vmatpush.msra.mxu0 %v2802
      %2828 = vmatpush.msra.mxu0 %v2800
      %2829 = vmatmul.f32.gmra.mxu0 %v2808
      %v2830 = vpop.f32.mrf.mxu0
      %v2831 = vadd.f32 0.0, %v2830
      %2832 = vmatmul.f32.gmra.mxu0 %v2811
      %v2833 = vpop.f32.mrf.mxu0
      %v2834 = vadd.f32 0.0, %v2833
      %2835 = vdwg.mxu0
      %2836 = vmatpush.msra.mxu0 0.0
      %2837 = vmatpush.msra.mxu0 0.0
      %2838 = vmatpush.msra.mxu0 0.0
      %2839 = vmatpush.msra.mxu0 0.0
      %2840 = vmatpush.msra.mxu0 0.0
      %2841 = vmatpush.msra.mxu0 0.0
      %2842 = vmatpush.msra.mxu0 0.0
      %2843 = vmatpush.msra.mxu0 0.0
      %2844 = vmatpush.msra.mxu0 0.0
      %2845 = vmatpush.msra.mxu0 0.0
      %2846 = vmatpush.msra.mxu0 0.0
      %2847 = vmatpush.msra.mxu0 0.0
      %2848 = vmatpush.msra.mxu0 0.0
      %2849 = vmatpush.msra.mxu0 0.0
      %2850 = vmatpush.msra.mxu0 %v2803
      %2851 = vmatpush.msra.mxu0 %v2801
      %2852 = vmatmul.f32.gmra.mxu0 %v2808
      %v2853 = vpop.f32.mrf.mxu0
      %v2854 = vadd.f32 0.0, %v2853
      %2855 = vmatmul.f32.gmra.mxu0 %v2811
      %v2856 = vpop.f32.mrf.mxu0
      %v2857 = vadd.f32 0.0, %v2856
      %2858 = vdwg.mxu0
      %v2859 = vadd.f32 %v2764, %v2831
      %v2860 = vadd.f32 %v2765, %v2854
      %v2861 = vadd.f32 %v2766, %v2834
      %v2862 = vadd.f32 %v2767, %v2857
      %2863 = vrot.lane.b32.xlu0 %v2768, 113
      %v2864 = vpop.permute.xlu0 %2863
      %2865 = vrot.lane.b32.xlu0 %v2769, 113
      %v2866 = vpop.permute.xlu0 %2865
      %2867 = vrot.lane.b32.xlu0 %v2770, 113
      %v2868 = vpop.permute.xlu0 %2867
      %2869 = vrot.lane.b32.xlu0 %v2771, 113
      %v2870 = vpop.permute.xlu0 %2869
      %2871 = vrot.lane.b32.xlu0 %v2772, 113
      %v2872 = vpop.permute.xlu0 %2871
      %2873 = vrot.lane.b32.xlu0 %v2773, 113
      %v2874 = vpop.permute.xlu0 %2873
      %v2875 = vsel %vm2084, %v2864, %v2866
      %v2876 = vsel %vm2084, %v2866, %v2868
      %v2877 = vsel %vm2084, %v2870, %v2872
      %v2878 = vsel %vm2084, %v2872, %v2874
      %v2883 = vsel %vm2070, %v2875, 0.0
      %v2884 = vsel %vm2071, %v2876, 0.0
      %v2885 = vsel %vm2070, %v2877, 0.0
      %v2886 = vsel %vm2071, %v2878, 0.0
      %s2887 = scalar_lea.vmem %s7, 96
      %v2888 = vld [vmem:[%s2887] sm:$0xff]
      %v2889 = vld [vmem:[%s2887 + $0x8] sm:$0xff]
      %v2891 = vsel %vm489, %v2888, 0
      %v2894 = vsel %vm489, %v2889, 0
      %2896 = vmatpush.msra.mxu0 0.0
      %2897 = vmatpush.msra.mxu0 0.0
      %2898 = vmatpush.msra.mxu0 0.0
      %2899 = vmatpush.msra.mxu0 0.0
      %2900 = vmatpush.msra.mxu0 0.0
      %2901 = vmatpush.msra.mxu0 0.0
      %2902 = vmatpush.msra.mxu0 0.0
      %2903 = vmatpush.msra.mxu0 0.0
      %2904 = vmatpush.msra.mxu0 0.0
      %2905 = vmatpush.msra.mxu0 0.0
      %2906 = vmatpush.msra.mxu0 0.0
      %2907 = vmatpush.msra.mxu0 0.0
      %2908 = vmatpush.msra.mxu0 0.0
      %2909 = vmatpush.msra.mxu0 0.0
      %2910 = vmatpush.msra.mxu0 %v2885
      %2911 = vmatpush.msra.mxu0 %v2883
      %2912 = vmatmul.f32.gmra.mxu0 %v2891
      %v2913 = vpop.f32.mrf.mxu0
      %v2914 = vadd.f32 0.0, %v2913
      %2915 = vmatmul.f32.gmra.mxu0 %v2894
      %v2916 = vpop.f32.mrf.mxu0
      %v2917 = vadd.f32 0.0, %v2916
      %2918 = vdwg.mxu0
      %2919 = vmatpush.msra.mxu0 0.0
      %2920 = vmatpush.msra.mxu0 0.0
      %2921 = vmatpush.msra.mxu0 0.0
      %2922 = vmatpush.msra.mxu0 0.0
      %2923 = vmatpush.msra.mxu0 0.0
      %2924 = vmatpush.msra.mxu0 0.0
      %2925 = vmatpush.msra.mxu0 0.0
      %2926 = vmatpush.msra.mxu0 0.0
      %2927 = vmatpush.msra.mxu0 0.0
      %2928 = vmatpush.msra.mxu0 0.0
      %2929 = vmatpush.msra.mxu0 0.0
      %2930 = vmatpush.msra.mxu0 0.0
      %2931 = vmatpush.msra.mxu0 0.0
      %2932 = vmatpush.msra.mxu0 0.0
      %2933 = vmatpush.msra.mxu0 %v2886
      %2934 = vmatpush.msra.mxu0 %v2884
      %2935 = vmatmul.f32.gmra.mxu0 %v2891
      %v2936 = vpop.f32.mrf.mxu0
      %v2937 = vadd.f32 0.0, %v2936
      %2938 = vmatmul.f32.gmra.mxu0 %v2894
      %v2939 = vpop.f32.mrf.mxu0
      %v2940 = vadd.f32 0.0, %v2939
      %2941 = vdwg.mxu0
      %v2942 = vadd.f32 %v2859, %v2914
      %v2943 = vadd.f32 %v2860, %v2937
      %v2944 = vadd.f32 %v2861, %v2917
      %v2945 = vadd.f32 %v2862, %v2940
      %2946 = vrot.lane.b32.xlu0 %v2768, 112
      %v2947 = vpop.permute.xlu0 %2946
      %2948 = vrot.lane.b32.xlu0 %v2769, 112
      %v2949 = vpop.permute.xlu0 %2948
      %2950 = vrot.lane.b32.xlu0 %v2770, 112
      %v2951 = vpop.permute.xlu0 %2950
      %2952 = vrot.lane.b32.xlu0 %v2771, 112
      %v2953 = vpop.permute.xlu0 %2952
      %2954 = vrot.lane.b32.xlu0 %v2772, 112
      %v2955 = vpop.permute.xlu0 %2954
      %2956 = vrot.lane.b32.xlu0 %v2773, 112
      %v2957 = vpop.permute.xlu0 %2956
      %v2958 = vsel %vm2173, %v2947, %v2949
      %v2959 = vsel %vm2173, %v2949, %v2951
      %v2960 = vsel %vm2173, %v2953, %v2955
      %v2961 = vsel %vm2173, %v2955, %v2957
      %v2966 = vsel %vm2159, %v2958, 0.0
      %v2967 = vsel %vm2160, %v2959, 0.0
      %v2968 = vsel %vm2159, %v2960, 0.0
      %v2969 = vsel %vm2160, %v2961, 0.0
      %s2970 = scalar_lea.vmem %s7, 112
      %v2971 = vld [vmem:[%s2970] sm:$0xff]
      %v2972 = vld [vmem:[%s2970 + $0x8] sm:$0xff]
      %v2974 = vsel %vm489, %v2971, 0
      %v2977 = vsel %vm489, %v2972, 0
      %2979 = vmatpush.msra.mxu0 0.0
      %2980 = vmatpush.msra.mxu0 0.0
      %2981 = vmatpush.msra.mxu0 0.0
      %2982 = vmatpush.msra.mxu0 0.0
      %2983 = vmatpush.msra.mxu0 0.0
      %2984 = vmatpush.msra.mxu0 0.0
      %2985 = vmatpush.msra.mxu0 0.0
      %2986 = vmatpush.msra.mxu0 0.0
      %2987 = vmatpush.msra.mxu0 0.0
      %2988 = vmatpush.msra.mxu0 0.0
      %2989 = vmatpush.msra.mxu0 0.0
      %2990 = vmatpush.msra.mxu0 0.0
      %2991 = vmatpush.msra.mxu0 0.0
      %2992 = vmatpush.msra.mxu0 0.0
      %2993 = vmatpush.msra.mxu0 %v2968
      %2994 = vmatpush.msra.mxu0 %v2966
      %2995 = vmatmul.f32.gmra.mxu0 %v2974
      %v2996 = vpop.f32.mrf.mxu0
      %v2997 = vadd.f32 0.0, %v2996
      %2998 = vmatmul.f32.gmra.mxu0 %v2977
      %v2999 = vpop.f32.mrf.mxu0
      %v3000 = vadd.f32 0.0, %v2999
      %3001 = vdwg.mxu0
      %3002 = vmatpush.msra.mxu0 0.0
      %3003 = vmatpush.msra.mxu0 0.0
      %3004 = vmatpush.msra.mxu0 0.0
      %3005 = vmatpush.msra.mxu0 0.0
      %3006 = vmatpush.msra.mxu0 0.0
      %3007 = vmatpush.msra.mxu0 0.0
      %3008 = vmatpush.msra.mxu0 0.0
      %3009 = vmatpush.msra.mxu0 0.0
      %3010 = vmatpush.msra.mxu0 0.0
      %3011 = vmatpush.msra.mxu0 0.0
      %3012 = vmatpush.msra.mxu0 0.0
      %3013 = vmatpush.msra.mxu0 0.0
      %3014 = vmatpush.msra.mxu0 0.0
      %3015 = vmatpush.msra.mxu0 0.0
      %3016 = vmatpush.msra.mxu0 %v2969
      %3017 = vmatpush.msra.mxu0 %v2967
      %3018 = vmatmul.f32.gmra.mxu0 %v2974
      %v3019 = vpop.f32.mrf.mxu0
      %v3020 = vadd.f32 0.0, %v3019
      %3021 = vmatmul.f32.gmra.mxu0 %v2977
      %v3022 = vpop.f32.mrf.mxu0
      %v3023 = vadd.f32 0.0, %v3022
      %3024 = vdwg.mxu0
      %v3025 = vadd.f32 %v2942, %v2997
      %v3026 = vadd.f32 %v2943, %v3020
      %v3027 = vadd.f32 %v2944, %v3000
      %v3028 = vadd.f32 %v2945, %v3023
      %3029 = vrot.lane.b32.xlu0 %v2768, 111
      %v3030 = vpop.permute.xlu0 %3029
      %3031 = vrot.lane.b32.xlu0 %v2769, 111
      %v3032 = vpop.permute.xlu0 %3031
      %3033 = vrot.lane.b32.xlu0 %v2770, 111
      %v3034 = vpop.permute.xlu0 %3033
      %3035 = vrot.lane.b32.xlu0 %v2771, 111
      %v3036 = vpop.permute.xlu0 %3035
      %3037 = vrot.lane.b32.xlu0 %v2772, 111
      %v3038 = vpop.permute.xlu0 %3037
      %3039 = vrot.lane.b32.xlu0 %v2773, 111
      %v3040 = vpop.permute.xlu0 %3039
      %v3041 = vsel %vm2262, %v3030, %v3032
      %v3042 = vsel %vm2262, %v3032, %v3034
      %v3043 = vsel %vm2262, %v3036, %v3038
      %v3044 = vsel %vm2262, %v3038, %v3040
      %v3049 = vsel %vm2248, %v3041, 0.0
      %v3050 = vsel %vm2249, %v3042, 0.0
      %v3051 = vsel %vm2248, %v3043, 0.0
      %v3052 = vsel %vm2249, %v3044, 0.0
      %s3053 = scalar_lea.vmem %s7, 128
      %v3054 = vld [vmem:[%s3053] sm:$0xff]
      %v3055 = vld [vmem:[%s3053 + $0x8] sm:$0xff]
      %v3057 = vsel %vm489, %v3054, 0
      %v3060 = vsel %vm489, %v3055, 0
      %3062 = vmatpush.msra.mxu0 0.0
      %3063 = vmatpush.msra.mxu0 0.0
      %3064 = vmatpush.msra.mxu0 0.0
      %3065 = vmatpush.msra.mxu0 0.0
      %3066 = vmatpush.msra.mxu0 0.0
      %3067 = vmatpush.msra.mxu0 0.0
      %3068 = vmatpush.msra.mxu0 0.0
      %3069 = vmatpush.msra.mxu0 0.0
      %3070 = vmatpush.msra.mxu0 0.0
      %3071 = vmatpush.msra.mxu0 0.0
      %3072 = vmatpush.msra.mxu0 0.0
      %3073 = vmatpush.msra.mxu0 0.0
      %3074 = vmatpush.msra.mxu0 0.0
      %3075 = vmatpush.msra.mxu0 0.0
      %3076 = vmatpush.msra.mxu0 %v3051
      %3077 = vmatpush.msra.mxu0 %v3049
      %3078 = vmatmul.f32.gmra.mxu0 %v3057
      %v3079 = vpop.f32.mrf.mxu0
      %v3080 = vadd.f32 0.0, %v3079
      %3081 = vmatmul.f32.gmra.mxu0 %v3060
      %v3082 = vpop.f32.mrf.mxu0
      %v3083 = vadd.f32 0.0, %v3082
      %3084 = vdwg.mxu0
      %3085 = vmatpush.msra.mxu0 0.0
      %3086 = vmatpush.msra.mxu0 0.0
      %3087 = vmatpush.msra.mxu0 0.0
      %3088 = vmatpush.msra.mxu0 0.0
      %3089 = vmatpush.msra.mxu0 0.0
      %3090 = vmatpush.msra.mxu0 0.0
      %3091 = vmatpush.msra.mxu0 0.0
      %3092 = vmatpush.msra.mxu0 0.0
      %3093 = vmatpush.msra.mxu0 0.0
      %3094 = vmatpush.msra.mxu0 0.0
      %3095 = vmatpush.msra.mxu0 0.0
      %3096 = vmatpush.msra.mxu0 0.0
      %3097 = vmatpush.msra.mxu0 0.0
      %3098 = vmatpush.msra.mxu0 0.0
      %3099 = vmatpush.msra.mxu0 %v3052
      %3100 = vmatpush.msra.mxu0 %v3050
      %3101 = vmatmul.f32.gmra.mxu0 %v3057
      %v3102 = vpop.f32.mrf.mxu0
      %v3103 = vadd.f32 0.0, %v3102
      %3104 = vmatmul.f32.gmra.mxu0 %v3060
      %v3105 = vpop.f32.mrf.mxu0
      %v3106 = vadd.f32 0.0, %v3105
      %3107 = vdwg.mxu0
      %v3108 = vadd.f32 %v3025, %v3080
      %v3109 = vadd.f32 %v3026, %v3103
      %v3110 = vadd.f32 %v3027, %v3083
      %v3111 = vadd.f32 %v3028, %v3106
      %v3112 = vld [vmem:[%s8] sm:$0xff]
      %v3113 = vld [vmem:[%s8 + $0x8] sm:$0xff]
      %3115 = vset.pattern.permute.xlu0 0
      %3116 = vperm.xlu0 %3115, %v3112
      %v3117 = vpop.permute.xlu0 %3116
      %3120 = vset.pattern.permute.xlu0 0
      %3121 = vperm.xlu0 %3120, %v3113
      %v3122 = vpop.permute.xlu0 %3121
      %v3124 = vmul.f32 %v3108, %v3117
      %v3125 = vmul.f32 %v3109, %v3117
      %v3126 = vmul.f32 %v3110, %v3122
      %v3127 = vmul.f32 %v3111, %v3122
      %v3128 = vld [vmem:[%s9] sm:$0xff]
      %v3129 = vld [vmem:[%s9 + $0x8] sm:$0xff]
      %3131 = vset.pattern.permute.xlu0 0
      %3132 = vperm.xlu0 %3131, %v3128
      %v3133 = vpop.permute.xlu0 %3132
      %3136 = vset.pattern.permute.xlu0 0
      %3137 = vperm.xlu0 %3136, %v3129
      %v3138 = vpop.permute.xlu0 %3137
      %v3140 = vadd.f32 %v3124, %v3133
      %v3141 = vadd.f32 %v3125, %v3133
      %v3142 = vadd.f32 %v3126, %v3138
      %v3143 = vadd.f32 %v3127, %v3138
      %v3144 = vmax.f32 %v3140, 0.0
      %v3145 = vmax.f32 %v3141, 0.0
      %v3146 = vmax.f32 %v3142, 0.0
      %v3147 = vmax.f32 %v3143, 0.0
      %3148 = vst [vmem:[%s379] sm:$0xff] %v3144
      %3149 = vst [vmem:[%s379 + $0x8] sm:$0xff] %v3145
      %3150 = vst [vmem:[%s379 + $0x10] sm:$0xff] %v3146
      %3151 = vst [vmem:[%s379 + $0x18] sm:$0xff] %v3147
      %p3152 = scmp.lt.s32.totalorder %s21, 1
      %s3153 = scalar_select %p3152, %s21, 1
      %s3154 = smul.addr %s3153, 4
      %s3155 = smul.addr %s3154, 8
      %s3156 = scalar_lea.vmem %s10, %s3155
      // Predicated region
      $region61: #{up_forward.1} parent=59 // pred_check
        %p3157 = pneg %p259
      $region62: #{up_forward.1} parent=59 // pred_check_branch
        %3159 = sbr.rel (%p3157) target = $region64
      $region63: #{up_forward.1} parent=59 // pred_region
        _
      $region64: #{up_forward.1} parent=59 // pred_fallthru
        _
    $region60: #{up_forward.1} parent=5 // pred_fallthru
      _
    %p3160 = scmp.le.s32.totalorder 2, %s16
    // Predicated region
    $region65: #{up_forward.1} parent=5 // pred_check
      %p3161 = pneg %p3160
    $region66: #{up_forward.1} parent=5 // pred_check_branch
      %3163 = sbr.rel (%p3161) target = $region68
    $region67: #{up_forward.1} parent=5 // pred_region
      %s3164 = ssub.s32 %s16, 2
      // Predicated region
      $region69: #{up_forward.1} parent=67 // pred_check
        %p3165 = pneg %p265
      $region70: #{up_forward.1} parent=67 // pred_check_branch
        %3167 = sbr.rel (%p3165) target = $region72
      $region71: #{up_forward.1} parent=67 // pred_region
        %p3168 = scmp.lt.s32.totalorder %s22, 1
        %s3169 = scalar_select %p3168, %s22, 1
        %s3170 = smul.addr %s3169, 4
        %s3171 = smul.addr %s3170, 8
        %s3172 = scalar_lea.vmem %s10, %s3171
      $region72: #{up_forward.1} parent=67 // pred_fallthru
        _
    $region68: #{up_forward.1} parent=5 // pred_fallthru
      _
  $region6: #{up_forward.1} parent=0 // loop_footer
    %s20 = sadd.s32 1, %s16
  $region7: #{up_forward.1} parent=0 // loop_footer_branch
    %15 = sbr.rel target = $region3
  $region8: #{up_forward.1} parent=0 // loop_exit
    _

</llo_original>
